<compile_context>
chip_gen: v6e
topology: v6e:2x2x1
jax: 0.10.0
libtpu: 0.0.40
codegen_flags: <defaults>
</compile_context>

<pallas_src>
import jax
import jax.numpy as jnp
from jax.experimental import pallas as pl
from jax.experimental.pallas import tpu as pltpu

BN_EPS = 1e-5


def double_conv_kernel(patches_ref, w1_ref, w2_ref, gamma_ref, beta_ref,
                       out_ref, y1pad_ref):
    N, Hp, Wp, Cout = y1pad_ref.shape
    H, W = Hp - 2, Wp - 2
    R = N * H * W

    # ---- conv1: single im2col matmul (K = 9*Cin) on the MXU, then ReLU ----
    y1 = jnp.dot(patches_ref[...], w1_ref[...],
                 preferred_element_type=jnp.float32)
    y1 = jnp.maximum(y1, 0.0)

    # ---- stash conv1 output in a zero-padded VMEM scratch (conv2 halo) ----
    # Interior written once; only the 1-pixel border is zero-filled.
    y1pad_ref[:, 1:H + 1, 1:W + 1, :] = y1.reshape(N, H, W, Cout)
    zrow = jnp.zeros((N, 1, Wp, Cout), jnp.float32)
    y1pad_ref[:, 0:1, :, :] = zrow
    y1pad_ref[:, H + 1:H + 2, :, :] = zrow
    zcol = jnp.zeros((N, Hp, 1, Cout), jnp.float32)
    y1pad_ref[:, :, 0:1, :] = zcol
    y1pad_ref[:, :, W + 1:W + 2, :] = zcol

    # ---- conv2: 9 shifted matmuls accumulated in a local value ----
    # (no VMEM read-modify-write of an accumulator ref)
    acc = jnp.zeros((R, Cout), jnp.float32)
    for dy in range(3):
        for dx in range(3):
            patch = (y1pad_ref[:, dy:dy + H, dx:dx + W, :]
                     .reshape(R, Cout).astype(jnp.bfloat16))
            acc = acc + jnp.dot(patch, w2_ref[dy, dx],
                                preferred_element_type=jnp.float32)
    y2 = jnp.maximum(acc, 0.0)

    # ---- BatchNorm2d: training-mode batch stats (biased var), f32 math ----
    mean = jnp.mean(y2, axis=0, keepdims=True)                  # (1, Cout)
    var = jnp.mean(jnp.square(y2 - mean), axis=0, keepdims=True)
    scale = jax.lax.rsqrt(var + BN_EPS) * gamma_ref[...]
    y = (y2 - mean) * scale + beta_ref[...]

    out_ref[...] = y.astype(out_ref.dtype)


def double_conv(x_nchw, w1_oihw, w2_oihw, gamma, beta):
    """x_nchw: (N, Cin, H, W); w*: (Cout, Cin, 3, 3) PyTorch convention."""
    N, Cin, H, W = x_nchw.shape
    Cout = w1_oihw.shape[0]
    R = N * H * W

    # ---- layout plumbing in plain JAX: NCHW -> NHWC, pad, im2col, bf16 ----
    x_nhwc = jnp.transpose(x_nchw, (0, 2, 3, 1)).astype(jnp.bfloat16)
    x_pad = jnp.pad(x_nhwc, ((0, 0), (1, 1), (1, 1), (0, 0)))
    # Patch feature order is (dy, dx, cin) -- must match w1_mat below.
    cols = [x_pad[:, dy:dy + H, dx:dx + W, :]
            for dy in range(3) for dx in range(3)]
    patches = jnp.concatenate(cols, axis=-1).reshape(R, 9 * Cin)

    w1_mat = (jnp.transpose(w1_oihw, (2, 3, 1, 0))       # (3, 3, Cin, Cout)
              .reshape(9 * Cin, Cout).astype(jnp.bfloat16))
    w2_k = jnp.transpose(w2_oihw, (2, 3, 1, 0)).astype(jnp.bfloat16)
    # Per-channel affine params: kept as tiny VMEM (1, Cout) f32 vectors.
    gamma2 = gamma.reshape(1, Cout).astype(jnp.float32)
    beta2 = beta.reshape(1, Cout).astype(jnp.float32)

    flops = 2 * R * (9 * Cin * Cout) + 2 * R * (9 * Cout * Cout)
    bytes_accessed = (patches.size * 2 + w1_mat.size * 2 + w2_k.size * 2
                      + gamma2.size * 4 + beta2.size * 4 + R * Cout * 4)

    out2d = pl.pallas_call(
        double_conv_kernel,
        out_shape=jax.ShapeDtypeStruct((R, Cout), jnp.float32),
        grid=(1,),
        in_specs=[
            pl.BlockSpec((R, 9 * Cin), lambda i: (0, 0)),
            pl.BlockSpec((9 * Cin, Cout), lambda i: (0, 0)),
            pl.BlockSpec((3, 3, Cout, Cout), lambda i: (0, 0, 0, 0)),
            pl.BlockSpec((1, Cout), lambda i: (0, 0)),
            pl.BlockSpec((1, Cout), lambda i: (0, 0)),
        ],
        out_specs=pl.BlockSpec((R, Cout), lambda i: (0, 0)),
        scratch_shapes=[
            pltpu.VMEM((N, H + 2, W + 2, Cout), jnp.float32),  # padded conv1 out
        ],
        compiler_params=pltpu.CompilerParams(
            dimension_semantics=("arbitrary",),
            vmem_limit_bytes=64 * 1024 * 1024),
        cost_estimate=pl.CostEstimate(
            flops=flops, transcendentals=Cout, bytes_accessed=bytes_accessed),
    )(patches, w1_mat, w2_k, gamma2, beta2)

    out_nhwc = out2d.reshape(N, H, W, Cout)
    return jnp.transpose(out_nhwc, (0, 3, 1, 2))  # back to NCHW


def reference(x, w1, w2, gamma, beta):
    """Pure-JAX f32 reference matching the PyTorch module forward."""
    dn = ('NCHW', 'OIHW', 'NCHW')
    y = jax.lax.conv_general_dilated(x, w1, (1, 1), 'SAME', dimension_numbers=dn)
    y = jnp.maximum(y, 0.0)
    y = jax.lax.conv_general_dilated(y, w2, (1, 1), 'SAME', dimension_numbers=dn)
    y = jnp.maximum(y, 0.0)
    mean = jnp.mean(y, axis=(0, 2, 3), keepdims=True)
    var = jnp.mean((y - mean) ** 2, axis=(0, 2, 3), keepdims=True)
    return ((y - mean) * jax.lax.rsqrt(var + BN_EPS)
            * gamma.reshape(1, -1, 1, 1) + beta.reshape(1, -1, 1, 1))


if __name__ == "__main__":
    N, Cin, Cout, H, W = 2, 4, 8, 16, 16

    key = jax.random.PRNGKey(0)
    kx, kw1, kw2 = jax.random.split(key, 3)
    x = jax.random.normal(kx, (N, Cin, H, W), dtype=jnp.float32)
    # Deterministic synthetic parameters (module shapes; no checkpoint load).
    w1 = 0.1 * jax.random.normal(kw1, (Cout, Cin, 3, 3), dtype=jnp.float32)
    w2 = 0.1 * jax.random.normal(kw2, (Cout, Cout, 3, 3), dtype=jnp.float32)
    gamma = jnp.ones((Cout,), dtype=jnp.float32)   # BatchNorm2d default init
    beta = jnp.zeros((Cout,), dtype=jnp.float32)

    out = jax.block_until_ready(double_conv(x, w1, w2, gamma, beta))
    ref = jax.block_until_ready(reference(x, w1, w2, gamma, beta))

    assert out.shape == (N, Cout, H, W), out.shape
    # Tolerance sized for bf16 matmul operands (accumulation + BN stats in f32
    # vs. the pure-f32 reference).
    max_err = float(jnp.max(jnp.abs(out - ref)))
    assert jnp.allclose(out, ref, atol=5e-2, rtol=5e-2), max_err
    print("KERNEL_OK")
</pallas_src>

<mosaic_0001>
module attributes {stable_mosaic.version = 11 : i64} {
  func.func @double_conv_kernel(%arg0: i32, %arg1: memref<512x36xbf16, #tpu.memory_space<vmem>>, %arg2: memref<36x8xbf16, #tpu.memory_space<vmem>>, %arg3: memref<3x3x8x8xbf16, #tpu.memory_space<vmem>>, %arg4: memref<1x8xf32, #tpu.memory_space<vmem>>, %arg5: memref<1x8xf32, #tpu.memory_space<vmem>>, %arg6: memref<512x8xf32, #tpu.memory_space<vmem>>, %arg7: memref<2x18x18x8xf32, #tpu.memory_space<vmem>>) attributes {dimension_semantics = [#tpu.dimension_semantics<arbitrary>], iteration_bounds = array<i64: 1>, scalar_prefetch = 0 : i64, scratch_operands = 1 : i64, tpu.core_type = #tpu.core_type<tc>, window_params = [{pipeline_mode = #tpu.pipeline_mode<synchronous>, transform_indices = @transform_0, window_bounds = array<i64: 512, 36>}, {pipeline_mode = #tpu.pipeline_mode<synchronous>, transform_indices = @transform_1, window_bounds = array<i64: 36, 8>}, {pipeline_mode = #tpu.pipeline_mode<synchronous>, transform_indices = @transform_2, window_bounds = array<i64: 3, 3, 8, 8>}, {pipeline_mode = #tpu.pipeline_mode<synchronous>, transform_indices = @transform_3, window_bounds = array<i64: 1, 8>}, {pipeline_mode = #tpu.pipeline_mode<synchronous>, transform_indices = @transform_4, window_bounds = array<i64: 1, 8>}, {pipeline_mode = #tpu.pipeline_mode<synchronous>, transform_indices = @transform_5, window_bounds = array<i64: 512, 8>}]} {
    %c0 = arith.constant 0 : index
    %c0_0 = arith.constant 0 : index
    %0 = vector.load %arg1[%c0, %c0_0] : memref<512x36xbf16, #tpu.memory_space<vmem>>, vector<512x36xbf16>
    %c0_1 = arith.constant 0 : index
    %c0_2 = arith.constant 0 : index
    %1 = vector.load %arg2[%c0_1, %c0_2] : memref<36x8xbf16, #tpu.memory_space<vmem>>, vector<36x8xbf16>
    %cst = arith.constant dense<0.000000e+00> : vector<512x8xf32>
    %2 = tpu.matmul %0, %1, %cst {dimension_numbers = #tpu.dot_dimension_numbers<[1], [0], [0], [1], [0, 0, 1, 1], [], []>} : vector<512x36xbf16>, vector<36x8xbf16>, vector<512x8xf32> -> vector<512x8xf32>
    %cst_3 = arith.constant 0.000000e+00 : f32
    %3 = vector.broadcast %cst_3 : f32 to vector<512x8xf32>
    %4 = arith.maximumf %2, %3 : vector<512x8xf32>
    %5 = vector.shape_cast %4 : vector<512x8xf32> to vector<2x16x16x8xf32>
    %c0_4 = arith.constant 0 : index
    %c1 = arith.constant 1 : index
    %c1_5 = arith.constant 1 : index
    %c0_6 = arith.constant 0 : index
    %6 = vector.load %arg7[%c0_4, %c1, %c1_5, %c0_6] : memref<2x18x18x8xf32, #tpu.memory_space<vmem>>, vector<2x16x16x8xf32>
    tpu.vector_store %arg7[%c0_4, %c1, %c1_5, %c0_6], %5 {strides = array<i32>} : memref<2x18x18x8xf32, #tpu.memory_space<vmem>>, vector<2x16x16x8xf32>,
    %cst_7 = arith.constant 0.000000e+00 : f32
    %7 = vector.broadcast %cst_7 : f32 to vector<2x1x18x8xf32>
    %c0_8 = arith.constant 0 : index
    %c0_9 = arith.constant 0 : index
    %c0_10 = arith.constant 0 : index
    %c0_11 = arith.constant 0 : index
    %8 = vector.load %arg7[%c0_8, %c0_9, %c0_10, %c0_11] : memref<2x18x18x8xf32, #tpu.memory_space<vmem>>, vector<2x1x18x8xf32>
    tpu.vector_store %arg7[%c0_8, %c0_9, %c0_10, %c0_11], %7 {strides = array<i32>} : memref<2x18x18x8xf32, #tpu.memory_space<vmem>>, vector<2x1x18x8xf32>,
    %c0_12 = arith.constant 0 : index
    %c17 = arith.constant 17 : index
    %c0_13 = arith.constant 0 : index
    %c0_14 = arith.constant 0 : index
    %9 = vector.load %arg7[%c0_12, %c17, %c0_13, %c0_14] : memref<2x18x18x8xf32, #tpu.memory_space<vmem>>, vector<2x1x18x8xf32>
    tpu.vector_store %arg7[%c0_12, %c17, %c0_13, %c0_14], %7 {strides = array<i32>} : memref<2x18x18x8xf32, #tpu.memory_space<vmem>>, vector<2x1x18x8xf32>,
    %cst_15 = arith.constant 0.000000e+00 : f32
    %10 = vector.broadcast %cst_15 : f32 to vector<2x18x1x8xf32>
    %c0_16 = arith.constant 0 : index
    %c0_17 = arith.constant 0 : index
    %c0_18 = arith.constant 0 : index
    %c0_19 = arith.constant 0 : index
    %11 = vector.load %arg7[%c0_16, %c0_17, %c0_18, %c0_19] : memref<2x18x18x8xf32, #tpu.memory_space<vmem>>, vector<2x18x1x8xf32>
    tpu.vector_store %arg7[%c0_16, %c0_17, %c0_18, %c0_19], %10 {strides = array<i32>} : memref<2x18x18x8xf32, #tpu.memory_space<vmem>>, vector<2x18x1x8xf32>,
    %c0_20 = arith.constant 0 : index
    %c0_21 = arith.constant 0 : index
    %c17_22 = arith.constant 17 : index
    %c0_23 = arith.constant 0 : index
    %12 = vector.load %arg7[%c0_20, %c0_21, %c17_22, %c0_23] : memref<2x18x18x8xf32, #tpu.memory_space<vmem>>, vector<2x18x1x8xf32>
    tpu.vector_store %arg7[%c0_20, %c0_21, %c17_22, %c0_23], %10 {strides = array<i32>} : memref<2x18x18x8xf32, #tpu.memory_space<vmem>>, vector<2x18x1x8xf32>,
    %cst_24 = arith.constant 0.000000e+00 : f32
    %13 = vector.broadcast %cst_24 : f32 to vector<512x8xf32>
    %c0_25 = arith.constant 0 : index
    %c0_26 = arith.constant 0 : index
    %c0_27 = arith.constant 0 : index
    %c0_28 = arith.constant 0 : index
    %14 = vector.load %arg7[%c0_25, %c0_26, %c0_27, %c0_28] : memref<2x18x18x8xf32, #tpu.memory_space<vmem>>, vector<2x16x16x8xf32>
    %15 = vector.shape_cast %14 : vector<2x16x16x8xf32> to vector<512x8xf32>
    %16 = arith.truncf %15 : vector<512x8xf32> to vector<512x8xbf16>
    %c0_29 = arith.constant 0 : index
    %c0_30 = arith.constant 0 : index
    %c0_31 = arith.constant 0 : index
    %c0_32 = arith.constant 0 : index
    %17 = vector.load %arg3[%c0_29, %c0_30, %c0_31, %c0_32] : memref<3x3x8x8xbf16, #tpu.memory_space<vmem>>, vector<1x1x8x8xbf16>
    %18 = vector.shape_cast %17 : vector<1x1x8x8xbf16> to vector<8x8xbf16>
    %cst_33 = arith.constant dense<0.000000e+00> : vector<512x8xf32>
    %19 = tpu.matmul %16, %18, %cst_33 {dimension_numbers = #tpu.dot_dimension_numbers<[1], [0], [0], [1], [0, 0, 1, 1], [], []>} : vector<512x8xbf16>, vector<8x8xbf16>, vector<512x8xf32> -> vector<512x8xf32>
    %20 = arith.addf %13, %19 : vector<512x8xf32>
    %c0_34 = arith.constant 0 : index
    %c0_35 = arith.constant 0 : index
    %c1_36 = arith.constant 1 : index
    %c0_37 = arith.constant 0 : index
    %21 = vector.load %arg7[%c0_34, %c0_35, %c1_36, %c0_37] : memref<2x18x18x8xf32, #tpu.memory_space<vmem>>, vector<2x16x16x8xf32>
    %22 = vector.shape_cast %21 : vector<2x16x16x8xf32> to vector<512x8xf32>
    %23 = arith.truncf %22 : vector<512x8xf32> to vector<512x8xbf16>
    %c0_38 = arith.constant 0 : index
    %c1_39 = arith.constant 1 : index
    %c0_40 = arith.constant 0 : index
    %c0_41 = arith.constant 0 : index
    %24 = vector.load %arg3[%c0_38, %c1_39, %c0_40, %c0_41] : memref<3x3x8x8xbf16, #tpu.memory_space<vmem>>, vector<1x1x8x8xbf16>
    %25 = vector.shape_cast %24 : vector<1x1x8x8xbf16> to vector<8x8xbf16>
    %cst_42 = arith.constant dense<0.000000e+00> : vector<512x8xf32>
    %26 = tpu.matmul %23, %25, %cst_42 {dimension_numbers = #tpu.dot_dimension_numbers<[1], [0], [0], [1], [0, 0, 1, 1], [], []>} : vector<512x8xbf16>, vector<8x8xbf16>, vector<512x8xf32> -> vector<512x8xf32>
    %27 = arith.addf %20, %26 : vector<512x8xf32>
    %c0_43 = arith.constant 0 : index
    %c0_44 = arith.constant 0 : index
    %c2 = arith.constant 2 : index
    %c0_45 = arith.constant 0 : index
    %28 = vector.load %arg7[%c0_43, %c0_44, %c2, %c0_45] : memref<2x18x18x8xf32, #tpu.memory_space<vmem>>, vector<2x16x16x8xf32>
    %29 = vector.shape_cast %28 : vector<2x16x16x8xf32> to vector<512x8xf32>
    %30 = arith.truncf %29 : vector<512x8xf32> to vector<512x8xbf16>
    %c0_46 = arith.constant 0 : index
    %c2_47 = arith.constant 2 : index
    %c0_48 = arith.constant 0 : index
    %c0_49 = arith.constant 0 : index
    %31 = vector.load %arg3[%c0_46, %c2_47, %c0_48, %c0_49] : memref<3x3x8x8xbf16, #tpu.memory_space<vmem>>, vector<1x1x8x8xbf16>
    %32 = vector.shape_cast %31 : vector<1x1x8x8xbf16> to vector<8x8xbf16>
    %cst_50 = arith.constant dense<0.000000e+00> : vector<512x8xf32>
    %33 = tpu.matmul %30, %32, %cst_50 {dimension_numbers = #tpu.dot_dimension_numbers<[1], [0], [0], [1], [0, 0, 1, 1], [], []>} : vector<512x8xbf16>, vector<8x8xbf16>, vector<512x8xf32> -> vector<512x8xf32>
    %34 = arith.addf %27, %33 : vector<512x8xf32>
    %c0_51 = arith.constant 0 : index
    %c1_52 = arith.constant 1 : index
    %c0_53 = arith.constant 0 : index
    %c0_54 = arith.constant 0 : index
    %35 = vector.load %arg7[%c0_51, %c1_52, %c0_53, %c0_54] : memref<2x18x18x8xf32, #tpu.memory_space<vmem>>, vector<2x16x16x8xf32>
    %36 = vector.shape_cast %35 : vector<2x16x16x8xf32> to vector<512x8xf32>
    %37 = arith.truncf %36 : vector<512x8xf32> to vector<512x8xbf16>
    %c1_55 = arith.constant 1 : index
    %c0_56 = arith.constant 0 : index
    %c0_57 = arith.constant 0 : index
    %c0_58 = arith.constant 0 : index
    %38 = vector.load %arg3[%c1_55, %c0_56, %c0_57, %c0_58] : memref<3x3x8x8xbf16, #tpu.memory_space<vmem>>, vector<1x1x8x8xbf16>
    %39 = vector.shape_cast %38 : vector<1x1x8x8xbf16> to vector<8x8xbf16>
    %cst_59 = arith.constant dense<0.000000e+00> : vector<512x8xf32>
    %40 = tpu.matmul %37, %39, %cst_59 {dimension_numbers = #tpu.dot_dimension_numbers<[1], [0], [0], [1], [0, 0, 1, 1], [], []>} : vector<512x8xbf16>, vector<8x8xbf16>, vector<512x8xf32> -> vector<512x8xf32>
    %41 = arith.addf %34, %40 : vector<512x8xf32>
    %c0_60 = arith.constant 0 : index
    %c1_61 = arith.constant 1 : index
    %c1_62 = arith.constant 1 : index
    %c0_63 = arith.constant 0 : index
    %42 = vector.load %arg7[%c0_60, %c1_61, %c1_62, %c0_63] : memref<2x18x18x8xf32, #tpu.memory_space<vmem>>, vector<2x16x16x8xf32>
    %43 = vector.shape_cast %42 : vector<2x16x16x8xf32> to vector<512x8xf32>
    %44 = arith.truncf %43 : vector<512x8xf32> to vector<512x8xbf16>
    %c1_64 = arith.constant 1 : index
    %c1_65 = arith.constant 1 : index
    %c0_66 = arith.constant 0 : index
    %c0_67 = arith.constant 0 : index
    %45 = vector.load %arg3[%c1_64, %c1_65, %c0_66, %c0_67] : memref<3x3x8x8xbf16, #tpu.memory_space<vmem>>, vector<1x1x8x8xbf16>
    %46 = vector.shape_cast %45 : vector<1x1x8x8xbf16> to vector<8x8xbf16>
    %cst_68 = arith.constant dense<0.000000e+00> : vector<512x8xf32>
    %47 = tpu.matmul %44, %46, %cst_68 {dimension_numbers = #tpu.dot_dimension_numbers<[1], [0], [0], [1], [0, 0, 1, 1], [], []>} : vector<512x8xbf16>, vector<8x8xbf16>, vector<512x8xf32> -> vector<512x8xf32>
    %48 = arith.addf %41, %47 : vector<512x8xf32>
    %c0_69 = arith.constant 0 : index
    %c1_70 = arith.constant 1 : index
    %c2_71 = arith.constant 2 : index
    %c0_72 = arith.constant 0 : index
    %49 = vector.load %arg7[%c0_69, %c1_70, %c2_71, %c0_72] : memref<2x18x18x8xf32, #tpu.memory_space<vmem>>, vector<2x16x16x8xf32>
    %50 = vector.shape_cast %49 : vector<2x16x16x8xf32> to vector<512x8xf32>
    %51 = arith.truncf %50 : vector<512x8xf32> to vector<512x8xbf16>
    %c1_73 = arith.constant 1 : index
    %c2_74 = arith.constant 2 : index
    %c0_75 = arith.constant 0 : index
    %c0_76 = arith.constant 0 : index
    %52 = vector.load %arg3[%c1_73, %c2_74, %c0_75, %c0_76] : memref<3x3x8x8xbf16, #tpu.memory_space<vmem>>, vector<1x1x8x8xbf16>
    %53 = vector.shape_cast %52 : vector<1x1x8x8xbf16> to vector<8x8xbf16>
    %cst_77 = arith.constant dense<0.000000e+00> : vector<512x8xf32>
    %54 = tpu.matmul %51, %53, %cst_77 {dimension_numbers = #tpu.dot_dimension_numbers<[1], [0], [0], [1], [0, 0, 1, 1], [], []>} : vector<512x8xbf16>, vector<8x8xbf16>, vector<512x8xf32> -> vector<512x8xf32>
    %55 = arith.addf %48, %54 : vector<512x8xf32>
    %c0_78 = arith.constant 0 : index
    %c2_79 = arith.constant 2 : index
    %c0_80 = arith.constant 0 : index
    %c0_81 = arith.constant 0 : index
    %56 = vector.load %arg7[%c0_78, %c2_79, %c0_80, %c0_81] : memref<2x18x18x8xf32, #tpu.memory_space<vmem>>, vector<2x16x16x8xf32>
    %57 = vector.shape_cast %56 : vector<2x16x16x8xf32> to vector<512x8xf32>
    %58 = arith.truncf %57 : vector<512x8xf32> to vector<512x8xbf16>
    %c2_82 = arith.constant 2 : index
    %c0_83 = arith.constant 0 : index
    %c0_84 = arith.constant 0 : index
    %c0_85 = arith.constant 0 : index
    %59 = vector.load %arg3[%c2_82, %c0_83, %c0_84, %c0_85] : memref<3x3x8x8xbf16, #tpu.memory_space<vmem>>, vector<1x1x8x8xbf16>
    %60 = vector.shape_cast %59 : vector<1x1x8x8xbf16> to vector<8x8xbf16>
    %cst_86 = arith.constant dense<0.000000e+00> : vector<512x8xf32>
    %61 = tpu.matmul %58, %60, %cst_86 {dimension_numbers = #tpu.dot_dimension_numbers<[1], [0], [0], [1], [0, 0, 1, 1], [], []>} : vector<512x8xbf16>, vector<8x8xbf16>, vector<512x8xf32> -> vector<512x8xf32>
    %62 = arith.addf %55, %61 : vector<512x8xf32>
    %c0_87 = arith.constant 0 : index
    %c2_88 = arith.constant 2 : index
    %c1_89 = arith.constant 1 : index
    %c0_90 = arith.constant 0 : index
    %63 = vector.load %arg7[%c0_87, %c2_88, %c1_89, %c0_90] : memref<2x18x18x8xf32, #tpu.memory_space<vmem>>, vector<2x16x16x8xf32>
    %64 = vector.shape_cast %63 : vector<2x16x16x8xf32> to vector<512x8xf32>
    %65 = arith.truncf %64 : vector<512x8xf32> to vector<512x8xbf16>
    %c2_91 = arith.constant 2 : index
    %c1_92 = arith.constant 1 : index
    %c0_93 = arith.constant 0 : index
    %c0_94 = arith.constant 0 : index
    %66 = vector.load %arg3[%c2_91, %c1_92, %c0_93, %c0_94] : memref<3x3x8x8xbf16, #tpu.memory_space<vmem>>, vector<1x1x8x8xbf16>
    %67 = vector.shape_cast %66 : vector<1x1x8x8xbf16> to vector<8x8xbf16>
    %cst_95 = arith.constant dense<0.000000e+00> : vector<512x8xf32>
    %68 = tpu.matmul %65, %67, %cst_95 {dimension_numbers = #tpu.dot_dimension_numbers<[1], [0], [0], [1], [0, 0, 1, 1], [], []>} : vector<512x8xbf16>, vector<8x8xbf16>, vector<512x8xf32> -> vector<512x8xf32>
    %69 = arith.addf %62, %68 : vector<512x8xf32>
    %c0_96 = arith.constant 0 : index
    %c2_97 = arith.constant 2 : index
    %c2_98 = arith.constant 2 : index
    %c0_99 = arith.constant 0 : index
    %70 = vector.load %arg7[%c0_96, %c2_97, %c2_98, %c0_99] : memref<2x18x18x8xf32, #tpu.memory_space<vmem>>, vector<2x16x16x8xf32>
    %71 = vector.shape_cast %70 : vector<2x16x16x8xf32> to vector<512x8xf32>
    %72 = arith.truncf %71 : vector<512x8xf32> to vector<512x8xbf16>
    %c2_100 = arith.constant 2 : index
    %c2_101 = arith.constant 2 : index
    %c0_102 = arith.constant 0 : index
    %c0_103 = arith.constant 0 : index
    %73 = vector.load %arg3[%c2_100, %c2_101, %c0_102, %c0_103] : memref<3x3x8x8xbf16, #tpu.memory_space<vmem>>, vector<1x1x8x8xbf16>
    %74 = vector.shape_cast %73 : vector<1x1x8x8xbf16> to vector<8x8xbf16>
    %cst_104 = arith.constant dense<0.000000e+00> : vector<512x8xf32>
    %75 = tpu.matmul %72, %74, %cst_104 {dimension_numbers = #tpu.dot_dimension_numbers<[1], [0], [0], [1], [0, 0, 1, 1], [], []>} : vector<512x8xbf16>, vector<8x8xbf16>, vector<512x8xf32> -> vector<512x8xf32>
    %76 = arith.addf %69, %75 : vector<512x8xf32>
    %cst_105 = arith.constant 0.000000e+00 : f32
    %77 = vector.broadcast %cst_105 : f32 to vector<512x8xf32>
    %78 = arith.maximumf %76, %77 : vector<512x8xf32>
    %cst_106 = arith.constant dense<0.000000e+00> : vector<8xf32>
    %79 = vector.multi_reduction <add>, %78, %cst_106 [0] : vector<512x8xf32> to vector<8xf32>
    %80 = vector.shape_cast %79 : vector<8xf32> to vector<1x8xf32>
    %cst_107 = arith.constant 5.120000e+02 : f32
    %81 = vector.broadcast %cst_107 : f32 to vector<1x8xf32>
    %82 = arith.divf %80, %81 : vector<1x8xf32>
    %83 = vector.broadcast %82 : vector<1x8xf32> to vector<512x8xf32>
    %84 = arith.subf %78, %83 : vector<512x8xf32>
    %85 = arith.mulf %84, %84 : vector<512x8xf32>
    %cst_108 = arith.constant dense<0.000000e+00> : vector<8xf32>
    %86 = vector.multi_reduction <add>, %85, %cst_108 [0] : vector<512x8xf32> to vector<8xf32>
    %87 = vector.shape_cast %86 : vector<8xf32> to vector<1x8xf32>
    %cst_109 = arith.constant 5.120000e+02 : f32
    %88 = vector.broadcast %cst_109 : f32 to vector<1x8xf32>
    %89 = arith.divf %87, %88 : vector<1x8xf32>
    %cst_110 = arith.constant 9.99999974E-6 : f32
    %90 = vector.broadcast %cst_110 : f32 to vector<1x8xf32>
    %91 = arith.addf %89, %90 : vector<1x8xf32>
    %92 = math.rsqrt %91 : vector<1x8xf32>
    %c0_111 = arith.constant 0 : index
    %c0_112 = arith.constant 0 : index
    %93 = vector.load %arg4[%c0_111, %c0_112] : memref<1x8xf32, #tpu.memory_space<vmem>>, vector<1x8xf32>
    %94 = arith.mulf %92, %93 : vector<1x8xf32>
    %95 = vector.broadcast %82 : vector<1x8xf32> to vector<512x8xf32>
    %96 = arith.subf %78, %95 : vector<512x8xf32>
    %97 = vector.broadcast %94 : vector<1x8xf32> to vector<512x8xf32>
    %98 = arith.mulf %96, %97 : vector<512x8xf32>
    %c0_113 = arith.constant 0 : index
    %c0_114 = arith.constant 0 : index
    %99 = vector.load %arg5[%c0_113, %c0_114] : memref<1x8xf32, #tpu.memory_space<vmem>>, vector<1x8xf32>
    %100 = vector.broadcast %99 : vector<1x8xf32> to vector<512x8xf32>
    %101 = arith.addf %98, %100 : vector<512x8xf32>
    %c0_115 = arith.constant 0 : index
    %c0_116 = arith.constant 0 : index
    %102 = vector.load %arg6[%c0_115, %c0_116] : memref<512x8xf32, #tpu.memory_space<vmem>>, vector<512x8xf32>
    tpu.vector_store %arg6[%c0_115, %c0_116], %101 {strides = array<i32>} : memref<512x8xf32, #tpu.memory_space<vmem>>, vector<512x8xf32>,
    return
  }
  func.func @transform_0(%arg0: i32) -> (i32, i32) {
    %c0_i32 = arith.constant 0 : i32
    %c0_i32_0 = arith.constant 0 : i32
    %c0_i32_1 = arith.constant 0 : i32
    return %c0_i32, %c0_i32_0 : i32, i32
  }
  func.func @transform_1(%arg0: i32) -> (i32, i32) {
    %c0_i32 = arith.constant 0 : i32
    %c0_i32_0 = arith.constant 0 : i32
    %c0_i32_1 = arith.constant 0 : i32
    return %c0_i32, %c0_i32_0 : i32, i32
  }
  func.func @transform_2(%arg0: i32) -> (i32, i32, i32, i32) {
    %c0_i32 = arith.constant 0 : i32
    %c0_i32_0 = arith.constant 0 : i32
    %c0_i32_1 = arith.constant 0 : i32
    %c0_i32_2 = arith.constant 0 : i32
    %c0_i32_3 = arith.constant 0 : i32
    return %c0_i32, %c0_i32_0, %c0_i32_1, %c0_i32_2 : i32, i32, i32, i32
  }
  func.func @transform_3(%arg0: i32) -> (i32, i32) {
    %c0_i32 = arith.constant 0 : i32
    %c0_i32_0 = arith.constant 0 : i32
    %c0_i32_1 = arith.constant 0 : i32
    return %c0_i32, %c0_i32_0 : i32, i32
  }
  func.func @transform_4(%arg0: i32) -> (i32, i32) {
    %c0_i32 = arith.constant 0 : i32
    %c0_i32_0 = arith.constant 0 : i32
    %c0_i32_1 = arith.constant 0 : i32
    return %c0_i32, %c0_i32_0 : i32, i32
  }
  func.func @transform_5(%arg0: i32) -> (i32, i32) {
    %c0_i32 = arith.constant 0 : i32
    %c0_i32_0 = arith.constant 0 : i32
    %c0_i32_1 = arith.constant 0 : i32
    return %c0_i32, %c0_i32_0 : i32, i32
  }
}

</mosaic_0001>

<llo_original>
// kernel: tpu_custom_call.1
$region0: #{tpu_custom_call.1}
  #allocation0 [shape = 'u32[]', space=smem, size = 0x4, offset = 0x4, fixed_abs, tag = 'smem constant byte address 0x4 - core index']
  #allocation1 [shape = 'u32[144,128]{1,0:T(1,128)}', space=vmem, size = 0x12000, scoped, tag = 'internal scratch']
  #allocation2 [shape = 'f32[2,18,18,8]{3,2,1,0:T(8,128)}', space=vmem, size = 0x6c000, scoped, tag = 'scratch operand']
  %s0 = inlined_call_operand.vmem [shape: bf16[512,36], index: 0, kind: input, shape index: {}]
  %s1 = inlined_call_operand.vmem [shape: bf16[36,8], index: 1, kind: input, shape index: {}]
  %s2 = inlined_call_operand.vmem [shape: bf16[3,3,8,8], index: 2, kind: input, shape index: {}]
  %s3 = inlined_call_operand.vmem [shape: f32[1,8], index: 3, kind: input, shape index: {}]
  %s4 = inlined_call_operand.vmem [shape: f32[1,8], index: 4, kind: input, shape index: {}]
  %s5 = inlined_call_operand.vmem [shape: f32[512,8], index: 5, kind: output, shape index: {}]
  %s6 = sld [smem:[#allocation0]]
  $region30: #{tpu_custom_call.1} parent=0
    _
  %s8 = ssub.s32 1, %s6
  %s9 = scalar_select 0, %s8, %s6
  // Predicated region
  $region2: #{tpu_custom_call.1} parent=0 // pred_check
    _
  $region3: #{tpu_custom_call.1} parent=0 // pred_check_branch
    %11 = sbr.rel (0) target = $region5
  $region4: #{tpu_custom_call.1} parent=0 // pred_region
    _
  $region5: #{tpu_custom_call.1} parent=0 // pred_fallthru
    _
  // Predicated region
  $region6: #{tpu_custom_call.1} parent=0 // pred_check
    _
  $region7: #{tpu_custom_call.1} parent=0 // pred_check_branch
    %13 = sbr.rel (0) target = $region9
  $region8: #{tpu_custom_call.1} parent=0 // pred_region
    _
  $region9: #{tpu_custom_call.1} parent=0 // pred_fallthru
    _
  // Predicated region
  $region10: #{tpu_custom_call.1} parent=0 // pred_check
    _
  $region11: #{tpu_custom_call.1} parent=0 // pred_check_branch
    %15 = sbr.rel (0) target = $region13
  $region12: #{tpu_custom_call.1} parent=0 // pred_region
    _
  $region13: #{tpu_custom_call.1} parent=0 // pred_fallthru
    _
  // Predicated region
  $region14: #{tpu_custom_call.1} parent=0 // pred_check
    _
  $region15: #{tpu_custom_call.1} parent=0 // pred_check_branch
    %17 = sbr.rel (0) target = $region17
  $region16: #{tpu_custom_call.1} parent=0 // pred_region
    _
  $region17: #{tpu_custom_call.1} parent=0 // pred_fallthru
    _
  // Predicated region
  $region18: #{tpu_custom_call.1} parent=0 // pred_check
    _
  $region19: #{tpu_custom_call.1} parent=0 // pred_check_branch
    %19 = sbr.rel (0) target = $region21
  $region20: #{tpu_custom_call.1} parent=0 // pred_region
    _
  $region21: #{tpu_custom_call.1} parent=0 // pred_fallthru
    _
  %v21 = vld [vmem:[%s0] sm:$0xf]
  %v22 = vld [vmem:[%s0 + $0x4] sm:$0xf]
  %v23 = vld [vmem:[%s0 + $0x8] sm:$0xf]
  %v24 = vld [vmem:[%s0 + $0xc] sm:$0xf]
  %v25 = vld [vmem:[%s0 + $0x10] sm:$0xf]
  %v26 = vld [vmem:[%s0 + $0x14] sm:$0xf]
  %v27 = vld [vmem:[%s0 + $0x18] sm:$0xf]
  %v28 = vld [vmem:[%s0 + $0x1c] sm:$0xf]
  %v29 = vld [vmem:[%s0 + $0x20] sm:$0xf]
  %v30 = vld [vmem:[%s0 + $0x24] sm:$0xf]
  %v31 = vld [vmem:[%s0 + $0x28] sm:$0xf]
  %v32 = vld [vmem:[%s0 + $0x2c] sm:$0xf]
  %v33 = vld [vmem:[%s0 + $0x30] sm:$0xf]
  %v34 = vld [vmem:[%s0 + $0x34] sm:$0xf]
  %v35 = vld [vmem:[%s0 + $0x38] sm:$0xf]
  %v36 = vld [vmem:[%s0 + $0x3c] sm:$0xf]
  %v37 = vld [vmem:[%s0 + $0x40] sm:$0xf]
  %v38 = vld [vmem:[%s0 + $0x44] sm:$0xf]
  %v39 = vld [vmem:[%s0 + $0x48] sm:$0xf]
  %v40 = vld [vmem:[%s0 + $0x4c] sm:$0xf]
  %v41 = vld [vmem:[%s0 + $0x50] sm:$0xf]
  %v42 = vld [vmem:[%s0 + $0x54] sm:$0xf]
  %v43 = vld [vmem:[%s0 + $0x58] sm:$0xf]
  %v44 = vld [vmem:[%s0 + $0x5c] sm:$0xf]
  %v45 = vld [vmem:[%s0 + $0x60] sm:$0xf]
  %v46 = vld [vmem:[%s0 + $0x64] sm:$0xf]
  %v47 = vld [vmem:[%s0 + $0x68] sm:$0xf]
  %v48 = vld [vmem:[%s0 + $0x6c] sm:$0xf]
  %v49 = vld [vmem:[%s0 + $0x70] sm:$0xf]
  %v50 = vld [vmem:[%s0 + $0x74] sm:$0xf]
  %v51 = vld [vmem:[%s0 + $0x78] sm:$0xf]
  %v52 = vld [vmem:[%s0 + $0x7c] sm:$0xf]
  %v53 = vld [vmem:[%s0 + $0x80] sm:$0xf]
  %v54 = vld [vmem:[%s0 + $0x84] sm:$0xf]
  %v55 = vld [vmem:[%s0 + $0x88] sm:$0xf]
  %v56 = vld [vmem:[%s0 + $0x8c] sm:$0xf]
  %v57 = vld [vmem:[%s0 + $0x90] sm:$0xf]
  %v58 = vld [vmem:[%s0 + $0x94] sm:$0xf]
  %v59 = vld [vmem:[%s0 + $0x98] sm:$0xf]
  %v60 = vld [vmem:[%s0 + $0x9c] sm:$0xf]
  %v61 = vld [vmem:[%s0 + $0xa0] sm:$0xf]
  %v62 = vld [vmem:[%s0 + $0xa4] sm:$0xf]
  %v63 = vld [vmem:[%s0 + $0xa8] sm:$0xf]
  %v64 = vld [vmem:[%s0 + $0xac] sm:$0xf]
  %v65 = vld [vmem:[%s0 + $0xb0] sm:$0xf]
  %v66 = vld [vmem:[%s0 + $0xb4] sm:$0xf]
  %v67 = vld [vmem:[%s0 + $0xb8] sm:$0xf]
  %v68 = vld [vmem:[%s0 + $0xbc] sm:$0xf]
  %v69 = vld [vmem:[%s0 + $0xc0] sm:$0xf]
  %v70 = vld [vmem:[%s0 + $0xc4] sm:$0xf]
  %v71 = vld [vmem:[%s0 + $0xc8] sm:$0xf]
  %v72 = vld [vmem:[%s0 + $0xcc] sm:$0xf]
  %v73 = vld [vmem:[%s0 + $0xd0] sm:$0xf]
  %v74 = vld [vmem:[%s0 + $0xd4] sm:$0xf]
  %v75 = vld [vmem:[%s0 + $0xd8] sm:$0xf]
  %v76 = vld [vmem:[%s0 + $0xdc] sm:$0xf]
  %v77 = vld [vmem:[%s0 + $0xe0] sm:$0xf]
  %v78 = vld [vmem:[%s0 + $0xe4] sm:$0xf]
  %v79 = vld [vmem:[%s0 + $0xe8] sm:$0xf]
  %v80 = vld [vmem:[%s0 + $0xec] sm:$0xf]
  %v81 = vld [vmem:[%s0 + $0xf0] sm:$0xf]
  %v82 = vld [vmem:[%s0 + $0xf4] sm:$0xf]
  %v83 = vld [vmem:[%s0 + $0xf8] sm:$0xf]
  %v84 = vld [vmem:[%s0 + $0xfc] sm:$0xf]
  %v85 = vld [vmem:[%s1] sm:$0xf]
  %v86 = vld [vmem:[%s1 + $0x4] sm:$0xf]
  %v87 = vld [vmem:[%s1 + $0x8] sm:$0xf]
  %v88 = vld [vmem:[%s1 + $0xc] sm:$0xf]
  %v89 = vld [vmem:[%s1 + $0x10] sm:$0x3]
  %v154 = vunpack.c.l.b16 %v21
  %v155 = vunpack.c.l.b16 %v22
  %v156 = vunpack.c.l.b16 %v23
  %v157 = vunpack.c.l.b16 %v24
  %v158 = vunpack.c.l.b16 %v25
  %v159 = vunpack.c.l.b16 %v26
  %v160 = vunpack.c.l.b16 %v27
  %v161 = vunpack.c.l.b16 %v28
  %v162 = vunpack.c.l.b16 %v29
  %v163 = vunpack.c.l.b16 %v30
  %v164 = vunpack.c.l.b16 %v31
  %v165 = vunpack.c.l.b16 %v32
  %v166 = vunpack.c.l.b16 %v33
  %v167 = vunpack.c.l.b16 %v34
  %v168 = vunpack.c.l.b16 %v35
  %v169 = vunpack.c.l.b16 %v36
  %v170 = vunpack.c.l.b16 %v37
  %v171 = vunpack.c.l.b16 %v38
  %v172 = vunpack.c.l.b16 %v39
  %v173 = vunpack.c.l.b16 %v40
  %v174 = vunpack.c.l.b16 %v41
  %v175 = vunpack.c.l.b16 %v42
  %v176 = vunpack.c.l.b16 %v43
  %v177 = vunpack.c.l.b16 %v44
  %v178 = vunpack.c.l.b16 %v45
  %v179 = vunpack.c.l.b16 %v46
  %v180 = vunpack.c.l.b16 %v47
  %v181 = vunpack.c.l.b16 %v48
  %v182 = vunpack.c.l.b16 %v49
  %v183 = vunpack.c.l.b16 %v50
  %v184 = vunpack.c.l.b16 %v51
  %v185 = vunpack.c.l.b16 %v52
  %v186 = vunpack.c.l.b16 %v53
  %v187 = vunpack.c.l.b16 %v54
  %v188 = vunpack.c.l.b16 %v55
  %v189 = vunpack.c.l.b16 %v56
  %v190 = vunpack.c.l.b16 %v57
  %v191 = vunpack.c.l.b16 %v58
  %v192 = vunpack.c.l.b16 %v59
  %v193 = vunpack.c.l.b16 %v60
  %v194 = vunpack.c.l.b16 %v61
  %v195 = vunpack.c.l.b16 %v62
  %v196 = vunpack.c.l.b16 %v63
  %v197 = vunpack.c.l.b16 %v64
  %v198 = vunpack.c.l.b16 %v65
  %v199 = vunpack.c.l.b16 %v66
  %v200 = vunpack.c.l.b16 %v67
  %v201 = vunpack.c.l.b16 %v68
  %v202 = vunpack.c.l.b16 %v69
  %v203 = vunpack.c.l.b16 %v70
  %v204 = vunpack.c.l.b16 %v71
  %v205 = vunpack.c.l.b16 %v72
  %v206 = vunpack.c.l.b16 %v73
  %v207 = vunpack.c.l.b16 %v74
  %v208 = vunpack.c.l.b16 %v75
  %v209 = vunpack.c.l.b16 %v76
  %v210 = vunpack.c.l.b16 %v77
  %v211 = vunpack.c.l.b16 %v78
  %v212 = vunpack.c.l.b16 %v79
  %v213 = vunpack.c.l.b16 %v80
  %v214 = vunpack.c.l.b16 %v81
  %v215 = vunpack.c.l.b16 %v82
  %v216 = vunpack.c.l.b16 %v83
  %v217 = vunpack.c.l.b16 %v84
  %v218 = vpack.c.b16 %v155, %v154
  %v219 = vpack.c.b16 %v157, %v156
  %v220 = vpack.c.b16 %v159, %v158
  %v221 = vpack.c.b16 %v161, %v160
  %v222 = vpack.c.b16 %v163, %v162
  %v223 = vpack.c.b16 %v165, %v164
  %v224 = vpack.c.b16 %v167, %v166
  %v225 = vpack.c.b16 %v169, %v168
  %v226 = vpack.c.b16 %v171, %v170
  %v227 = vpack.c.b16 %v173, %v172
  %v228 = vpack.c.b16 %v175, %v174
  %v229 = vpack.c.b16 %v177, %v176
  %v230 = vpack.c.b16 %v179, %v178
  %v231 = vpack.c.b16 %v181, %v180
  %v232 = vpack.c.b16 %v183, %v182
  %v233 = vpack.c.b16 %v185, %v184
  %v234 = vpack.c.b16 %v187, %v186
  %v235 = vpack.c.b16 %v189, %v188
  %v236 = vpack.c.b16 %v191, %v190
  %v237 = vpack.c.b16 %v193, %v192
  %v238 = vpack.c.b16 %v195, %v194
  %v239 = vpack.c.b16 %v197, %v196
  %v240 = vpack.c.b16 %v199, %v198
  %v241 = vpack.c.b16 %v201, %v200
  %v242 = vpack.c.b16 %v203, %v202
  %v243 = vpack.c.b16 %v205, %v204
  %v244 = vpack.c.b16 %v207, %v206
  %v245 = vpack.c.b16 %v209, %v208
  %v246 = vpack.c.b16 %v211, %v210
  %v247 = vpack.c.b16 %v213, %v212
  %v248 = vpack.c.b16 %v215, %v214
  %v249 = vpack.c.b16 %v217, %v216
  %v255 = vunpack.c.l.b16 %v85
  %v256 = vunpack.c.l.b16 %v86
  %v257 = vunpack.c.l.b16 %v87
  %v258 = vunpack.c.l.b16 %v88
  %v259 = vunpack.c.l.b16 %v89
  %v260 = vpack.c.b16 %v256, %v255
  %v261 = vpack.c.b16 %v258, %v257
  %v262 = vpack.c.b16 %v259, %v259
  %vm265 = vcmask 293888
  %v267 = vsel %vm265, %v218, 0
  %v270 = vsel %vm265, %v219, 0
  %v273 = vsel %vm265, %v220, 0
  %v276 = vsel %vm265, %v221, 0
  %v279 = vsel %vm265, %v222, 0
  %v282 = vsel %vm265, %v223, 0
  %v285 = vsel %vm265, %v224, 0
  %v288 = vsel %vm265, %v225, 0
  %v291 = vsel %vm265, %v226, 0
  %v294 = vsel %vm265, %v227, 0
  %v297 = vsel %vm265, %v228, 0
  %v300 = vsel %vm265, %v229, 0
  %v303 = vsel %vm265, %v230, 0
  %v306 = vsel %vm265, %v231, 0
  %v309 = vsel %vm265, %v232, 0
  %v312 = vsel %vm265, %v233, 0
  %v315 = vsel %vm265, %v234, 0
  %v318 = vsel %vm265, %v235, 0
  %v321 = vsel %vm265, %v236, 0
  %v324 = vsel %vm265, %v237, 0
  %v327 = vsel %vm265, %v238, 0
  %v330 = vsel %vm265, %v239, 0
  %v333 = vsel %vm265, %v240, 0
  %v336 = vsel %vm265, %v241, 0
  %v339 = vsel %vm265, %v242, 0
  %v342 = vsel %vm265, %v243, 0
  %v345 = vsel %vm265, %v244, 0
  %v348 = vsel %vm265, %v245, 0
  %v351 = vsel %vm265, %v246, 0
  %v354 = vsel %vm265, %v247, 0
  %v357 = vsel %vm265, %v248, 0
  %v360 = vsel %vm265, %v249, 0
  %vm362 = vcmask 1041408
  %v364 = vsel %vm362, %v262, 0
  %366 = vmatprep.subr.bf16.mxu0 0
  %367 = vmatpush1.bf16.msra.mxu0 0
  %368 = vmatprep.subr.bf16.mxu0 0
  %369 = vmatpush1.bf16.msra.mxu0 0
  %370 = vmatprep.subr.bf16.mxu0 0
  %371 = vmatpush1.bf16.msra.mxu0 0
  %372 = vmatprep.subr.bf16.mxu0 0
  %373 = vmatpush1.bf16.msra.mxu0 0
  %374 = vmatprep.subr.bf16.mxu0 0
  %375 = vmatpush1.bf16.msra.mxu0 0
  %376 = vmatprep.subr.bf16.mxu0 0
  %377 = vmatpush1.bf16.msra.mxu0 %v364
  %378 = vmatprep.subr.bf16.mxu0 0
  %379 = vmatpush1.bf16.msra.mxu0 %v261
  %380 = vmatprep.subr.bf16.mxu0 0
  %381 = vmatpush1.bf16.msra.mxu0 %v260
  %382 = vmatprep.subr.bf16.mxu0 0
  %383 = vmatpush2.bf16.msra.mxu0 0
  %384 = vmatprep.subr.bf16.mxu0 0
  %385 = vmatpush2.bf16.msra.mxu0 0
  %386 = vmatprep.subr.bf16.mxu0 0
  %387 = vmatpush2.bf16.msra.mxu0 0
  %388 = vmatprep.subr.bf16.mxu0 0
  %389 = vmatpush2.bf16.msra.mxu0 0
  %390 = vmatprep.subr.bf16.mxu0 0
  %391 = vmatpush2.bf16.msra.mxu0 0
  %392 = vmatprep.subr.bf16.mxu0 0
  %393 = vmatpush2.bf16.msra.mxu0 0
  %394 = vmatprep.subr.bf16.mxu0 0
  %395 = vmatpush2.bf16.msra.mxu0 0
  %396 = vmatprep.subr.bf16.mxu0 0
  %397 = vmatpush2.bf16.msra.mxu0 0
  %398 = vmatprep.mubr.bf16.mxu0 0
  %399 = vmatmul.mubr.bf16.gmra.mxu0 %v267
  %v400 = vpop.f32.mrf.mxu0
  %v401 = vadd.f32 0.0, %v400
  %v402 = vpop.f32.mrf.mxu0
  %v403 = vpop.f32.mrf.mxu0
  %v404 = vadd.f32 0.0, %v403
  %v405 = vpop.f32.mrf.mxu0
  %406 = vmatprep.mubr.bf16.mxu0 0
  %407 = vmatmul.mubr.bf16.gmra.mxu0 %v270
  %v408 = vpop.f32.mrf.mxu0
  %v409 = vadd.f32 0.0, %v408
  %v410 = vpop.f32.mrf.mxu0
  %v411 = vpop.f32.mrf.mxu0
  %v412 = vadd.f32 0.0, %v411
  %v413 = vpop.f32.mrf.mxu0
  %414 = vmatprep.mubr.bf16.mxu0 0
  %415 = vmatmul.mubr.bf16.gmra.mxu0 %v273
  %v416 = vpop.f32.mrf.mxu0
  %v417 = vadd.f32 0.0, %v416
  %v418 = vpop.f32.mrf.mxu0
  %v419 = vpop.f32.mrf.mxu0
  %v420 = vadd.f32 0.0, %v419
  %v421 = vpop.f32.mrf.mxu0
  %422 = vmatprep.mubr.bf16.mxu0 0
  %423 = vmatmul.mubr.bf16.gmra.mxu0 %v276
  %v424 = vpop.f32.mrf.mxu0
  %v425 = vadd.f32 0.0, %v424
  %v426 = vpop.f32.mrf.mxu0
  %v427 = vpop.f32.mrf.mxu0
  %v428 = vadd.f32 0.0, %v427
  %v429 = vpop.f32.mrf.mxu0
  %430 = vmatprep.mubr.bf16.mxu0 0
  %431 = vmatmul.mubr.bf16.gmra.mxu0 %v279
  %v432 = vpop.f32.mrf.mxu0
  %v433 = vadd.f32 0.0, %v432
  %v434 = vpop.f32.mrf.mxu0
  %v435 = vpop.f32.mrf.mxu0
  %v436 = vadd.f32 0.0, %v435
  %v437 = vpop.f32.mrf.mxu0
  %438 = vmatprep.mubr.bf16.mxu0 0
  %439 = vmatmul.mubr.bf16.gmra.mxu0 %v282
  %v440 = vpop.f32.mrf.mxu0
  %v441 = vadd.f32 0.0, %v440
  %v442 = vpop.f32.mrf.mxu0
  %v443 = vpop.f32.mrf.mxu0
  %v444 = vadd.f32 0.0, %v443
  %v445 = vpop.f32.mrf.mxu0
  %446 = vmatprep.mubr.bf16.mxu0 0
  %447 = vmatmul.mubr.bf16.gmra.mxu0 %v285
  %v448 = vpop.f32.mrf.mxu0
  %v449 = vadd.f32 0.0, %v448
  %v450 = vpop.f32.mrf.mxu0
  %v451 = vpop.f32.mrf.mxu0
  %v452 = vadd.f32 0.0, %v451
  %v453 = vpop.f32.mrf.mxu0
  %454 = vmatprep.mubr.bf16.mxu0 0
  %455 = vmatmul.mubr.bf16.gmra.mxu0 %v288
  %v456 = vpop.f32.mrf.mxu0
  %v457 = vadd.f32 0.0, %v456
  %v458 = vpop.f32.mrf.mxu0
  %v459 = vpop.f32.mrf.mxu0
  %v460 = vadd.f32 0.0, %v459
  %v461 = vpop.f32.mrf.mxu0
  %462 = vmatprep.mubr.bf16.mxu0 0
  %463 = vmatmul.mubr.bf16.gmra.mxu0 %v291
  %v464 = vpop.f32.mrf.mxu0
  %v465 = vadd.f32 0.0, %v464
  %v466 = vpop.f32.mrf.mxu0
  %v467 = vpop.f32.mrf.mxu0
  %v468 = vadd.f32 0.0, %v467
  %v469 = vpop.f32.mrf.mxu0
  %470 = vmatprep.mubr.bf16.mxu0 0
  %471 = vmatmul.mubr.bf16.gmra.mxu0 %v294
  %v472 = vpop.f32.mrf.mxu0
  %v473 = vadd.f32 0.0, %v472
  %v474 = vpop.f32.mrf.mxu0
  %v475 = vpop.f32.mrf.mxu0
  %v476 = vadd.f32 0.0, %v475
  %v477 = vpop.f32.mrf.mxu0
  %478 = vmatprep.mubr.bf16.mxu0 0
  %479 = vmatmul.mubr.bf16.gmra.mxu0 %v297
  %v480 = vpop.f32.mrf.mxu0
  %v481 = vadd.f32 0.0, %v480
  %v482 = vpop.f32.mrf.mxu0
  %v483 = vpop.f32.mrf.mxu0
  %v484 = vadd.f32 0.0, %v483
  %v485 = vpop.f32.mrf.mxu0
  %486 = vmatprep.mubr.bf16.mxu0 0
  %487 = vmatmul.mubr.bf16.gmra.mxu0 %v300
  %v488 = vpop.f32.mrf.mxu0
  %v489 = vadd.f32 0.0, %v488
  %v490 = vpop.f32.mrf.mxu0
  %v491 = vpop.f32.mrf.mxu0
  %v492 = vadd.f32 0.0, %v491
  %v493 = vpop.f32.mrf.mxu0
  %494 = vmatprep.mubr.bf16.mxu0 0
  %495 = vmatmul.mubr.bf16.gmra.mxu0 %v303
  %v496 = vpop.f32.mrf.mxu0
  %v497 = vadd.f32 0.0, %v496
  %v498 = vpop.f32.mrf.mxu0
  %v499 = vpop.f32.mrf.mxu0
  %v500 = vadd.f32 0.0, %v499
  %v501 = vpop.f32.mrf.mxu0
  %502 = vmatprep.mubr.bf16.mxu0 0
  %503 = vmatmul.mubr.bf16.gmra.mxu0 %v306
  %v504 = vpop.f32.mrf.mxu0
  %v505 = vadd.f32 0.0, %v504
  %v506 = vpop.f32.mrf.mxu0
  %v507 = vpop.f32.mrf.mxu0
  %v508 = vadd.f32 0.0, %v507
  %v509 = vpop.f32.mrf.mxu0
  %510 = vmatprep.mubr.bf16.mxu0 0
  %511 = vmatmul.mubr.bf16.gmra.mxu0 %v309
  %v512 = vpop.f32.mrf.mxu0
  %v513 = vadd.f32 0.0, %v512
  %v514 = vpop.f32.mrf.mxu0
  %v515 = vpop.f32.mrf.mxu0
  %v516 = vadd.f32 0.0, %v515
  %v517 = vpop.f32.mrf.mxu0
  %518 = vmatprep.mubr.bf16.mxu0 0
  %519 = vmatmul.mubr.bf16.gmra.mxu0 %v312
  %v520 = vpop.f32.mrf.mxu0
  %v521 = vadd.f32 0.0, %v520
  %v522 = vpop.f32.mrf.mxu0
  %v523 = vpop.f32.mrf.mxu0
  %v524 = vadd.f32 0.0, %v523
  %v525 = vpop.f32.mrf.mxu0
  %526 = vmatprep.mubr.bf16.mxu0 0
  %527 = vmatmul.mubr.bf16.gmra.mxu0 %v315
  %v528 = vpop.f32.mrf.mxu0
  %v529 = vadd.f32 0.0, %v528
  %v530 = vpop.f32.mrf.mxu0
  %v531 = vpop.f32.mrf.mxu0
  %v532 = vadd.f32 0.0, %v531
  %v533 = vpop.f32.mrf.mxu0
  %534 = vmatprep.mubr.bf16.mxu0 0
  %535 = vmatmul.mubr.bf16.gmra.mxu0 %v318
  %v536 = vpop.f32.mrf.mxu0
  %v537 = vadd.f32 0.0, %v536
  %v538 = vpop.f32.mrf.mxu0
  %v539 = vpop.f32.mrf.mxu0
  %v540 = vadd.f32 0.0, %v539
  %v541 = vpop.f32.mrf.mxu0
  %542 = vmatprep.mubr.bf16.mxu0 0
  %543 = vmatmul.mubr.bf16.gmra.mxu0 %v321
  %v544 = vpop.f32.mrf.mxu0
  %v545 = vadd.f32 0.0, %v544
  %v546 = vpop.f32.mrf.mxu0
  %v547 = vpop.f32.mrf.mxu0
  %v548 = vadd.f32 0.0, %v547
  %v549 = vpop.f32.mrf.mxu0
  %550 = vmatprep.mubr.bf16.mxu0 0
  %551 = vmatmul.mubr.bf16.gmra.mxu0 %v324
  %v552 = vpop.f32.mrf.mxu0
  %v553 = vadd.f32 0.0, %v552
  %v554 = vpop.f32.mrf.mxu0
  %v555 = vpop.f32.mrf.mxu0
  %v556 = vadd.f32 0.0, %v555
  %v557 = vpop.f32.mrf.mxu0
  %558 = vmatprep.mubr.bf16.mxu0 0
  %559 = vmatmul.mubr.bf16.gmra.mxu0 %v327
  %v560 = vpop.f32.mrf.mxu0
  %v561 = vadd.f32 0.0, %v560
  %v562 = vpop.f32.mrf.mxu0
  %v563 = vpop.f32.mrf.mxu0
  %v564 = vadd.f32 0.0, %v563
  %v565 = vpop.f32.mrf.mxu0
  %566 = vmatprep.mubr.bf16.mxu0 0
  %567 = vmatmul.mubr.bf16.gmra.mxu0 %v330
  %v568 = vpop.f32.mrf.mxu0
  %v569 = vadd.f32 0.0, %v568
  %v570 = vpop.f32.mrf.mxu0
  %v571 = vpop.f32.mrf.mxu0
  %v572 = vadd.f32 0.0, %v571
  %v573 = vpop.f32.mrf.mxu0
  %574 = vmatprep.mubr.bf16.mxu0 0
  %575 = vmatmul.mubr.bf16.gmra.mxu0 %v333
  %v576 = vpop.f32.mrf.mxu0
  %v577 = vadd.f32 0.0, %v576
  %v578 = vpop.f32.mrf.mxu0
  %v579 = vpop.f32.mrf.mxu0
  %v580 = vadd.f32 0.0, %v579
  %v581 = vpop.f32.mrf.mxu0
  %582 = vmatprep.mubr.bf16.mxu0 0
  %583 = vmatmul.mubr.bf16.gmra.mxu0 %v336
  %v584 = vpop.f32.mrf.mxu0
  %v585 = vadd.f32 0.0, %v584
  %v586 = vpop.f32.mrf.mxu0
  %v587 = vpop.f32.mrf.mxu0
  %v588 = vadd.f32 0.0, %v587
  %v589 = vpop.f32.mrf.mxu0
  %590 = vmatprep.mubr.bf16.mxu0 0
  %591 = vmatmul.mubr.bf16.gmra.mxu0 %v339
  %v592 = vpop.f32.mrf.mxu0
  %v593 = vadd.f32 0.0, %v592
  %v594 = vpop.f32.mrf.mxu0
  %v595 = vpop.f32.mrf.mxu0
  %v596 = vadd.f32 0.0, %v595
  %v597 = vpop.f32.mrf.mxu0
  %598 = vmatprep.mubr.bf16.mxu0 0
  %599 = vmatmul.mubr.bf16.gmra.mxu0 %v342
  %v600 = vpop.f32.mrf.mxu0
  %v601 = vadd.f32 0.0, %v600
  %v602 = vpop.f32.mrf.mxu0
  %v603 = vpop.f32.mrf.mxu0
  %v604 = vadd.f32 0.0, %v603
  %v605 = vpop.f32.mrf.mxu0
  %606 = vmatprep.mubr.bf16.mxu0 0
  %607 = vmatmul.mubr.bf16.gmra.mxu0 %v345
  %v608 = vpop.f32.mrf.mxu0
  %v609 = vadd.f32 0.0, %v608
  %v610 = vpop.f32.mrf.mxu0
  %v611 = vpop.f32.mrf.mxu0
  %v612 = vadd.f32 0.0, %v611
  %v613 = vpop.f32.mrf.mxu0
  %614 = vmatprep.mubr.bf16.mxu0 0
  %615 = vmatmul.mubr.bf16.gmra.mxu0 %v348
  %v616 = vpop.f32.mrf.mxu0
  %v617 = vadd.f32 0.0, %v616
  %v618 = vpop.f32.mrf.mxu0
  %v619 = vpop.f32.mrf.mxu0
  %v620 = vadd.f32 0.0, %v619
  %v621 = vpop.f32.mrf.mxu0
  %622 = vmatprep.mubr.bf16.mxu0 0
  %623 = vmatmul.mubr.bf16.gmra.mxu0 %v351
  %v624 = vpop.f32.mrf.mxu0
  %v625 = vadd.f32 0.0, %v624
  %v626 = vpop.f32.mrf.mxu0
  %v627 = vpop.f32.mrf.mxu0
  %v628 = vadd.f32 0.0, %v627
  %v629 = vpop.f32.mrf.mxu0
  %630 = vmatprep.mubr.bf16.mxu0 0
  %631 = vmatmul.mubr.bf16.gmra.mxu0 %v354
  %v632 = vpop.f32.mrf.mxu0
  %v633 = vadd.f32 0.0, %v632
  %v634 = vpop.f32.mrf.mxu0
  %v635 = vpop.f32.mrf.mxu0
  %v636 = vadd.f32 0.0, %v635
  %v637 = vpop.f32.mrf.mxu0
  %638 = vmatprep.mubr.bf16.mxu0 0
  %639 = vmatmul.mubr.bf16.gmra.mxu0 %v357
  %v640 = vpop.f32.mrf.mxu0
  %v641 = vadd.f32 0.0, %v640
  %v642 = vpop.f32.mrf.mxu0
  %v643 = vpop.f32.mrf.mxu0
  %v644 = vadd.f32 0.0, %v643
  %v645 = vpop.f32.mrf.mxu0
  %646 = vmatprep.mubr.bf16.mxu0 0
  %647 = vmatmul.mubr.bf16.gmra.mxu0 %v360
  %v648 = vpop.f32.mrf.mxu0
  %v649 = vadd.f32 0.0, %v648
  %v650 = vpop.f32.mrf.mxu0
  %v651 = vpop.f32.mrf.mxu0
  %v652 = vadd.f32 0.0, %v651
  %v653 = vpop.f32.mrf.mxu0
  %654 = vdwg.mxu0
  %v655 = vmax.f32 %v401, 0.0
  %v656 = vmax.f32 %v404, 0.0
  %v657 = vmax.f32 %v409, 0.0
  %v658 = vmax.f32 %v412, 0.0
  %v659 = vmax.f32 %v417, 0.0
  %v660 = vmax.f32 %v420, 0.0
  %v661 = vmax.f32 %v425, 0.0
  %v662 = vmax.f32 %v428, 0.0
  %v663 = vmax.f32 %v433, 0.0
  %v664 = vmax.f32 %v436, 0.0
  %v665 = vmax.f32 %v441, 0.0
  %v666 = vmax.f32 %v444, 0.0
  %v667 = vmax.f32 %v449, 0.0
  %v668 = vmax.f32 %v452, 0.0
  %v669 = vmax.f32 %v457, 0.0
  %v670 = vmax.f32 %v460, 0.0
  %v671 = vmax.f32 %v465, 0.0
  %v672 = vmax.f32 %v468, 0.0
  %v673 = vmax.f32 %v473, 0.0
  %v674 = vmax.f32 %v476, 0.0
  %v675 = vmax.f32 %v481, 0.0
  %v676 = vmax.f32 %v484, 0.0
  %v677 = vmax.f32 %v489, 0.0
  %v678 = vmax.f32 %v492, 0.0
  %v679 = vmax.f32 %v497, 0.0
  %v680 = vmax.f32 %v500, 0.0
  %v681 = vmax.f32 %v505, 0.0
  %v682 = vmax.f32 %v508, 0.0
  %v683 = vmax.f32 %v513, 0.0
  %v684 = vmax.f32 %v516, 0.0
  %v685 = vmax.f32 %v521, 0.0
  %v686 = vmax.f32 %v524, 0.0
  %v687 = vmax.f32 %v529, 0.0
  %v688 = vmax.f32 %v532, 0.0
  %v689 = vmax.f32 %v537, 0.0
  %v690 = vmax.f32 %v540, 0.0
  %v691 = vmax.f32 %v545, 0.0
  %v692 = vmax.f32 %v548, 0.0
  %v693 = vmax.f32 %v553, 0.0
  %v694 = vmax.f32 %v556, 0.0
  %v695 = vmax.f32 %v561, 0.0
  %v696 = vmax.f32 %v564, 0.0
  %v697 = vmax.f32 %v569, 0.0
  %v698 = vmax.f32 %v572, 0.0
  %v699 = vmax.f32 %v577, 0.0
  %v700 = vmax.f32 %v580, 0.0
  %v701 = vmax.f32 %v585, 0.0
  %v702 = vmax.f32 %v588, 0.0
  %v703 = vmax.f32 %v593, 0.0
  %v704 = vmax.f32 %v596, 0.0
  %v705 = vmax.f32 %v601, 0.0
  %v706 = vmax.f32 %v604, 0.0
  %v707 = vmax.f32 %v609, 0.0
  %v708 = vmax.f32 %v612, 0.0
  %v709 = vmax.f32 %v617, 0.0
  %v710 = vmax.f32 %v620, 0.0
  %v711 = vmax.f32 %v625, 0.0
  %v712 = vmax.f32 %v628, 0.0
  %v713 = vmax.f32 %v633, 0.0
  %v714 = vmax.f32 %v636, 0.0
  %v715 = vmax.f32 %v641, 0.0
  %v716 = vmax.f32 %v644, 0.0
  %v717 = vmax.f32 %v649, 0.0
  %v718 = vmax.f32 %v652, 0.0
  %s719 = scalar_lea.vmem [#allocation2], 24
  %vm720 = vcmask 64512
  %721 = vst.msk [vmem:[%s719 + $0x1] sm:$0xff] %vm720, %v655
  %722 = vst.msk [vmem:[%s719 + $0x9] sm:$0xff] %vm720, %v656
  %723 = vst.msk [vmem:[%s719 + $0x19] sm:$0xff] %vm720, %v657
  %724 = vst.msk [vmem:[%s719 + $0x21] sm:$0xff] %vm720, %v658
  %725 = vst.msk [vmem:[%s719 + $0x31] sm:$0xff] %vm720, %v659
  %726 = vst.msk [vmem:[%s719 + $0x39] sm:$0xff] %vm720, %v660
  %727 = vst.msk [vmem:[%s719 + $0x49] sm:$0xff] %vm720, %v661
  %728 = vst.msk [vmem:[%s719 + $0x51] sm:$0xff] %vm720, %v662
  %729 = vst.msk [vmem:[%s719 + $0x61] sm:$0xff] %vm720, %v663
  %730 = vst.msk [vmem:[%s719 + $0x69] sm:$0xff] %vm720, %v664
  %731 = vst.msk [vmem:[%s719 + $0x79] sm:$0xff] %vm720, %v665
  %732 = vst.msk [vmem:[%s719 + $0x81] sm:$0xff] %vm720, %v666
  %733 = vst.msk [vmem:[%s719 + $0x91] sm:$0xff] %vm720, %v667
  %734 = vst.msk [vmem:[%s719 + $0x99] sm:$0xff] %vm720, %v668
  %735 = vst.msk [vmem:[%s719 + $0xa9] sm:$0xff] %vm720, %v669
  %736 = vst.msk [vmem:[%s719 + $0xb1] sm:$0xff] %vm720, %v670
  %737 = vst.msk [vmem:[%s719 + $0xc1] sm:$0xff] %vm720, %v671
  %738 = vst.msk [vmem:[%s719 + $0xc9] sm:$0xff] %vm720, %v672
  %739 = vst.msk [vmem:[%s719 + $0xd9] sm:$0xff] %vm720, %v673
  %740 = vst.msk [vmem:[%s719 + $0xe1] sm:$0xff] %vm720, %v674
  %741 = vst.msk [vmem:[%s719 + $0xf1] sm:$0xff] %vm720, %v675
  %742 = vst.msk [vmem:[%s719 + $0xf9] sm:$0xff] %vm720, %v676
  %743 = vst.msk [vmem:[%s719 + $0x109] sm:$0xff] %vm720, %v677
  %744 = vst.msk [vmem:[%s719 + $0x111] sm:$0xff] %vm720, %v678
  %745 = vst.msk [vmem:[%s719 + $0x121] sm:$0xff] %vm720, %v679
  %746 = vst.msk [vmem:[%s719 + $0x129] sm:$0xff] %vm720, %v680
  %747 = vst.msk [vmem:[%s719 + $0x139] sm:$0xff] %vm720, %v681
  %748 = vst.msk [vmem:[%s719 + $0x141] sm:$0xff] %vm720, %v682
  %749 = vst.msk [vmem:[%s719 + $0x151] sm:$0xff] %vm720, %v683
  %750 = vst.msk [vmem:[%s719 + $0x159] sm:$0xff] %vm720, %v684
  %751 = vst.msk [vmem:[%s719 + $0x169] sm:$0xff] %vm720, %v685
  %752 = vst.msk [vmem:[%s719 + $0x171] sm:$0xff] %vm720, %v686
  %753 = vst.msk [vmem:[%s719 + $0x1b1] sm:$0xff] %vm720, %v687
  %754 = vst.msk [vmem:[%s719 + $0x1b9] sm:$0xff] %vm720, %v688
  %755 = vst.msk [vmem:[%s719 + $0x1c9] sm:$0xff] %vm720, %v689
  %756 = vst.msk [vmem:[%s719 + $0x1d1] sm:$0xff] %vm720, %v690
  %757 = vst.msk [vmem:[%s719 + $0x1e1] sm:$0xff] %vm720, %v691
  %758 = vst.msk [vmem:[%s719 + $0x1e9] sm:$0xff] %vm720, %v692
  %759 = vst.msk [vmem:[%s719 + $0x1f9] sm:$0xff] %vm720, %v693
  %760 = vst.msk [vmem:[%s719 + $0x201] sm:$0xff] %vm720, %v694
  %761 = vst.msk [vmem:[%s719 + $0x211] sm:$0xff] %vm720, %v695
  %762 = vst.msk [vmem:[%s719 + $0x219] sm:$0xff] %vm720, %v696
  %763 = vst.msk [vmem:[%s719 + $0x229] sm:$0xff] %vm720, %v697
  %764 = vst.msk [vmem:[%s719 + $0x231] sm:$0xff] %vm720, %v698
  %765 = vst.msk [vmem:[%s719 + $0x241] sm:$0xff] %vm720, %v699
  %766 = vst.msk [vmem:[%s719 + $0x249] sm:$0xff] %vm720, %v700
  %767 = vst.msk [vmem:[%s719 + $0x259] sm:$0xff] %vm720, %v701
  %768 = vst.msk [vmem:[%s719 + $0x261] sm:$0xff] %vm720, %v702
  %769 = vst.msk [vmem:[%s719 + $0x271] sm:$0xff] %vm720, %v703
  %770 = vst.msk [vmem:[%s719 + $0x279] sm:$0xff] %vm720, %v704
  %771 = vst.msk [vmem:[%s719 + $0x289] sm:$0xff] %vm720, %v705
  %772 = vst.msk [vmem:[%s719 + $0x291] sm:$0xff] %vm720, %v706
  %773 = vst.msk [vmem:[%s719 + $0x2a1] sm:$0xff] %vm720, %v707
  %774 = vst.msk [vmem:[%s719 + $0x2a9] sm:$0xff] %vm720, %v708
  %775 = vst.msk [vmem:[%s719 + $0x2b9] sm:$0xff] %vm720, %v709
  %776 = vst.msk [vmem:[%s719 + $0x2c1] sm:$0xff] %vm720, %v710
  %777 = vst.msk [vmem:[%s719 + $0x2d1] sm:$0xff] %vm720, %v711
  %778 = vst.msk [vmem:[%s719 + $0x2d9] sm:$0xff] %vm720, %v712
  %779 = vst.msk [vmem:[%s719 + $0x2e9] sm:$0xff] %vm720, %v713
  %780 = vst.msk [vmem:[%s719 + $0x2f1] sm:$0xff] %vm720, %v714
  %781 = vst.msk [vmem:[%s719 + $0x301] sm:$0xff] %vm720, %v715
  %782 = vst.msk [vmem:[%s719 + $0x309] sm:$0xff] %vm720, %v716
  %783 = vst.msk [vmem:[%s719 + $0x319] sm:$0xff] %vm720, %v717
  %784 = vst.msk [vmem:[%s719 + $0x321] sm:$0xff] %vm720, %v718
  %785 = vst.msk [vmem:[#allocation2] sm:$0xff] %vm720, 0.0
  %786 = vst.msk [vmem:[#allocation2 + $0x8] sm:$0xff] %vm720, 0.0
  %vm787 = vcmask 58368
  %788 = vst.msk [vmem:[#allocation2 + $0x10] sm:$0x3] %vm787, 0.0
  %789 = vst.msk [vmem:[#allocation2 + $0x1b0] sm:$0xff] %vm720, 0.0
  %790 = vst.msk [vmem:[#allocation2 + $0x1b8] sm:$0xff] %vm720, 0.0
  %791 = vst.msk [vmem:[#allocation2 + $0x1c0] sm:$0x3] %vm787, 0.0
  %s792 = scalar_lea.vmem [#allocation2], 408
  %793 = vst.msk [vmem:[%s792] sm:$0xff] %vm720, 0.0
  %794 = vst.msk [vmem:[%s792 + $0x8] sm:$0xff] %vm720, 0.0
  %795 = vst.msk [vmem:[%s792 + $0x10] sm:$0x3] %vm787, 0.0
  %796 = vst.msk [vmem:[%s792 + $0x1b0] sm:$0xff] %vm720, 0.0
  %797 = vst.msk [vmem:[%s792 + $0x1b8] sm:$0xff] %vm720, 0.0
  %798 = vst.msk [vmem:[%s792 + $0x1c0] sm:$0x3] %vm787, 0.0
  %vm799 = vcmask 57344
  %800 = vst.msk [vmem:[#allocation2] sm:$0x1] %vm799, 0.0
  %801 = vst.msk [vmem:[#allocation2 + $0x18] sm:$0x1] %vm799, 0.0
  %802 = vst.msk [vmem:[#allocation2 + $0x30] sm:$0x1] %vm799, 0.0
  %803 = vst.msk [vmem:[#allocation2 + $0x48] sm:$0x1] %vm799, 0.0
  %804 = vst.msk [vmem:[#allocation2 + $0x60] sm:$0x1] %vm799, 0.0
  %805 = vst.msk [vmem:[#allocation2 + $0x78] sm:$0x1] %vm799, 0.0
  %806 = vst.msk [vmem:[#allocation2 + $0x90] sm:$0x1] %vm799, 0.0
  %807 = vst.msk [vmem:[#allocation2 + $0xa8] sm:$0x1] %vm799, 0.0
  %808 = vst.msk [vmem:[#allocation2 + $0xc0] sm:$0x1] %vm799, 0.0
  %809 = vst.msk [vmem:[#allocation2 + $0xd8] sm:$0x1] %vm799, 0.0
  %810 = vst.msk [vmem:[#allocation2 + $0xf0] sm:$0x1] %vm799, 0.0
  %811 = vst.msk [vmem:[#allocation2 + $0x108] sm:$0x1] %vm799, 0.0
  %812 = vst.msk [vmem:[#allocation2 + $0x120] sm:$0x1] %vm799, 0.0
  %813 = vst.msk [vmem:[#allocation2 + $0x138] sm:$0x1] %vm799, 0.0
  %814 = vst.msk [vmem:[#allocation2 + $0x150] sm:$0x1] %vm799, 0.0
  %815 = vst.msk [vmem:[#allocation2 + $0x168] sm:$0x1] %vm799, 0.0
  %816 = vst.msk [vmem:[#allocation2 + $0x180] sm:$0x1] %vm799, 0.0
  %817 = vst.msk [vmem:[#allocation2 + $0x198] sm:$0x1] %vm799, 0.0
  %818 = vst.msk [vmem:[#allocation2 + $0x1b0] sm:$0x1] %vm799, 0.0
  %819 = vst.msk [vmem:[#allocation2 + $0x1c8] sm:$0x1] %vm799, 0.0
  %820 = vst.msk [vmem:[#allocation2 + $0x1e0] sm:$0x1] %vm799, 0.0
  %821 = vst.msk [vmem:[#allocation2 + $0x1f8] sm:$0x1] %vm799, 0.0
  %822 = vst.msk [vmem:[#allocation2 + $0x210] sm:$0x1] %vm799, 0.0
  %823 = vst.msk [vmem:[#allocation2 + $0x228] sm:$0x1] %vm799, 0.0
  %824 = vst.msk [vmem:[#allocation2 + $0x240] sm:$0x1] %vm799, 0.0
  %825 = vst.msk [vmem:[#allocation2 + $0x258] sm:$0x1] %vm799, 0.0
  %826 = vst.msk [vmem:[#allocation2 + $0x270] sm:$0x1] %vm799, 0.0
  %827 = vst.msk [vmem:[#allocation2 + $0x288] sm:$0x1] %vm799, 0.0
  %828 = vst.msk [vmem:[#allocation2 + $0x2a0] sm:$0x1] %vm799, 0.0
  %829 = vst.msk [vmem:[#allocation2 + $0x2b8] sm:$0x1] %vm799, 0.0
  %830 = vst.msk [vmem:[#allocation2 + $0x2d0] sm:$0x1] %vm799, 0.0
  %831 = vst.msk [vmem:[#allocation2 + $0x2e8] sm:$0x1] %vm799, 0.0
  %832 = vst.msk [vmem:[#allocation2 + $0x300] sm:$0x1] %vm799, 0.0
  %833 = vst.msk [vmem:[#allocation2 + $0x318] sm:$0x1] %vm799, 0.0
  %834 = vst.msk [vmem:[#allocation2 + $0x330] sm:$0x1] %vm799, 0.0
  %835 = vst.msk [vmem:[#allocation2 + $0x348] sm:$0x1] %vm799, 0.0
  %836 = vst.msk [vmem:[#allocation2 + $0x11] sm:$0x1] %vm799, 0.0
  %837 = vst.msk [vmem:[#allocation2 + $0x29] sm:$0x1] %vm799, 0.0
  %838 = vst.msk [vmem:[#allocation2 + $0x41] sm:$0x1] %vm799, 0.0
  %839 = vst.msk [vmem:[#allocation2 + $0x59] sm:$0x1] %vm799, 0.0
  %840 = vst.msk [vmem:[#allocation2 + $0x71] sm:$0x1] %vm799, 0.0
  %841 = vst.msk [vmem:[#allocation2 + $0x89] sm:$0x1] %vm799, 0.0
  %842 = vst.msk [vmem:[#allocation2 + $0xa1] sm:$0x1] %vm799, 0.0
  %843 = vst.msk [vmem:[#allocation2 + $0xb9] sm:$0x1] %vm799, 0.0
  %844 = vst.msk [vmem:[#allocation2 + $0xd1] sm:$0x1] %vm799, 0.0
  %845 = vst.msk [vmem:[#allocation2 + $0xe9] sm:$0x1] %vm799, 0.0
  %846 = vst.msk [vmem:[#allocation2 + $0x101] sm:$0x1] %vm799, 0.0
  %847 = vst.msk [vmem:[#allocation2 + $0x119] sm:$0x1] %vm799, 0.0
  %848 = vst.msk [vmem:[#allocation2 + $0x131] sm:$0x1] %vm799, 0.0
  %849 = vst.msk [vmem:[#allocation2 + $0x149] sm:$0x1] %vm799, 0.0
  %850 = vst.msk [vmem:[#allocation2 + $0x161] sm:$0x1] %vm799, 0.0
  %851 = vst.msk [vmem:[#allocation2 + $0x179] sm:$0x1] %vm799, 0.0
  %852 = vst.msk [vmem:[#allocation2 + $0x191] sm:$0x1] %vm799, 0.0
  %853 = vst.msk [vmem:[#allocation2 + $0x1a9] sm:$0x1] %vm799, 0.0
  %854 = vst.msk [vmem:[#allocation2 + $0x1c1] sm:$0x1] %vm799, 0.0
  %855 = vst.msk [vmem:[#allocation2 + $0x1d9] sm:$0x1] %vm799, 0.0
  %856 = vst.msk [vmem:[#allocation2 + $0x1f1] sm:$0x1] %vm799, 0.0
  %857 = vst.msk [vmem:[#allocation2 + $0x209] sm:$0x1] %vm799, 0.0
  %858 = vst.msk [vmem:[#allocation2 + $0x221] sm:$0x1] %vm799, 0.0
  %859 = vst.msk [vmem:[#allocation2 + $0x239] sm:$0x1] %vm799, 0.0
  %860 = vst.msk [vmem:[#allocation2 + $0x251] sm:$0x1] %vm799, 0.0
  %861 = vst.msk [vmem:[#allocation2 + $0x269] sm:$0x1] %vm799, 0.0
  %862 = vst.msk [vmem:[#allocation2 + $0x281] sm:$0x1] %vm799, 0.0
  %863 = vst.msk [vmem:[#allocation2 + $0x299] sm:$0x1] %vm799, 0.0
  %864 = vst.msk [vmem:[#allocation2 + $0x2b1] sm:$0x1] %vm799, 0.0
  %865 = vst.msk [vmem:[#allocation2 + $0x2c9] sm:$0x1] %vm799, 0.0
  %866 = vst.msk [vmem:[#allocation2 + $0x2e1] sm:$0x1] %vm799, 0.0
  %867 = vst.msk [vmem:[#allocation2 + $0x2f9] sm:$0x1] %vm799, 0.0
  %868 = vst.msk [vmem:[#allocation2 + $0x311] sm:$0x1] %vm799, 0.0
  %869 = vst.msk [vmem:[#allocation2 + $0x329] sm:$0x1] %vm799, 0.0
  %870 = vst.msk [vmem:[#allocation2 + $0x341] sm:$0x1] %vm799, 0.0
  %871 = vst.msk [vmem:[#allocation2 + $0x359] sm:$0x1] %vm799, 0.0
  %v872 = vld [vmem:[#allocation2] sm:$0xff]
  %v873 = vld [vmem:[#allocation2 + $0x8] sm:$0xff]
  %v874 = vld [vmem:[#allocation2 + $0x18] sm:$0xff]
  %v875 = vld [vmem:[#allocation2 + $0x20] sm:$0xff]
  %v876 = vld [vmem:[#allocation2 + $0x30] sm:$0xff]
  %v877 = vld [vmem:[#allocation2 + $0x38] sm:$0xff]
  %v878 = vld [vmem:[#allocation2 + $0x48] sm:$0xff]
  %v879 = vld [vmem:[#allocation2 + $0x50] sm:$0xff]
  %v880 = vld [vmem:[#allocation2 + $0x60] sm:$0xff]
  %v881 = vld [vmem:[#allocation2 + $0x68] sm:$0xff]
  %v882 = vld [vmem:[#allocation2 + $0x78] sm:$0xff]
  %v883 = vld [vmem:[#allocation2 + $0x80] sm:$0xff]
  %v884 = vld [vmem:[#allocation2 + $0x90] sm:$0xff]
  %v885 = vld [vmem:[#allocation2 + $0x98] sm:$0xff]
  %v886 = vld [vmem:[#allocation2 + $0xa8] sm:$0xff]
  %v887 = vld [vmem:[#allocation2 + $0xb0] sm:$0xff]
  %v888 = vld [vmem:[#allocation2 + $0xc0] sm:$0xff]
  %v889 = vld [vmem:[#allocation2 + $0xc8] sm:$0xff]
  %v890 = vld [vmem:[#allocation2 + $0xd8] sm:$0xff]
  %v891 = vld [vmem:[#allocation2 + $0xe0] sm:$0xff]
  %v892 = vld [vmem:[#allocation2 + $0xf0] sm:$0xff]
  %v893 = vld [vmem:[#allocation2 + $0xf8] sm:$0xff]
  %v894 = vld [vmem:[#allocation2 + $0x108] sm:$0xff]
  %v895 = vld [vmem:[#allocation2 + $0x110] sm:$0xff]
  %v896 = vld [vmem:[#allocation2 + $0x120] sm:$0xff]
  %v897 = vld [vmem:[#allocation2 + $0x128] sm:$0xff]
  %v898 = vld [vmem:[#allocation2 + $0x138] sm:$0xff]
  %v899 = vld [vmem:[#allocation2 + $0x140] sm:$0xff]
  %v900 = vld [vmem:[#allocation2 + $0x150] sm:$0xff]
  %v901 = vld [vmem:[#allocation2 + $0x158] sm:$0xff]
  %v902 = vld [vmem:[#allocation2 + $0x168] sm:$0xff]
  %v903 = vld [vmem:[#allocation2 + $0x170] sm:$0xff]
  %v904 = vld [vmem:[#allocation2 + $0x1b0] sm:$0xff]
  %v905 = vld [vmem:[#allocation2 + $0x1b8] sm:$0xff]
  %v906 = vld [vmem:[#allocation2 + $0x1c8] sm:$0xff]
  %v907 = vld [vmem:[#allocation2 + $0x1d0] sm:$0xff]
  %v908 = vld [vmem:[#allocation2 + $0x1e0] sm:$0xff]
  %v909 = vld [vmem:[#allocation2 + $0x1e8] sm:$0xff]
  %v910 = vld [vmem:[#allocation2 + $0x1f8] sm:$0xff]
  %v911 = vld [vmem:[#allocation2 + $0x200] sm:$0xff]
  %v912 = vld [vmem:[#allocation2 + $0x210] sm:$0xff]
  %v913 = vld [vmem:[#allocation2 + $0x218] sm:$0xff]
  %v914 = vld [vmem:[#allocation2 + $0x228] sm:$0xff]
  %v915 = vld [vmem:[#allocation2 + $0x230] sm:$0xff]
  %v916 = vld [vmem:[#allocation2 + $0x240] sm:$0xff]
  %v917 = vld [vmem:[#allocation2 + $0x248] sm:$0xff]
  %v918 = vld [vmem:[#allocation2 + $0x258] sm:$0xff]
  %v919 = vld [vmem:[#allocation2 + $0x260] sm:$0xff]
  %v920 = vld [vmem:[#allocation2 + $0x270] sm:$0xff]
  %v921 = vld [vmem:[#allocation2 + $0x278] sm:$0xff]
  %v922 = vld [vmem:[#allocation2 + $0x288] sm:$0xff]
  %v923 = vld [vmem:[#allocation2 + $0x290] sm:$0xff]
  %v924 = vld [vmem:[#allocation2 + $0x2a0] sm:$0xff]
  %v925 = vld [vmem:[#allocation2 + $0x2a8] sm:$0xff]
  %v926 = vld [vmem:[#allocation2 + $0x2b8] sm:$0xff]
  %v927 = vld [vmem:[#allocation2 + $0x2c0] sm:$0xff]
  %v928 = vld [vmem:[#allocation2 + $0x2d0] sm:$0xff]
  %v929 = vld [vmem:[#allocation2 + $0x2d8] sm:$0xff]
  %v930 = vld [vmem:[#allocation2 + $0x2e8] sm:$0xff]
  %v931 = vld [vmem:[#allocation2 + $0x2f0] sm:$0xff]
  %v932 = vld [vmem:[#allocation2 + $0x300] sm:$0xff]
  %v933 = vld [vmem:[#allocation2 + $0x308] sm:$0xff]
  %v934 = vld [vmem:[#allocation2 + $0x318] sm:$0xff]
  %v935 = vld [vmem:[#allocation2 + $0x320] sm:$0xff]
  %v936 = vpack.c.bf16 %v873, %v872
  %v937 = vpack.c.bf16 %v875, %v874
  %v938 = vpack.c.bf16 %v877, %v876
  %v939 = vpack.c.bf16 %v879, %v878
  %v940 = vpack.c.bf16 %v881, %v880
  %v941 = vpack.c.bf16 %v883, %v882
  %v942 = vpack.c.bf16 %v885, %v884
  %v943 = vpack.c.bf16 %v887, %v886
  %v944 = vpack.c.bf16 %v889, %v888
  %v945 = vpack.c.bf16 %v891, %v890
  %v946 = vpack.c.bf16 %v893, %v892
  %v947 = vpack.c.bf16 %v895, %v894
  %v948 = vpack.c.bf16 %v897, %v896
  %v949 = vpack.c.bf16 %v899, %v898
  %v950 = vpack.c.bf16 %v901, %v900
  %v951 = vpack.c.bf16 %v903, %v902
  %v952 = vpack.c.bf16 %v905, %v904
  %v953 = vpack.c.bf16 %v907, %v906
  %v954 = vpack.c.bf16 %v909, %v908
  %v955 = vpack.c.bf16 %v911, %v910
  %v956 = vpack.c.bf16 %v913, %v912
  %v957 = vpack.c.bf16 %v915, %v914
  %v958 = vpack.c.bf16 %v917, %v916
  %v959 = vpack.c.bf16 %v919, %v918
  %v960 = vpack.c.bf16 %v921, %v920
  %v961 = vpack.c.bf16 %v923, %v922
  %v962 = vpack.c.bf16 %v925, %v924
  %v963 = vpack.c.bf16 %v927, %v926
  %v964 = vpack.c.bf16 %v929, %v928
  %v965 = vpack.c.bf16 %v931, %v930
  %v966 = vpack.c.bf16 %v933, %v932
  %v967 = vpack.c.bf16 %v935, %v934
  %v968 = vld [vmem:[%s2] sm:$0xf]
  %v969 = vld [vmem:[#allocation2 + $0x1] sm:$0xff]
  %v970 = vld [vmem:[#allocation2 + $0x9] sm:$0xff]
  %v971 = vld [vmem:[#allocation2 + $0x19] sm:$0xff]
  %v972 = vld [vmem:[#allocation2 + $0x21] sm:$0xff]
  %v973 = vld [vmem:[#allocation2 + $0x31] sm:$0xff]
  %v974 = vld [vmem:[#allocation2 + $0x39] sm:$0xff]
  %v975 = vld [vmem:[#allocation2 + $0x49] sm:$0xff]
  %v976 = vld [vmem:[#allocation2 + $0x51] sm:$0xff]
  %v977 = vld [vmem:[#allocation2 + $0x61] sm:$0xff]
  %v978 = vld [vmem:[#allocation2 + $0x69] sm:$0xff]
  %v979 = vld [vmem:[#allocation2 + $0x79] sm:$0xff]
  %v980 = vld [vmem:[#allocation2 + $0x81] sm:$0xff]
  %v981 = vld [vmem:[#allocation2 + $0x91] sm:$0xff]
  %v982 = vld [vmem:[#allocation2 + $0x99] sm:$0xff]
  %v983 = vld [vmem:[#allocation2 + $0xa9] sm:$0xff]
  %v984 = vld [vmem:[#allocation2 + $0xb1] sm:$0xff]
  %v985 = vld [vmem:[#allocation2 + $0xc1] sm:$0xff]
  %v986 = vld [vmem:[#allocation2 + $0xc9] sm:$0xff]
  %v987 = vld [vmem:[#allocation2 + $0xd9] sm:$0xff]
  %v988 = vld [vmem:[#allocation2 + $0xe1] sm:$0xff]
  %v989 = vld [vmem:[#allocation2 + $0xf1] sm:$0xff]
  %v990 = vld [vmem:[#allocation2 + $0xf9] sm:$0xff]
  %v991 = vld [vmem:[#allocation2 + $0x109] sm:$0xff]
  %v992 = vld [vmem:[#allocation2 + $0x111] sm:$0xff]
  %v993 = vld [vmem:[#allocation2 + $0x121] sm:$0xff]
  %v994 = vld [vmem:[#allocation2 + $0x129] sm:$0xff]
  %v995 = vld [vmem:[#allocation2 + $0x139] sm:$0xff]
  %v996 = vld [vmem:[#allocation2 + $0x141] sm:$0xff]
  %v997 = vld [vmem:[#allocation2 + $0x151] sm:$0xff]
  %v998 = vld [vmem:[#allocation2 + $0x159] sm:$0xff]
  %v999 = vld [vmem:[#allocation2 + $0x169] sm:$0xff]
  %v1000 = vld [vmem:[#allocation2 + $0x171] sm:$0xff]
  %v1001 = vld [vmem:[#allocation2 + $0x1b1] sm:$0xff]
  %v1002 = vld [vmem:[#allocation2 + $0x1b9] sm:$0xff]
  %v1003 = vld [vmem:[#allocation2 + $0x1c9] sm:$0xff]
  %v1004 = vld [vmem:[#allocation2 + $0x1d1] sm:$0xff]
  %v1005 = vld [vmem:[#allocation2 + $0x1e1] sm:$0xff]
  %v1006 = vld [vmem:[#allocation2 + $0x1e9] sm:$0xff]
  %v1007 = vld [vmem:[#allocation2 + $0x1f9] sm:$0xff]
  %v1008 = vld [vmem:[#allocation2 + $0x201] sm:$0xff]
  %v1009 = vld [vmem:[#allocation2 + $0x211] sm:$0xff]
  %v1010 = vld [vmem:[#allocation2 + $0x219] sm:$0xff]
  %v1011 = vld [vmem:[#allocation2 + $0x229] sm:$0xff]
  %v1012 = vld [vmem:[#allocation2 + $0x231] sm:$0xff]
  %v1013 = vld [vmem:[#allocation2 + $0x241] sm:$0xff]
  %v1014 = vld [vmem:[#allocation2 + $0x249] sm:$0xff]
  %v1015 = vld [vmem:[#allocation2 + $0x259] sm:$0xff]
  %v1016 = vld [vmem:[#allocation2 + $0x261] sm:$0xff]
  %v1017 = vld [vmem:[#allocation2 + $0x271] sm:$0xff]
  %v1018 = vld [vmem:[#allocation2 + $0x279] sm:$0xff]
  %v1019 = vld [vmem:[#allocation2 + $0x289] sm:$0xff]
  %v1020 = vld [vmem:[#allocation2 + $0x291] sm:$0xff]
  %v1021 = vld [vmem:[#allocation2 + $0x2a1] sm:$0xff]
  %v1022 = vld [vmem:[#allocation2 + $0x2a9] sm:$0xff]
  %v1023 = vld [vmem:[#allocation2 + $0x2b9] sm:$0xff]
  %v1024 = vld [vmem:[#allocation2 + $0x2c1] sm:$0xff]
  %v1025 = vld [vmem:[#allocation2 + $0x2d1] sm:$0xff]
  %v1026 = vld [vmem:[#allocation2 + $0x2d9] sm:$0xff]
  %v1027 = vld [vmem:[#allocation2 + $0x2e9] sm:$0xff]
  %v1028 = vld [vmem:[#allocation2 + $0x2f1] sm:$0xff]
  %v1029 = vld [vmem:[#allocation2 + $0x301] sm:$0xff]
  %v1030 = vld [vmem:[#allocation2 + $0x309] sm:$0xff]
  %v1031 = vld [vmem:[#allocation2 + $0x319] sm:$0xff]
  %v1032 = vld [vmem:[#allocation2 + $0x321] sm:$0xff]
  %v1033 = vpack.c.bf16 %v970, %v969
  %v1034 = vpack.c.bf16 %v972, %v971
  %v1035 = vpack.c.bf16 %v974, %v973
  %v1036 = vpack.c.bf16 %v976, %v975
  %v1037 = vpack.c.bf16 %v978, %v977
  %v1038 = vpack.c.bf16 %v980, %v979
  %v1039 = vpack.c.bf16 %v982, %v981
  %v1040 = vpack.c.bf16 %v984, %v983
  %v1041 = vpack.c.bf16 %v986, %v985
  %v1042 = vpack.c.bf16 %v988, %v987
  %v1043 = vpack.c.bf16 %v990, %v989
  %v1044 = vpack.c.bf16 %v992, %v991
  %v1045 = vpack.c.bf16 %v994, %v993
  %v1046 = vpack.c.bf16 %v996, %v995
  %v1047 = vpack.c.bf16 %v998, %v997
  %v1048 = vpack.c.bf16 %v1000, %v999
  %v1049 = vpack.c.bf16 %v1002, %v1001
  %v1050 = vpack.c.bf16 %v1004, %v1003
  %v1051 = vpack.c.bf16 %v1006, %v1005
  %v1052 = vpack.c.bf16 %v1008, %v1007
  %v1053 = vpack.c.bf16 %v1010, %v1009
  %v1054 = vpack.c.bf16 %v1012, %v1011
  %v1055 = vpack.c.bf16 %v1014, %v1013
  %v1056 = vpack.c.bf16 %v1016, %v1015
  %v1057 = vpack.c.bf16 %v1018, %v1017
  %v1058 = vpack.c.bf16 %v1020, %v1019
  %v1059 = vpack.c.bf16 %v1022, %v1021
  %v1060 = vpack.c.bf16 %v1024, %v1023
  %v1061 = vpack.c.bf16 %v1026, %v1025
  %v1062 = vpack.c.bf16 %v1028, %v1027
  %v1063 = vpack.c.bf16 %v1030, %v1029
  %v1064 = vpack.c.bf16 %v1032, %v1031
  %s1065 = scalar_lea.vmem %s2, 4
  %v1066 = vld [vmem:[%s1065] sm:$0xf]
  %v1068 = vsel %vm720, %v1033, 0
  %v1071 = vsel %vm720, %v1034, 0
  %v1074 = vsel %vm720, %v1035, 0
  %v1077 = vsel %vm720, %v1036, 0
  %v1080 = vsel %vm720, %v1037, 0
  %v1083 = vsel %vm720, %v1038, 0
  %v1086 = vsel %vm720, %v1039, 0
  %v1089 = vsel %vm720, %v1040, 0
  %v1092 = vsel %vm720, %v1041, 0
  %v1095 = vsel %vm720, %v1042, 0
  %v1098 = vsel %vm720, %v1043, 0
  %v1101 = vsel %vm720, %v1044, 0
  %v1104 = vsel %vm720, %v1045, 0
  %v1107 = vsel %vm720, %v1046, 0
  %v1110 = vsel %vm720, %v1047, 0
  %v1113 = vsel %vm720, %v1048, 0
  %v1116 = vsel %vm720, %v1049, 0
  %v1119 = vsel %vm720, %v1050, 0
  %v1122 = vsel %vm720, %v1051, 0
  %v1125 = vsel %vm720, %v1052, 0
  %v1128 = vsel %vm720, %v1053, 0
  %v1131 = vsel %vm720, %v1054, 0
  %v1134 = vsel %vm720, %v1055, 0
  %v1137 = vsel %vm720, %v1056, 0
  %v1140 = vsel %vm720, %v1057, 0
  %v1143 = vsel %vm720, %v1058, 0
  %v1146 = vsel %vm720, %v1059, 0
  %v1149 = vsel %vm720, %v1060, 0
  %v1152 = vsel %vm720, %v1061, 0
  %v1155 = vsel %vm720, %v1062, 0
  %v1158 = vsel %vm720, %v1063, 0
  %v1161 = vsel %vm720, %v1064, 0
  %vm1163 = vcmask 1043456
  %v1165 = vsel %vm1163, %v1066, 0
  %1167 = vmatprep.subr.bf16.mxu0 0
  %1168 = vmatpush1.bf16.msra.mxu0 0
  %1169 = vmatprep.subr.bf16.mxu0 0
  %1170 = vmatpush1.bf16.msra.mxu0 0
  %1171 = vmatprep.subr.bf16.mxu0 0
  %1172 = vmatpush1.bf16.msra.mxu0 0
  %1173 = vmatprep.subr.bf16.mxu0 0
  %1174 = vmatpush1.bf16.msra.mxu0 0
  %1175 = vmatprep.subr.bf16.mxu0 0
  %1176 = vmatpush1.bf16.msra.mxu0 0
  %1177 = vmatprep.subr.bf16.mxu0 0
  %1178 = vmatpush1.bf16.msra.mxu0 0
  %1179 = vmatprep.subr.bf16.mxu0 0
  %1180 = vmatpush1.bf16.msra.mxu0 0
  %1181 = vmatprep.subr.bf16.mxu0 0
  %1182 = vmatpush1.bf16.msra.mxu0 %v1165
  %1183 = vmatprep.subr.bf16.mxu0 0
  %1184 = vmatpush2.bf16.msra.mxu0 0
  %1185 = vmatprep.subr.bf16.mxu0 0
  %1186 = vmatpush2.bf16.msra.mxu0 0
  %1187 = vmatprep.subr.bf16.mxu0 0
  %1188 = vmatpush2.bf16.msra.mxu0 0
  %1189 = vmatprep.subr.bf16.mxu0 0
  %1190 = vmatpush2.bf16.msra.mxu0 0
  %1191 = vmatprep.subr.bf16.mxu0 0
  %1192 = vmatpush2.bf16.msra.mxu0 0
  %1193 = vmatprep.subr.bf16.mxu0 0
  %1194 = vmatpush2.bf16.msra.mxu0 0
  %1195 = vmatprep.subr.bf16.mxu0 0
  %1196 = vmatpush2.bf16.msra.mxu0 0
  %1197 = vmatprep.subr.bf16.mxu0 0
  %1198 = vmatpush2.bf16.msra.mxu0 0
  %1199 = vmatprep.mubr.bf16.mxu0 0
  %1200 = vmatmul.mubr.bf16.gmra.mxu0 %v1068
  %v1201 = vpop.f32.mrf.mxu0
  %v1202 = vadd.f32 0.0, %v1201
  %v1203 = vpop.f32.mrf.mxu0
  %v1204 = vpop.f32.mrf.mxu0
  %v1205 = vadd.f32 0.0, %v1204
  %v1206 = vpop.f32.mrf.mxu0
  %1207 = vmatprep.mubr.bf16.mxu0 0
  %1208 = vmatmul.mubr.bf16.gmra.mxu0 %v1071
  %v1209 = vpop.f32.mrf.mxu0
  %v1210 = vadd.f32 0.0, %v1209
  %v1211 = vpop.f32.mrf.mxu0
  %v1212 = vpop.f32.mrf.mxu0
  %v1213 = vadd.f32 0.0, %v1212
  %v1214 = vpop.f32.mrf.mxu0
  %1215 = vmatprep.mubr.bf16.mxu0 0
  %1216 = vmatmul.mubr.bf16.gmra.mxu0 %v1074
  %v1217 = vpop.f32.mrf.mxu0
  %v1218 = vadd.f32 0.0, %v1217
  %v1219 = vpop.f32.mrf.mxu0
  %v1220 = vpop.f32.mrf.mxu0
  %v1221 = vadd.f32 0.0, %v1220
  %v1222 = vpop.f32.mrf.mxu0
  %1223 = vmatprep.mubr.bf16.mxu0 0
  %1224 = vmatmul.mubr.bf16.gmra.mxu0 %v1077
  %v1225 = vpop.f32.mrf.mxu0
  %v1226 = vadd.f32 0.0, %v1225
  %v1227 = vpop.f32.mrf.mxu0
  %v1228 = vpop.f32.mrf.mxu0
  %v1229 = vadd.f32 0.0, %v1228
  %v1230 = vpop.f32.mrf.mxu0
  %1231 = vmatprep.mubr.bf16.mxu0 0
  %1232 = vmatmul.mubr.bf16.gmra.mxu0 %v1080
  %v1233 = vpop.f32.mrf.mxu0
  %v1234 = vadd.f32 0.0, %v1233
  %v1235 = vpop.f32.mrf.mxu0
  %v1236 = vpop.f32.mrf.mxu0
  %v1237 = vadd.f32 0.0, %v1236
  %v1238 = vpop.f32.mrf.mxu0
  %1239 = vmatprep.mubr.bf16.mxu0 0
  %1240 = vmatmul.mubr.bf16.gmra.mxu0 %v1083
  %v1241 = vpop.f32.mrf.mxu0
  %v1242 = vadd.f32 0.0, %v1241
  %v1243 = vpop.f32.mrf.mxu0
  %v1244 = vpop.f32.mrf.mxu0
  %v1245 = vadd.f32 0.0, %v1244
  %v1246 = vpop.f32.mrf.mxu0
  %1247 = vmatprep.mubr.bf16.mxu0 0
  %1248 = vmatmul.mubr.bf16.gmra.mxu0 %v1086
  %v1249 = vpop.f32.mrf.mxu0
  %v1250 = vadd.f32 0.0, %v1249
  %v1251 = vpop.f32.mrf.mxu0
  %v1252 = vpop.f32.mrf.mxu0
  %v1253 = vadd.f32 0.0, %v1252
  %v1254 = vpop.f32.mrf.mxu0
  %1255 = vmatprep.mubr.bf16.mxu0 0
  %1256 = vmatmul.mubr.bf16.gmra.mxu0 %v1089
  %v1257 = vpop.f32.mrf.mxu0
  %v1258 = vadd.f32 0.0, %v1257
  %v1259 = vpop.f32.mrf.mxu0
  %v1260 = vpop.f32.mrf.mxu0
  %v1261 = vadd.f32 0.0, %v1260
  %v1262 = vpop.f32.mrf.mxu0
  %1263 = vmatprep.mubr.bf16.mxu0 0
  %1264 = vmatmul.mubr.bf16.gmra.mxu0 %v1092
  %v1265 = vpop.f32.mrf.mxu0
  %v1266 = vadd.f32 0.0, %v1265
  %v1267 = vpop.f32.mrf.mxu0
  %v1268 = vpop.f32.mrf.mxu0
  %v1269 = vadd.f32 0.0, %v1268
  %v1270 = vpop.f32.mrf.mxu0
  %1271 = vmatprep.mubr.bf16.mxu0 0
  %1272 = vmatmul.mubr.bf16.gmra.mxu0 %v1095
  %v1273 = vpop.f32.mrf.mxu0
  %v1274 = vadd.f32 0.0, %v1273
  %v1275 = vpop.f32.mrf.mxu0
  %v1276 = vpop.f32.mrf.mxu0
  %v1277 = vadd.f32 0.0, %v1276
  %v1278 = vpop.f32.mrf.mxu0
  %1279 = vmatprep.mubr.bf16.mxu0 0
  %1280 = vmatmul.mubr.bf16.gmra.mxu0 %v1098
  %v1281 = vpop.f32.mrf.mxu0
  %v1282 = vadd.f32 0.0, %v1281
  %v1283 = vpop.f32.mrf.mxu0
  %v1284 = vpop.f32.mrf.mxu0
  %v1285 = vadd.f32 0.0, %v1284
  %v1286 = vpop.f32.mrf.mxu0
  %1287 = vmatprep.mubr.bf16.mxu0 0
  %1288 = vmatmul.mubr.bf16.gmra.mxu0 %v1101
  %v1289 = vpop.f32.mrf.mxu0
  %v1290 = vadd.f32 0.0, %v1289
  %v1291 = vpop.f32.mrf.mxu0
  %v1292 = vpop.f32.mrf.mxu0
  %v1293 = vadd.f32 0.0, %v1292
  %v1294 = vpop.f32.mrf.mxu0
  %1295 = vmatprep.mubr.bf16.mxu0 0
  %1296 = vmatmul.mubr.bf16.gmra.mxu0 %v1104
  %v1297 = vpop.f32.mrf.mxu0
  %v1298 = vadd.f32 0.0, %v1297
  %v1299 = vpop.f32.mrf.mxu0
  %v1300 = vpop.f32.mrf.mxu0
  %v1301 = vadd.f32 0.0, %v1300
  %v1302 = vpop.f32.mrf.mxu0
  %1303 = vmatprep.mubr.bf16.mxu0 0
  %1304 = vmatmul.mubr.bf16.gmra.mxu0 %v1107
  %v1305 = vpop.f32.mrf.mxu0
  %v1306 = vadd.f32 0.0, %v1305
  %v1307 = vpop.f32.mrf.mxu0
  %v1308 = vpop.f32.mrf.mxu0
  %v1309 = vadd.f32 0.0, %v1308
  %v1310 = vpop.f32.mrf.mxu0
  %1311 = vmatprep.mubr.bf16.mxu0 0
  %1312 = vmatmul.mubr.bf16.gmra.mxu0 %v1110
  %v1313 = vpop.f32.mrf.mxu0
  %v1314 = vadd.f32 0.0, %v1313
  %v1315 = vpop.f32.mrf.mxu0
  %v1316 = vpop.f32.mrf.mxu0
  %v1317 = vadd.f32 0.0, %v1316
  %v1318 = vpop.f32.mrf.mxu0
  %1319 = vmatprep.mubr.bf16.mxu0 0
  %1320 = vmatmul.mubr.bf16.gmra.mxu0 %v1113
  %v1321 = vpop.f32.mrf.mxu0
  %v1322 = vadd.f32 0.0, %v1321
  %v1323 = vpop.f32.mrf.mxu0
  %v1324 = vpop.f32.mrf.mxu0
  %v1325 = vadd.f32 0.0, %v1324
  %v1326 = vpop.f32.mrf.mxu0
  %1327 = vmatprep.mubr.bf16.mxu0 0
  %1328 = vmatmul.mubr.bf16.gmra.mxu0 %v1116
  %v1329 = vpop.f32.mrf.mxu0
  %v1330 = vadd.f32 0.0, %v1329
  %v1331 = vpop.f32.mrf.mxu0
  %v1332 = vpop.f32.mrf.mxu0
  %v1333 = vadd.f32 0.0, %v1332
  %v1334 = vpop.f32.mrf.mxu0
  %1335 = vmatprep.mubr.bf16.mxu0 0
  %1336 = vmatmul.mubr.bf16.gmra.mxu0 %v1119
  %v1337 = vpop.f32.mrf.mxu0
  %v1338 = vadd.f32 0.0, %v1337
  %v1339 = vpop.f32.mrf.mxu0
  %v1340 = vpop.f32.mrf.mxu0
  %v1341 = vadd.f32 0.0, %v1340
  %v1342 = vpop.f32.mrf.mxu0
  %1343 = vmatprep.mubr.bf16.mxu0 0
  %1344 = vmatmul.mubr.bf16.gmra.mxu0 %v1122
  %v1345 = vpop.f32.mrf.mxu0
  %v1346 = vadd.f32 0.0, %v1345
  %v1347 = vpop.f32.mrf.mxu0
  %v1348 = vpop.f32.mrf.mxu0
  %v1349 = vadd.f32 0.0, %v1348
  %v1350 = vpop.f32.mrf.mxu0
  %1351 = vmatprep.mubr.bf16.mxu0 0
  %1352 = vmatmul.mubr.bf16.gmra.mxu0 %v1125
  %v1353 = vpop.f32.mrf.mxu0
  %v1354 = vadd.f32 0.0, %v1353
  %v1355 = vpop.f32.mrf.mxu0
  %v1356 = vpop.f32.mrf.mxu0
  %v1357 = vadd.f32 0.0, %v1356
  %v1358 = vpop.f32.mrf.mxu0
  %1359 = vmatprep.mubr.bf16.mxu0 0
  %1360 = vmatmul.mubr.bf16.gmra.mxu0 %v1128
  %v1361 = vpop.f32.mrf.mxu0
  %v1362 = vadd.f32 0.0, %v1361
  %v1363 = vpop.f32.mrf.mxu0
  %v1364 = vpop.f32.mrf.mxu0
  %v1365 = vadd.f32 0.0, %v1364
  %v1366 = vpop.f32.mrf.mxu0
  %1367 = vmatprep.mubr.bf16.mxu0 0
  %1368 = vmatmul.mubr.bf16.gmra.mxu0 %v1131
  %v1369 = vpop.f32.mrf.mxu0
  %v1370 = vadd.f32 0.0, %v1369
  %v1371 = vpop.f32.mrf.mxu0
  %v1372 = vpop.f32.mrf.mxu0
  %v1373 = vadd.f32 0.0, %v1372
  %v1374 = vpop.f32.mrf.mxu0
  %1375 = vmatprep.mubr.bf16.mxu0 0
  %1376 = vmatmul.mubr.bf16.gmra.mxu0 %v1134
  %v1377 = vpop.f32.mrf.mxu0
  %v1378 = vadd.f32 0.0, %v1377
  %v1379 = vpop.f32.mrf.mxu0
  %v1380 = vpop.f32.mrf.mxu0
  %v1381 = vadd.f32 0.0, %v1380
  %v1382 = vpop.f32.mrf.mxu0
  %1383 = vmatprep.mubr.bf16.mxu0 0
  %1384 = vmatmul.mubr.bf16.gmra.mxu0 %v1137
  %v1385 = vpop.f32.mrf.mxu0
  %v1386 = vadd.f32 0.0, %v1385
  %v1387 = vpop.f32.mrf.mxu0
  %v1388 = vpop.f32.mrf.mxu0
  %v1389 = vadd.f32 0.0, %v1388
  %v1390 = vpop.f32.mrf.mxu0
  %1391 = vmatprep.mubr.bf16.mxu0 0
  %1392 = vmatmul.mubr.bf16.gmra.mxu0 %v1140
  %v1393 = vpop.f32.mrf.mxu0
  %v1394 = vadd.f32 0.0, %v1393
  %v1395 = vpop.f32.mrf.mxu0
  %v1396 = vpop.f32.mrf.mxu0
  %v1397 = vadd.f32 0.0, %v1396
  %v1398 = vpop.f32.mrf.mxu0
  %1399 = vmatprep.mubr.bf16.mxu0 0
  %1400 = vmatmul.mubr.bf16.gmra.mxu0 %v1143
  %v1401 = vpop.f32.mrf.mxu0
  %v1402 = vadd.f32 0.0, %v1401
  %v1403 = vpop.f32.mrf.mxu0
  %v1404 = vpop.f32.mrf.mxu0
  %v1405 = vadd.f32 0.0, %v1404
  %v1406 = vpop.f32.mrf.mxu0
  %1407 = vmatprep.mubr.bf16.mxu0 0
  %1408 = vmatmul.mubr.bf16.gmra.mxu0 %v1146
  %v1409 = vpop.f32.mrf.mxu0
  %v1410 = vadd.f32 0.0, %v1409
  %v1411 = vpop.f32.mrf.mxu0
  %v1412 = vpop.f32.mrf.mxu0
  %v1413 = vadd.f32 0.0, %v1412
  %v1414 = vpop.f32.mrf.mxu0
  %1415 = vmatprep.mubr.bf16.mxu0 0
  %1416 = vmatmul.mubr.bf16.gmra.mxu0 %v1149
  %v1417 = vpop.f32.mrf.mxu0
  %v1418 = vadd.f32 0.0, %v1417
  %v1419 = vpop.f32.mrf.mxu0
  %v1420 = vpop.f32.mrf.mxu0
  %v1421 = vadd.f32 0.0, %v1420
  %v1422 = vpop.f32.mrf.mxu0
  %1423 = vmatprep.mubr.bf16.mxu0 0
  %1424 = vmatmul.mubr.bf16.gmra.mxu0 %v1152
  %v1425 = vpop.f32.mrf.mxu0
  %v1426 = vadd.f32 0.0, %v1425
  %v1427 = vpop.f32.mrf.mxu0
  %v1428 = vpop.f32.mrf.mxu0
  %v1429 = vadd.f32 0.0, %v1428
  %v1430 = vpop.f32.mrf.mxu0
  %1431 = vmatprep.mubr.bf16.mxu0 0
  %1432 = vmatmul.mubr.bf16.gmra.mxu0 %v1155
  %v1433 = vpop.f32.mrf.mxu0
  %v1434 = vadd.f32 0.0, %v1433
  %v1435 = vpop.f32.mrf.mxu0
  %v1436 = vpop.f32.mrf.mxu0
  %v1437 = vadd.f32 0.0, %v1436
  %v1438 = vpop.f32.mrf.mxu0
  %1439 = vmatprep.mubr.bf16.mxu0 0
  %1440 = vmatmul.mubr.bf16.gmra.mxu0 %v1158
  %v1441 = vpop.f32.mrf.mxu0
  %v1442 = vadd.f32 0.0, %v1441
  %v1443 = vpop.f32.mrf.mxu0
  %v1444 = vpop.f32.mrf.mxu0
  %v1445 = vadd.f32 0.0, %v1444
  %v1446 = vpop.f32.mrf.mxu0
  %1447 = vmatprep.mubr.bf16.mxu0 0
  %1448 = vmatmul.mubr.bf16.gmra.mxu0 %v1161
  %v1449 = vpop.f32.mrf.mxu0
  %v1450 = vadd.f32 0.0, %v1449
  %v1451 = vpop.f32.mrf.mxu0
  %v1452 = vpop.f32.mrf.mxu0
  %v1453 = vadd.f32 0.0, %v1452
  %v1454 = vpop.f32.mrf.mxu0
  %1455 = vdwg.mxu0
  %v1457 = vsel %vm720, %v936, 0
  %v1460 = vsel %vm720, %v937, 0
  %v1463 = vsel %vm720, %v938, 0
  %v1466 = vsel %vm720, %v939, 0
  %v1469 = vsel %vm720, %v940, 0
  %v1472 = vsel %vm720, %v941, 0
  %v1475 = vsel %vm720, %v942, 0
  %v1478 = vsel %vm720, %v943, 0
  %v1481 = vsel %vm720, %v944, 0
  %v1484 = vsel %vm720, %v945, 0
  %v1487 = vsel %vm720, %v946, 0
  %v1490 = vsel %vm720, %v947, 0
  %v1493 = vsel %vm720, %v948, 0
  %v1496 = vsel %vm720, %v949, 0
  %v1499 = vsel %vm720, %v950, 0
  %v1502 = vsel %vm720, %v951, 0
  %v1505 = vsel %vm720, %v952, 0
  %v1508 = vsel %vm720, %v953, 0
  %v1511 = vsel %vm720, %v954, 0
  %v1514 = vsel %vm720, %v955, 0
  %v1517 = vsel %vm720, %v956, 0
  %v1520 = vsel %vm720, %v957, 0
  %v1523 = vsel %vm720, %v958, 0
  %v1526 = vsel %vm720, %v959, 0
  %v1529 = vsel %vm720, %v960, 0
  %v1532 = vsel %vm720, %v961, 0
  %v1535 = vsel %vm720, %v962, 0
  %v1538 = vsel %vm720, %v963, 0
  %v1541 = vsel %vm720, %v964, 0
  %v1544 = vsel %vm720, %v965, 0
  %v1547 = vsel %vm720, %v966, 0
  %v1550 = vsel %vm720, %v967, 0
  %v1553 = vsel %vm1163, %v968, 0
  %1555 = vmatprep.subr.bf16.mxu0 0
  %1556 = vmatpush1.bf16.msra.mxu0 0
  %1557 = vmatprep.subr.bf16.mxu0 0
  %1558 = vmatpush1.bf16.msra.mxu0 0
  %1559 = vmatprep.subr.bf16.mxu0 0
  %1560 = vmatpush1.bf16.msra.mxu0 0
  %1561 = vmatprep.subr.bf16.mxu0 0
  %1562 = vmatpush1.bf16.msra.mxu0 0
  %1563 = vmatprep.subr.bf16.mxu0 0
  %1564 = vmatpush1.bf16.msra.mxu0 0
  %1565 = vmatprep.subr.bf16.mxu0 0
  %1566 = vmatpush1.bf16.msra.mxu0 0
  %1567 = vmatprep.subr.bf16.mxu0 0
  %1568 = vmatpush1.bf16.msra.mxu0 0
  %1569 = vmatprep.subr.bf16.mxu0 0
  %1570 = vmatpush1.bf16.msra.mxu0 %v1553
  %1571 = vmatprep.subr.bf16.mxu0 0
  %1572 = vmatpush2.bf16.msra.mxu0 0
  %1573 = vmatprep.subr.bf16.mxu0 0
  %1574 = vmatpush2.bf16.msra.mxu0 0
  %1575 = vmatprep.subr.bf16.mxu0 0
  %1576 = vmatpush2.bf16.msra.mxu0 0
  %1577 = vmatprep.subr.bf16.mxu0 0
  %1578 = vmatpush2.bf16.msra.mxu0 0
  %1579 = vmatprep.subr.bf16.mxu0 0
  %1580 = vmatpush2.bf16.msra.mxu0 0
  %1581 = vmatprep.subr.bf16.mxu0 0
  %1582 = vmatpush2.bf16.msra.mxu0 0
  %1583 = vmatprep.subr.bf16.mxu0 0
  %1584 = vmatpush2.bf16.msra.mxu0 0
  %1585 = vmatprep.subr.bf16.mxu0 0
  %1586 = vmatpush2.bf16.msra.mxu0 0
  %1587 = vmatprep.mubr.bf16.mxu0 0
  %1588 = vmatmul.mubr.bf16.gmra.mxu0 %v1457
  %v1589 = vpop.f32.mrf.mxu0
  %v1590 = vadd.f32 %v1202, %v1589
  %v1591 = vpop.f32.mrf.mxu0
  %v1592 = vpop.f32.mrf.mxu0
  %v1593 = vadd.f32 %v1205, %v1592
  %v1594 = vpop.f32.mrf.mxu0
  %1595 = vmatprep.mubr.bf16.mxu0 0
  %1596 = vmatmul.mubr.bf16.gmra.mxu0 %v1460
  %v1597 = vpop.f32.mrf.mxu0
  %v1598 = vadd.f32 %v1210, %v1597
  %v1599 = vpop.f32.mrf.mxu0
  %v1600 = vpop.f32.mrf.mxu0
  %v1601 = vadd.f32 %v1213, %v1600
  %v1602 = vpop.f32.mrf.mxu0
  %1603 = vmatprep.mubr.bf16.mxu0 0
  %1604 = vmatmul.mubr.bf16.gmra.mxu0 %v1463
  %v1605 = vpop.f32.mrf.mxu0
  %v1606 = vadd.f32 %v1218, %v1605
  %v1607 = vpop.f32.mrf.mxu0
  %v1608 = vpop.f32.mrf.mxu0
  %v1609 = vadd.f32 %v1221, %v1608
  %v1610 = vpop.f32.mrf.mxu0
  %1611 = vmatprep.mubr.bf16.mxu0 0
  %1612 = vmatmul.mubr.bf16.gmra.mxu0 %v1466
  %v1613 = vpop.f32.mrf.mxu0
  %v1614 = vadd.f32 %v1226, %v1613
  %v1615 = vpop.f32.mrf.mxu0
  %v1616 = vpop.f32.mrf.mxu0
  %v1617 = vadd.f32 %v1229, %v1616
  %v1618 = vpop.f32.mrf.mxu0
  %1619 = vmatprep.mubr.bf16.mxu0 0
  %1620 = vmatmul.mubr.bf16.gmra.mxu0 %v1469
  %v1621 = vpop.f32.mrf.mxu0
  %v1622 = vadd.f32 %v1234, %v1621
  %v1623 = vpop.f32.mrf.mxu0
  %v1624 = vpop.f32.mrf.mxu0
  %v1625 = vadd.f32 %v1237, %v1624
  %v1626 = vpop.f32.mrf.mxu0
  %1627 = vmatprep.mubr.bf16.mxu0 0
  %1628 = vmatmul.mubr.bf16.gmra.mxu0 %v1472
  %v1629 = vpop.f32.mrf.mxu0
  %v1630 = vadd.f32 %v1242, %v1629
  %v1631 = vpop.f32.mrf.mxu0
  %v1632 = vpop.f32.mrf.mxu0
  %v1633 = vadd.f32 %v1245, %v1632
  %v1634 = vpop.f32.mrf.mxu0
  %1635 = vmatprep.mubr.bf16.mxu0 0
  %1636 = vmatmul.mubr.bf16.gmra.mxu0 %v1475
  %v1637 = vpop.f32.mrf.mxu0
  %v1638 = vadd.f32 %v1250, %v1637
  %v1639 = vpop.f32.mrf.mxu0
  %v1640 = vpop.f32.mrf.mxu0
  %v1641 = vadd.f32 %v1253, %v1640
  %v1642 = vpop.f32.mrf.mxu0
  %1643 = vmatprep.mubr.bf16.mxu0 0
  %1644 = vmatmul.mubr.bf16.gmra.mxu0 %v1478
  %v1645 = vpop.f32.mrf.mxu0
  %v1646 = vadd.f32 %v1258, %v1645
  %v1647 = vpop.f32.mrf.mxu0
  %v1648 = vpop.f32.mrf.mxu0
  %v1649 = vadd.f32 %v1261, %v1648
  %v1650 = vpop.f32.mrf.mxu0
  %1651 = vmatprep.mubr.bf16.mxu0 0
  %1652 = vmatmul.mubr.bf16.gmra.mxu0 %v1481
  %v1653 = vpop.f32.mrf.mxu0
  %v1654 = vadd.f32 %v1266, %v1653
  %v1655 = vpop.f32.mrf.mxu0
  %v1656 = vpop.f32.mrf.mxu0
  %v1657 = vadd.f32 %v1269, %v1656
  %v1658 = vpop.f32.mrf.mxu0
  %1659 = vmatprep.mubr.bf16.mxu0 0
  %1660 = vmatmul.mubr.bf16.gmra.mxu0 %v1484
  %v1661 = vpop.f32.mrf.mxu0
  %v1662 = vadd.f32 %v1274, %v1661
  %v1663 = vpop.f32.mrf.mxu0
  %v1664 = vpop.f32.mrf.mxu0
  %v1665 = vadd.f32 %v1277, %v1664
  %v1666 = vpop.f32.mrf.mxu0
  %1667 = vmatprep.mubr.bf16.mxu0 0
  %1668 = vmatmul.mubr.bf16.gmra.mxu0 %v1487
  %v1669 = vpop.f32.mrf.mxu0
  %v1670 = vadd.f32 %v1282, %v1669
  %v1671 = vpop.f32.mrf.mxu0
  %v1672 = vpop.f32.mrf.mxu0
  %v1673 = vadd.f32 %v1285, %v1672
  %v1674 = vpop.f32.mrf.mxu0
  %1675 = vmatprep.mubr.bf16.mxu0 0
  %1676 = vmatmul.mubr.bf16.gmra.mxu0 %v1490
  %v1677 = vpop.f32.mrf.mxu0
  %v1678 = vadd.f32 %v1290, %v1677
  %v1679 = vpop.f32.mrf.mxu0
  %v1680 = vpop.f32.mrf.mxu0
  %v1681 = vadd.f32 %v1293, %v1680
  %v1682 = vpop.f32.mrf.mxu0
  %1683 = vmatprep.mubr.bf16.mxu0 0
  %1684 = vmatmul.mubr.bf16.gmra.mxu0 %v1493
  %v1685 = vpop.f32.mrf.mxu0
  %v1686 = vadd.f32 %v1298, %v1685
  %v1687 = vpop.f32.mrf.mxu0
  %v1688 = vpop.f32.mrf.mxu0
  %v1689 = vadd.f32 %v1301, %v1688
  %v1690 = vpop.f32.mrf.mxu0
  %1691 = vmatprep.mubr.bf16.mxu0 0
  %1692 = vmatmul.mubr.bf16.gmra.mxu0 %v1496
  %v1693 = vpop.f32.mrf.mxu0
  %v1694 = vadd.f32 %v1306, %v1693
  %v1695 = vpop.f32.mrf.mxu0
  %v1696 = vpop.f32.mrf.mxu0
  %v1697 = vadd.f32 %v1309, %v1696
  %v1698 = vpop.f32.mrf.mxu0
  %1699 = vmatprep.mubr.bf16.mxu0 0
  %1700 = vmatmul.mubr.bf16.gmra.mxu0 %v1499
  %v1701 = vpop.f32.mrf.mxu0
  %v1702 = vadd.f32 %v1314, %v1701
  %v1703 = vpop.f32.mrf.mxu0
  %v1704 = vpop.f32.mrf.mxu0
  %v1705 = vadd.f32 %v1317, %v1704
  %v1706 = vpop.f32.mrf.mxu0
  %1707 = vmatprep.mubr.bf16.mxu0 0
  %1708 = vmatmul.mubr.bf16.gmra.mxu0 %v1502
  %v1709 = vpop.f32.mrf.mxu0
  %v1710 = vadd.f32 %v1322, %v1709
  %v1711 = vpop.f32.mrf.mxu0
  %v1712 = vpop.f32.mrf.mxu0
  %v1713 = vadd.f32 %v1325, %v1712
  %v1714 = vpop.f32.mrf.mxu0
  %1715 = vmatprep.mubr.bf16.mxu0 0
  %1716 = vmatmul.mubr.bf16.gmra.mxu0 %v1505
  %v1717 = vpop.f32.mrf.mxu0
  %v1718 = vadd.f32 %v1330, %v1717
  %v1719 = vpop.f32.mrf.mxu0
  %v1720 = vpop.f32.mrf.mxu0
  %v1721 = vadd.f32 %v1333, %v1720
  %v1722 = vpop.f32.mrf.mxu0
  %1723 = vmatprep.mubr.bf16.mxu0 0
  %1724 = vmatmul.mubr.bf16.gmra.mxu0 %v1508
  %v1725 = vpop.f32.mrf.mxu0
  %v1726 = vadd.f32 %v1338, %v1725
  %v1727 = vpop.f32.mrf.mxu0
  %v1728 = vpop.f32.mrf.mxu0
  %v1729 = vadd.f32 %v1341, %v1728
  %v1730 = vpop.f32.mrf.mxu0
  %1731 = vmatprep.mubr.bf16.mxu0 0
  %1732 = vmatmul.mubr.bf16.gmra.mxu0 %v1511
  %v1733 = vpop.f32.mrf.mxu0
  %v1734 = vadd.f32 %v1346, %v1733
  %v1735 = vpop.f32.mrf.mxu0
  %v1736 = vpop.f32.mrf.mxu0
  %v1737 = vadd.f32 %v1349, %v1736
  %v1738 = vpop.f32.mrf.mxu0
  %1739 = vmatprep.mubr.bf16.mxu0 0
  %1740 = vmatmul.mubr.bf16.gmra.mxu0 %v1514
  %v1741 = vpop.f32.mrf.mxu0
  %v1742 = vadd.f32 %v1354, %v1741
  %v1743 = vpop.f32.mrf.mxu0
  %v1744 = vpop.f32.mrf.mxu0
  %v1745 = vadd.f32 %v1357, %v1744
  %v1746 = vpop.f32.mrf.mxu0
  %1747 = vmatprep.mubr.bf16.mxu0 0
  %1748 = vmatmul.mubr.bf16.gmra.mxu0 %v1517
  %v1749 = vpop.f32.mrf.mxu0
  %v1750 = vadd.f32 %v1362, %v1749
  %v1751 = vpop.f32.mrf.mxu0
  %v1752 = vpop.f32.mrf.mxu0
  %v1753 = vadd.f32 %v1365, %v1752
  %v1754 = vpop.f32.mrf.mxu0
  %1755 = vmatprep.mubr.bf16.mxu0 0
  %1756 = vmatmul.mubr.bf16.gmra.mxu0 %v1520
  %v1757 = vpop.f32.mrf.mxu0
  %v1758 = vadd.f32 %v1370, %v1757
  %v1759 = vpop.f32.mrf.mxu0
  %v1760 = vpop.f32.mrf.mxu0
  %v1761 = vadd.f32 %v1373, %v1760
  %v1762 = vpop.f32.mrf.mxu0
  %1763 = vmatprep.mubr.bf16.mxu0 0
  %1764 = vmatmul.mubr.bf16.gmra.mxu0 %v1523
  %v1765 = vpop.f32.mrf.mxu0
  %v1766 = vadd.f32 %v1378, %v1765
  %v1767 = vpop.f32.mrf.mxu0
  %v1768 = vpop.f32.mrf.mxu0
  %v1769 = vadd.f32 %v1381, %v1768
  %v1770 = vpop.f32.mrf.mxu0
  %1771 = vmatprep.mubr.bf16.mxu0 0
  %1772 = vmatmul.mubr.bf16.gmra.mxu0 %v1526
  %v1773 = vpop.f32.mrf.mxu0
  %v1774 = vadd.f32 %v1386, %v1773
  %v1775 = vpop.f32.mrf.mxu0
  %v1776 = vpop.f32.mrf.mxu0
  %v1777 = vadd.f32 %v1389, %v1776
  %v1778 = vpop.f32.mrf.mxu0
  %1779 = vmatprep.mubr.bf16.mxu0 0
  %1780 = vmatmul.mubr.bf16.gmra.mxu0 %v1529
  %v1781 = vpop.f32.mrf.mxu0
  %v1782 = vadd.f32 %v1394, %v1781
  %v1783 = vpop.f32.mrf.mxu0
  %v1784 = vpop.f32.mrf.mxu0
  %v1785 = vadd.f32 %v1397, %v1784
  %v1786 = vpop.f32.mrf.mxu0
  %1787 = vmatprep.mubr.bf16.mxu0 0
  %1788 = vmatmul.mubr.bf16.gmra.mxu0 %v1532
  %v1789 = vpop.f32.mrf.mxu0
  %v1790 = vadd.f32 %v1402, %v1789
  %v1791 = vpop.f32.mrf.mxu0
  %v1792 = vpop.f32.mrf.mxu0
  %v1793 = vadd.f32 %v1405, %v1792
  %v1794 = vpop.f32.mrf.mxu0
  %1795 = vmatprep.mubr.bf16.mxu0 0
  %1796 = vmatmul.mubr.bf16.gmra.mxu0 %v1535
  %v1797 = vpop.f32.mrf.mxu0
  %v1798 = vadd.f32 %v1410, %v1797
  %v1799 = vpop.f32.mrf.mxu0
  %v1800 = vpop.f32.mrf.mxu0
  %v1801 = vadd.f32 %v1413, %v1800
  %v1802 = vpop.f32.mrf.mxu0
  %1803 = vmatprep.mubr.bf16.mxu0 0
  %1804 = vmatmul.mubr.bf16.gmra.mxu0 %v1538
  %v1805 = vpop.f32.mrf.mxu0
  %v1806 = vadd.f32 %v1418, %v1805
  %v1807 = vpop.f32.mrf.mxu0
  %v1808 = vpop.f32.mrf.mxu0
  %v1809 = vadd.f32 %v1421, %v1808
  %v1810 = vpop.f32.mrf.mxu0
  %1811 = vmatprep.mubr.bf16.mxu0 0
  %1812 = vmatmul.mubr.bf16.gmra.mxu0 %v1541
  %v1813 = vpop.f32.mrf.mxu0
  %v1814 = vadd.f32 %v1426, %v1813
  %v1815 = vpop.f32.mrf.mxu0
  %v1816 = vpop.f32.mrf.mxu0
  %v1817 = vadd.f32 %v1429, %v1816
  %v1818 = vpop.f32.mrf.mxu0
  %1819 = vmatprep.mubr.bf16.mxu0 0
  %1820 = vmatmul.mubr.bf16.gmra.mxu0 %v1544
  %v1821 = vpop.f32.mrf.mxu0
  %v1822 = vadd.f32 %v1434, %v1821
  %v1823 = vpop.f32.mrf.mxu0
  %v1824 = vpop.f32.mrf.mxu0
  %v1825 = vadd.f32 %v1437, %v1824
  %v1826 = vpop.f32.mrf.mxu0
  %1827 = vmatprep.mubr.bf16.mxu0 0
  %1828 = vmatmul.mubr.bf16.gmra.mxu0 %v1547
  %v1829 = vpop.f32.mrf.mxu0
  %v1830 = vadd.f32 %v1442, %v1829
  %v1831 = vpop.f32.mrf.mxu0
  %v1832 = vpop.f32.mrf.mxu0
  %v1833 = vadd.f32 %v1445, %v1832
  %v1834 = vpop.f32.mrf.mxu0
  %1835 = vmatprep.mubr.bf16.mxu0 0
  %1836 = vmatmul.mubr.bf16.gmra.mxu0 %v1550
  %v1837 = vpop.f32.mrf.mxu0
  %v1838 = vadd.f32 %v1450, %v1837
  %v1839 = vpop.f32.mrf.mxu0
  %v1840 = vpop.f32.mrf.mxu0
  %v1841 = vadd.f32 %v1453, %v1840
  %v1842 = vpop.f32.mrf.mxu0
  %1843 = vdwg.mxu0
  %v1844 = vld [vmem:[#allocation2 + $0x2] sm:$0xff]
  %v1845 = vld [vmem:[#allocation2 + $0xa] sm:$0xff]
  %v1846 = vld [vmem:[#allocation2 + $0x1a] sm:$0xff]
  %v1847 = vld [vmem:[#allocation2 + $0x22] sm:$0xff]
  %v1848 = vld [vmem:[#allocation2 + $0x32] sm:$0xff]
  %v1849 = vld [vmem:[#allocation2 + $0x3a] sm:$0xff]
  %v1850 = vld [vmem:[#allocation2 + $0x4a] sm:$0xff]
  %v1851 = vld [vmem:[#allocation2 + $0x52] sm:$0xff]
  %v1852 = vld [vmem:[#allocation2 + $0x62] sm:$0xff]
  %v1853 = vld [vmem:[#allocation2 + $0x6a] sm:$0xff]
  %v1854 = vld [vmem:[#allocation2 + $0x7a] sm:$0xff]
  %v1855 = vld [vmem:[#allocation2 + $0x82] sm:$0xff]
  %v1856 = vld [vmem:[#allocation2 + $0x92] sm:$0xff]
  %v1857 = vld [vmem:[#allocation2 + $0x9a] sm:$0xff]
  %v1858 = vld [vmem:[#allocation2 + $0xaa] sm:$0xff]
  %v1859 = vld [vmem:[#allocation2 + $0xb2] sm:$0xff]
  %v1860 = vld [vmem:[#allocation2 + $0xc2] sm:$0xff]
  %v1861 = vld [vmem:[#allocation2 + $0xca] sm:$0xff]
  %v1862 = vld [vmem:[#allocation2 + $0xda] sm:$0xff]
  %v1863 = vld [vmem:[#allocation2 + $0xe2] sm:$0xff]
  %v1864 = vld [vmem:[#allocation2 + $0xf2] sm:$0xff]
  %v1865 = vld [vmem:[#allocation2 + $0xfa] sm:$0xff]
  %v1866 = vld [vmem:[#allocation2 + $0x10a] sm:$0xff]
  %v1867 = vld [vmem:[#allocation2 + $0x112] sm:$0xff]
  %v1868 = vld [vmem:[#allocation2 + $0x122] sm:$0xff]
  %v1869 = vld [vmem:[#allocation2 + $0x12a] sm:$0xff]
  %v1870 = vld [vmem:[#allocation2 + $0x13a] sm:$0xff]
  %v1871 = vld [vmem:[#allocation2 + $0x142] sm:$0xff]
  %v1872 = vld [vmem:[#allocation2 + $0x152] sm:$0xff]
  %v1873 = vld [vmem:[#allocation2 + $0x15a] sm:$0xff]
  %v1874 = vld [vmem:[#allocation2 + $0x16a] sm:$0xff]
  %v1875 = vld [vmem:[#allocation2 + $0x172] sm:$0xff]
  %v1876 = vld [vmem:[#allocation2 + $0x1b2] sm:$0xff]
  %v1877 = vld [vmem:[#allocation2 + $0x1ba] sm:$0xff]
  %v1878 = vld [vmem:[#allocation2 + $0x1ca] sm:$0xff]
  %v1879 = vld [vmem:[#allocation2 + $0x1d2] sm:$0xff]
  %v1880 = vld [vmem:[#allocation2 + $0x1e2] sm:$0xff]
  %v1881 = vld [vmem:[#allocation2 + $0x1ea] sm:$0xff]
  %v1882 = vld [vmem:[#allocation2 + $0x1fa] sm:$0xff]
  %v1883 = vld [vmem:[#allocation2 + $0x202] sm:$0xff]
  %v1884 = vld [vmem:[#allocation2 + $0x212] sm:$0xff]
  %v1885 = vld [vmem:[#allocation2 + $0x21a] sm:$0xff]
  %v1886 = vld [vmem:[#allocation2 + $0x22a] sm:$0xff]
  %v1887 = vld [vmem:[#allocation2 + $0x232] sm:$0xff]
  %v1888 = vld [vmem:[#allocation2 + $0x242] sm:$0xff]
  %v1889 = vld [vmem:[#allocation2 + $0x24a] sm:$0xff]
  %v1890 = vld [vmem:[#allocation2 + $0x25a] sm:$0xff]
  %v1891 = vld [vmem:[#allocation2 + $0x262] sm:$0xff]
  %v1892 = vld [vmem:[#allocation2 + $0x272] sm:$0xff]
  %v1893 = vld [vmem:[#allocation2 + $0x27a] sm:$0xff]
  %v1894 = vld [vmem:[#allocation2 + $0x28a] sm:$0xff]
  %v1895 = vld [vmem:[#allocation2 + $0x292] sm:$0xff]
  %v1896 = vld [vmem:[#allocation2 + $0x2a2] sm:$0xff]
  %v1897 = vld [vmem:[#allocation2 + $0x2aa] sm:$0xff]
  %v1898 = vld [vmem:[#allocation2 + $0x2ba] sm:$0xff]
  %v1899 = vld [vmem:[#allocation2 + $0x2c2] sm:$0xff]
  %v1900 = vld [vmem:[#allocation2 + $0x2d2] sm:$0xff]
  %v1901 = vld [vmem:[#allocation2 + $0x2da] sm:$0xff]
  %v1902 = vld [vmem:[#allocation2 + $0x2ea] sm:$0xff]
  %v1903 = vld [vmem:[#allocation2 + $0x2f2] sm:$0xff]
  %v1904 = vld [vmem:[#allocation2 + $0x302] sm:$0xff]
  %v1905 = vld [vmem:[#allocation2 + $0x30a] sm:$0xff]
  %v1906 = vld [vmem:[#allocation2 + $0x31a] sm:$0xff]
  %v1907 = vld [vmem:[#allocation2 + $0x322] sm:$0xff]
  %v1908 = vpack.c.bf16 %v1845, %v1844
  %v1909 = vpack.c.bf16 %v1847, %v1846
  %v1910 = vpack.c.bf16 %v1849, %v1848
  %v1911 = vpack.c.bf16 %v1851, %v1850
  %v1912 = vpack.c.bf16 %v1853, %v1852
  %v1913 = vpack.c.bf16 %v1855, %v1854
  %v1914 = vpack.c.bf16 %v1857, %v1856
  %v1915 = vpack.c.bf16 %v1859, %v1858
  %v1916 = vpack.c.bf16 %v1861, %v1860
  %v1917 = vpack.c.bf16 %v1863, %v1862
  %v1918 = vpack.c.bf16 %v1865, %v1864
  %v1919 = vpack.c.bf16 %v1867, %v1866
  %v1920 = vpack.c.bf16 %v1869, %v1868
  %v1921 = vpack.c.bf16 %v1871, %v1870
  %v1922 = vpack.c.bf16 %v1873, %v1872
  %v1923 = vpack.c.bf16 %v1875, %v1874
  %v1924 = vpack.c.bf16 %v1877, %v1876
  %v1925 = vpack.c.bf16 %v1879, %v1878
  %v1926 = vpack.c.bf16 %v1881, %v1880
  %v1927 = vpack.c.bf16 %v1883, %v1882
  %v1928 = vpack.c.bf16 %v1885, %v1884
  %v1929 = vpack.c.bf16 %v1887, %v1886
  %v1930 = vpack.c.bf16 %v1889, %v1888
  %v1931 = vpack.c.bf16 %v1891, %v1890
  %v1932 = vpack.c.bf16 %v1893, %v1892
  %v1933 = vpack.c.bf16 %v1895, %v1894
  %v1934 = vpack.c.bf16 %v1897, %v1896
  %v1935 = vpack.c.bf16 %v1899, %v1898
  %v1936 = vpack.c.bf16 %v1901, %v1900
  %v1937 = vpack.c.bf16 %v1903, %v1902
  %v1938 = vpack.c.bf16 %v1905, %v1904
  %v1939 = vpack.c.bf16 %v1907, %v1906
  %s1940 = scalar_lea.vmem %s2, 8
  %v1941 = vld [vmem:[%s1940] sm:$0xf]
  %v1943 = vsel %vm720, %v1908, 0
  %v1946 = vsel %vm720, %v1909, 0
  %v1949 = vsel %vm720, %v1910, 0
  %v1952 = vsel %vm720, %v1911, 0
  %v1955 = vsel %vm720, %v1912, 0
  %v1958 = vsel %vm720, %v1913, 0
  %v1961 = vsel %vm720, %v1914, 0
  %v1964 = vsel %vm720, %v1915, 0
  %v1967 = vsel %vm720, %v1916, 0
  %v1970 = vsel %vm720, %v1917, 0
  %v1973 = vsel %vm720, %v1918, 0
  %v1976 = vsel %vm720, %v1919, 0
  %v1979 = vsel %vm720, %v1920, 0
  %v1982 = vsel %vm720, %v1921, 0
  %v1985 = vsel %vm720, %v1922, 0
  %v1988 = vsel %vm720, %v1923, 0
  %v1991 = vsel %vm720, %v1924, 0
  %v1994 = vsel %vm720, %v1925, 0
  %v1997 = vsel %vm720, %v1926, 0
  %v2000 = vsel %vm720, %v1927, 0
  %v2003 = vsel %vm720, %v1928, 0
  %v2006 = vsel %vm720, %v1929, 0
  %v2009 = vsel %vm720, %v1930, 0
  %v2012 = vsel %vm720, %v1931, 0
  %v2015 = vsel %vm720, %v1932, 0
  %v2018 = vsel %vm720, %v1933, 0
  %v2021 = vsel %vm720, %v1934, 0
  %v2024 = vsel %vm720, %v1935, 0
  %v2027 = vsel %vm720, %v1936, 0
  %v2030 = vsel %vm720, %v1937, 0
  %v2033 = vsel %vm720, %v1938, 0
  %v2036 = vsel %vm720, %v1939, 0
  %v2039 = vsel %vm1163, %v1941, 0
  %2041 = vmatprep.subr.bf16.mxu0 0
  %2042 = vmatpush1.bf16.msra.mxu0 0
  %2043 = vmatprep.subr.bf16.mxu0 0
  %2044 = vmatpush1.bf16.msra.mxu0 0
  %2045 = vmatprep.subr.bf16.mxu0 0
  %2046 = vmatpush1.bf16.msra.mxu0 0
  %2047 = vmatprep.subr.bf16.mxu0 0
  %2048 = vmatpush1.bf16.msra.mxu0 0
  %2049 = vmatprep.subr.bf16.mxu0 0
  %2050 = vmatpush1.bf16.msra.mxu0 0
  %2051 = vmatprep.subr.bf16.mxu0 0
  %2052 = vmatpush1.bf16.msra.mxu0 0
  %2053 = vmatprep.subr.bf16.mxu0 0
  %2054 = vmatpush1.bf16.msra.mxu0 0
  %2055 = vmatprep.subr.bf16.mxu0 0
  %2056 = vmatpush1.bf16.msra.mxu0 %v2039
  %2057 = vmatprep.subr.bf16.mxu0 0
  %2058 = vmatpush2.bf16.msra.mxu0 0
  %2059 = vmatprep.subr.bf16.mxu0 0
  %2060 = vmatpush2.bf16.msra.mxu0 0
  %2061 = vmatprep.subr.bf16.mxu0 0
  %2062 = vmatpush2.bf16.msra.mxu0 0
  %2063 = vmatprep.subr.bf16.mxu0 0
  %2064 = vmatpush2.bf16.msra.mxu0 0
  %2065 = vmatprep.subr.bf16.mxu0 0
  %2066 = vmatpush2.bf16.msra.mxu0 0
  %2067 = vmatprep.subr.bf16.mxu0 0
  %2068 = vmatpush2.bf16.msra.mxu0 0
  %2069 = vmatprep.subr.bf16.mxu0 0
  %2070 = vmatpush2.bf16.msra.mxu0 0
  %2071 = vmatprep.subr.bf16.mxu0 0
  %2072 = vmatpush2.bf16.msra.mxu0 0
  %2073 = vmatprep.mubr.bf16.mxu0 0
  %2074 = vmatmul.mubr.bf16.gmra.mxu0 %v1943
  %v2075 = vpop.f32.mrf.mxu0
  %v2076 = vadd.f32 0.0, %v2075
  %v2077 = vpop.f32.mrf.mxu0
  %v2078 = vpop.f32.mrf.mxu0
  %v2079 = vadd.f32 0.0, %v2078
  %v2080 = vpop.f32.mrf.mxu0
  %2081 = vmatprep.mubr.bf16.mxu0 0
  %2082 = vmatmul.mubr.bf16.gmra.mxu0 %v1946
  %v2083 = vpop.f32.mrf.mxu0
  %v2084 = vadd.f32 0.0, %v2083
  %v2085 = vpop.f32.mrf.mxu0
  %v2086 = vpop.f32.mrf.mxu0
  %v2087 = vadd.f32 0.0, %v2086
  %v2088 = vpop.f32.mrf.mxu0
  %2089 = vmatprep.mubr.bf16.mxu0 0
  %2090 = vmatmul.mubr.bf16.gmra.mxu0 %v1949
  %v2091 = vpop.f32.mrf.mxu0
  %v2092 = vadd.f32 0.0, %v2091
  %v2093 = vpop.f32.mrf.mxu0
  %v2094 = vpop.f32.mrf.mxu0
  %v2095 = vadd.f32 0.0, %v2094
  %v2096 = vpop.f32.mrf.mxu0
  %2097 = vmatprep.mubr.bf16.mxu0 0
  %2098 = vmatmul.mubr.bf16.gmra.mxu0 %v1952
  %v2099 = vpop.f32.mrf.mxu0
  %v2100 = vadd.f32 0.0, %v2099
  %v2101 = vpop.f32.mrf.mxu0
  %v2102 = vpop.f32.mrf.mxu0
  %v2103 = vadd.f32 0.0, %v2102
  %v2104 = vpop.f32.mrf.mxu0
  %2105 = vmatprep.mubr.bf16.mxu0 0
  %2106 = vmatmul.mubr.bf16.gmra.mxu0 %v1955
  %v2107 = vpop.f32.mrf.mxu0
  %v2108 = vadd.f32 0.0, %v2107
  %v2109 = vpop.f32.mrf.mxu0
  %v2110 = vpop.f32.mrf.mxu0
  %v2111 = vadd.f32 0.0, %v2110
  %v2112 = vpop.f32.mrf.mxu0
  %2113 = vmatprep.mubr.bf16.mxu0 0
  %2114 = vmatmul.mubr.bf16.gmra.mxu0 %v1958
  %v2115 = vpop.f32.mrf.mxu0
  %v2116 = vadd.f32 0.0, %v2115
  %v2117 = vpop.f32.mrf.mxu0
  %v2118 = vpop.f32.mrf.mxu0
  %v2119 = vadd.f32 0.0, %v2118
  %v2120 = vpop.f32.mrf.mxu0
  %2121 = vmatprep.mubr.bf16.mxu0 0
  %2122 = vmatmul.mubr.bf16.gmra.mxu0 %v1961
  %v2123 = vpop.f32.mrf.mxu0
  %v2124 = vadd.f32 0.0, %v2123
  %v2125 = vpop.f32.mrf.mxu0
  %v2126 = vpop.f32.mrf.mxu0
  %v2127 = vadd.f32 0.0, %v2126
  %v2128 = vpop.f32.mrf.mxu0
  %2129 = vmatprep.mubr.bf16.mxu0 0
  %2130 = vmatmul.mubr.bf16.gmra.mxu0 %v1964
  %v2131 = vpop.f32.mrf.mxu0
  %v2132 = vadd.f32 0.0, %v2131
  %v2133 = vpop.f32.mrf.mxu0
  %v2134 = vpop.f32.mrf.mxu0
  %v2135 = vadd.f32 0.0, %v2134
  %v2136 = vpop.f32.mrf.mxu0
  %2137 = vmatprep.mubr.bf16.mxu0 0
  %2138 = vmatmul.mubr.bf16.gmra.mxu0 %v1967
  %v2139 = vpop.f32.mrf.mxu0
  %v2140 = vadd.f32 0.0, %v2139
  %v2141 = vpop.f32.mrf.mxu0
  %v2142 = vpop.f32.mrf.mxu0
  %v2143 = vadd.f32 0.0, %v2142
  %v2144 = vpop.f32.mrf.mxu0
  %2145 = vmatprep.mubr.bf16.mxu0 0
  %2146 = vmatmul.mubr.bf16.gmra.mxu0 %v1970
  %v2147 = vpop.f32.mrf.mxu0
  %v2148 = vadd.f32 0.0, %v2147
  %v2149 = vpop.f32.mrf.mxu0
  %v2150 = vpop.f32.mrf.mxu0
  %v2151 = vadd.f32 0.0, %v2150
  %v2152 = vpop.f32.mrf.mxu0
  %2153 = vmatprep.mubr.bf16.mxu0 0
  %2154 = vmatmul.mubr.bf16.gmra.mxu0 %v1973
  %v2155 = vpop.f32.mrf.mxu0
  %v2156 = vadd.f32 0.0, %v2155
  %v2157 = vpop.f32.mrf.mxu0
  %v2158 = vpop.f32.mrf.mxu0
  %v2159 = vadd.f32 0.0, %v2158
  %v2160 = vpop.f32.mrf.mxu0
  %2161 = vmatprep.mubr.bf16.mxu0 0
  %2162 = vmatmul.mubr.bf16.gmra.mxu0 %v1976
  %v2163 = vpop.f32.mrf.mxu0
  %v2164 = vadd.f32 0.0, %v2163
  %v2165 = vpop.f32.mrf.mxu0
  %v2166 = vpop.f32.mrf.mxu0
  %v2167 = vadd.f32 0.0, %v2166
  %v2168 = vpop.f32.mrf.mxu0
  %2169 = vmatprep.mubr.bf16.mxu0 0
  %2170 = vmatmul.mubr.bf16.gmra.mxu0 %v1979
  %v2171 = vpop.f32.mrf.mxu0
  %v2172 = vadd.f32 0.0, %v2171
  %v2173 = vpop.f32.mrf.mxu0
  %v2174 = vpop.f32.mrf.mxu0
  %v2175 = vadd.f32 0.0, %v2174
  %v2176 = vpop.f32.mrf.mxu0
  %2177 = vmatprep.mubr.bf16.mxu0 0
  %2178 = vmatmul.mubr.bf16.gmra.mxu0 %v1982
  %v2179 = vpop.f32.mrf.mxu0
  %v2180 = vadd.f32 0.0, %v2179
  %v2181 = vpop.f32.mrf.mxu0
  %v2182 = vpop.f32.mrf.mxu0
  %v2183 = vadd.f32 0.0, %v2182
  %v2184 = vpop.f32.mrf.mxu0
  %2185 = vmatprep.mubr.bf16.mxu0 0
  %2186 = vmatmul.mubr.bf16.gmra.mxu0 %v1985
  %v2187 = vpop.f32.mrf.mxu0
  %v2188 = vadd.f32 0.0, %v2187
  %v2189 = vpop.f32.mrf.mxu0
  %v2190 = vpop.f32.mrf.mxu0
  %v2191 = vadd.f32 0.0, %v2190
  %v2192 = vpop.f32.mrf.mxu0
  %2193 = vmatprep.mubr.bf16.mxu0 0
  %2194 = vmatmul.mubr.bf16.gmra.mxu0 %v1988
  %v2195 = vpop.f32.mrf.mxu0
  %v2196 = vadd.f32 0.0, %v2195
  %v2197 = vpop.f32.mrf.mxu0
  %v2198 = vpop.f32.mrf.mxu0
  %v2199 = vadd.f32 0.0, %v2198
  %v2200 = vpop.f32.mrf.mxu0
  %2201 = vmatprep.mubr.bf16.mxu0 0
  %2202 = vmatmul.mubr.bf16.gmra.mxu0 %v1991
  %v2203 = vpop.f32.mrf.mxu0
  %v2204 = vadd.f32 0.0, %v2203
  %v2205 = vpop.f32.mrf.mxu0
  %v2206 = vpop.f32.mrf.mxu0
  %v2207 = vadd.f32 0.0, %v2206
  %v2208 = vpop.f32.mrf.mxu0
  %2209 = vmatprep.mubr.bf16.mxu0 0
  %2210 = vmatmul.mubr.bf16.gmra.mxu0 %v1994
  %v2211 = vpop.f32.mrf.mxu0
  %v2212 = vadd.f32 0.0, %v2211
  %v2213 = vpop.f32.mrf.mxu0
  %v2214 = vpop.f32.mrf.mxu0
  %v2215 = vadd.f32 0.0, %v2214
  %v2216 = vpop.f32.mrf.mxu0
  %2217 = vmatprep.mubr.bf16.mxu0 0
  %2218 = vmatmul.mubr.bf16.gmra.mxu0 %v1997
  %v2219 = vpop.f32.mrf.mxu0
  %v2220 = vadd.f32 0.0, %v2219
  %v2221 = vpop.f32.mrf.mxu0
  %v2222 = vpop.f32.mrf.mxu0
  %v2223 = vadd.f32 0.0, %v2222
  %v2224 = vpop.f32.mrf.mxu0
  %2225 = vmatprep.mubr.bf16.mxu0 0
  %2226 = vmatmul.mubr.bf16.gmra.mxu0 %v2000
  %v2227 = vpop.f32.mrf.mxu0
  %v2228 = vadd.f32 0.0, %v2227
  %v2229 = vpop.f32.mrf.mxu0
  %v2230 = vpop.f32.mrf.mxu0
  %v2231 = vadd.f32 0.0, %v2230
  %v2232 = vpop.f32.mrf.mxu0
  %2233 = vmatprep.mubr.bf16.mxu0 0
  %2234 = vmatmul.mubr.bf16.gmra.mxu0 %v2003
  %v2235 = vpop.f32.mrf.mxu0
  %v2236 = vadd.f32 0.0, %v2235
  %v2237 = vpop.f32.mrf.mxu0
  %v2238 = vpop.f32.mrf.mxu0
  %v2239 = vadd.f32 0.0, %v2238
  %v2240 = vpop.f32.mrf.mxu0
  %2241 = vmatprep.mubr.bf16.mxu0 0
  %2242 = vmatmul.mubr.bf16.gmra.mxu0 %v2006
  %v2243 = vpop.f32.mrf.mxu0
  %v2244 = vadd.f32 0.0, %v2243
  %v2245 = vpop.f32.mrf.mxu0
  %v2246 = vpop.f32.mrf.mxu0
  %v2247 = vadd.f32 0.0, %v2246
  %v2248 = vpop.f32.mrf.mxu0
  %2249 = vmatprep.mubr.bf16.mxu0 0
  %2250 = vmatmul.mubr.bf16.gmra.mxu0 %v2009
  %v2251 = vpop.f32.mrf.mxu0
  %v2252 = vadd.f32 0.0, %v2251
  %v2253 = vpop.f32.mrf.mxu0
  %v2254 = vpop.f32.mrf.mxu0
  %v2255 = vadd.f32 0.0, %v2254
  %v2256 = vpop.f32.mrf.mxu0
  %2257 = vmatprep.mubr.bf16.mxu0 0
  %2258 = vmatmul.mubr.bf16.gmra.mxu0 %v2012
  %v2259 = vpop.f32.mrf.mxu0
  %v2260 = vadd.f32 0.0, %v2259
  %v2261 = vpop.f32.mrf.mxu0
  %v2262 = vpop.f32.mrf.mxu0
  %v2263 = vadd.f32 0.0, %v2262
  %v2264 = vpop.f32.mrf.mxu0
  %2265 = vmatprep.mubr.bf16.mxu0 0
  %2266 = vmatmul.mubr.bf16.gmra.mxu0 %v2015
  %v2267 = vpop.f32.mrf.mxu0
  %v2268 = vadd.f32 0.0, %v2267
  %v2269 = vpop.f32.mrf.mxu0
  %v2270 = vpop.f32.mrf.mxu0
  %v2271 = vadd.f32 0.0, %v2270
  %v2272 = vpop.f32.mrf.mxu0
  %2273 = vmatprep.mubr.bf16.mxu0 0
  %2274 = vmatmul.mubr.bf16.gmra.mxu0 %v2018
  %v2275 = vpop.f32.mrf.mxu0
  %v2276 = vadd.f32 0.0, %v2275
  %v2277 = vpop.f32.mrf.mxu0
  %v2278 = vpop.f32.mrf.mxu0
  %v2279 = vadd.f32 0.0, %v2278
  %v2280 = vpop.f32.mrf.mxu0
  %2281 = vmatprep.mubr.bf16.mxu0 0
  %2282 = vmatmul.mubr.bf16.gmra.mxu0 %v2021
  %v2283 = vpop.f32.mrf.mxu0
  %v2284 = vadd.f32 0.0, %v2283
  %v2285 = vpop.f32.mrf.mxu0
  %v2286 = vpop.f32.mrf.mxu0
  %v2287 = vadd.f32 0.0, %v2286
  %v2288 = vpop.f32.mrf.mxu0
  %2289 = vmatprep.mubr.bf16.mxu0 0
  %2290 = vmatmul.mubr.bf16.gmra.mxu0 %v2024
  %v2291 = vpop.f32.mrf.mxu0
  %v2292 = vadd.f32 0.0, %v2291
  %v2293 = vpop.f32.mrf.mxu0
  %v2294 = vpop.f32.mrf.mxu0
  %v2295 = vadd.f32 0.0, %v2294
  %v2296 = vpop.f32.mrf.mxu0
  %2297 = vmatprep.mubr.bf16.mxu0 0
  %2298 = vmatmul.mubr.bf16.gmra.mxu0 %v2027
  %v2299 = vpop.f32.mrf.mxu0
  %v2300 = vadd.f32 0.0, %v2299
  %v2301 = vpop.f32.mrf.mxu0
  %v2302 = vpop.f32.mrf.mxu0
  %v2303 = vadd.f32 0.0, %v2302
  %v2304 = vpop.f32.mrf.mxu0
  %2305 = vmatprep.mubr.bf16.mxu0 0
  %2306 = vmatmul.mubr.bf16.gmra.mxu0 %v2030
  %v2307 = vpop.f32.mrf.mxu0
  %v2308 = vadd.f32 0.0, %v2307
  %v2309 = vpop.f32.mrf.mxu0
  %v2310 = vpop.f32.mrf.mxu0
  %v2311 = vadd.f32 0.0, %v2310
  %v2312 = vpop.f32.mrf.mxu0
  %2313 = vmatprep.mubr.bf16.mxu0 0
  %2314 = vmatmul.mubr.bf16.gmra.mxu0 %v2033
  %v2315 = vpop.f32.mrf.mxu0
  %v2316 = vadd.f32 0.0, %v2315
  %v2317 = vpop.f32.mrf.mxu0
  %v2318 = vpop.f32.mrf.mxu0
  %v2319 = vadd.f32 0.0, %v2318
  %v2320 = vpop.f32.mrf.mxu0
  %2321 = vmatprep.mubr.bf16.mxu0 0
  %2322 = vmatmul.mubr.bf16.gmra.mxu0 %v2036
  %v2323 = vpop.f32.mrf.mxu0
  %v2324 = vadd.f32 0.0, %v2323
  %v2325 = vpop.f32.mrf.mxu0
  %v2326 = vpop.f32.mrf.mxu0
  %v2327 = vadd.f32 0.0, %v2326
  %v2328 = vpop.f32.mrf.mxu0
  %2329 = vdwg.mxu0
  %v2330 = vadd.f32 %v1590, %v2076
  %v2331 = vadd.f32 %v1593, %v2079
  %v2332 = vadd.f32 %v1598, %v2084
  %v2333 = vadd.f32 %v1601, %v2087
  %v2334 = vadd.f32 %v1606, %v2092
  %v2335 = vadd.f32 %v1609, %v2095
  %v2336 = vadd.f32 %v1614, %v2100
  %v2337 = vadd.f32 %v1617, %v2103
  %v2338 = vadd.f32 %v1622, %v2108
  %v2339 = vadd.f32 %v1625, %v2111
  %v2340 = vadd.f32 %v1630, %v2116
  %v2341 = vadd.f32 %v1633, %v2119
  %v2342 = vadd.f32 %v1638, %v2124
  %v2343 = vadd.f32 %v1641, %v2127
  %v2344 = vadd.f32 %v1646, %v2132
  %v2345 = vadd.f32 %v1649, %v2135
  %v2346 = vadd.f32 %v1654, %v2140
  %v2347 = vadd.f32 %v1657, %v2143
  %v2348 = vadd.f32 %v1662, %v2148
  %v2349 = vadd.f32 %v1665, %v2151
  %v2350 = vadd.f32 %v1670, %v2156
  %v2351 = vadd.f32 %v1673, %v2159
  %v2352 = vadd.f32 %v1678, %v2164
  %v2353 = vadd.f32 %v1681, %v2167
  %v2354 = vadd.f32 %v1686, %v2172
  %v2355 = vadd.f32 %v1689, %v2175
  %v2356 = vadd.f32 %v1694, %v2180
  %v2357 = vadd.f32 %v1697, %v2183
  %v2358 = vadd.f32 %v1702, %v2188
  %v2359 = vadd.f32 %v1705, %v2191
  %v2360 = vadd.f32 %v1710, %v2196
  %v2361 = vadd.f32 %v1713, %v2199
  %v2362 = vadd.f32 %v1718, %v2204
  %v2363 = vadd.f32 %v1721, %v2207
  %v2364 = vadd.f32 %v1726, %v2212
  %v2365 = vadd.f32 %v1729, %v2215
  %v2366 = vadd.f32 %v1734, %v2220
  %v2367 = vadd.f32 %v1737, %v2223
  %v2368 = vadd.f32 %v1742, %v2228
  %v2369 = vadd.f32 %v1745, %v2231
  %v2370 = vadd.f32 %v1750, %v2236
  %v2371 = vadd.f32 %v1753, %v2239
  %v2372 = vadd.f32 %v1758, %v2244
  %v2373 = vadd.f32 %v1761, %v2247
  %v2374 = vadd.f32 %v1766, %v2252
  %v2375 = vadd.f32 %v1769, %v2255
  %v2376 = vadd.f32 %v1774, %v2260
  %v2377 = vadd.f32 %v1777, %v2263
  %v2378 = vadd.f32 %v1782, %v2268
  %v2379 = vadd.f32 %v1785, %v2271
  %v2380 = vadd.f32 %v1790, %v2276
  %v2381 = vadd.f32 %v1793, %v2279
  %v2382 = vadd.f32 %v1798, %v2284
  %v2383 = vadd.f32 %v1801, %v2287
  %v2384 = vadd.f32 %v1806, %v2292
  %v2385 = vadd.f32 %v1809, %v2295
  %v2386 = vadd.f32 %v1814, %v2300
  %v2387 = vadd.f32 %v1817, %v2303
  %v2388 = vadd.f32 %v1822, %v2308
  %v2389 = vadd.f32 %v1825, %v2311
  %v2390 = vadd.f32 %v1830, %v2316
  %v2391 = vadd.f32 %v1833, %v2319
  %v2392 = vadd.f32 %v1838, %v2324
  %v2393 = vadd.f32 %v1841, %v2327
  %v2394 = vld [vmem:[%s719] sm:$0xff]
  %v2395 = vld [vmem:[%s719 + $0x8] sm:$0xff]
  %v2396 = vld [vmem:[%s719 + $0x18] sm:$0xff]
  %v2397 = vld [vmem:[%s719 + $0x20] sm:$0xff]
  %v2398 = vld [vmem:[%s719 + $0x30] sm:$0xff]
  %v2399 = vld [vmem:[%s719 + $0x38] sm:$0xff]
  %v2400 = vld [vmem:[%s719 + $0x48] sm:$0xff]
  %v2401 = vld [vmem:[%s719 + $0x50] sm:$0xff]
  %v2402 = vld [vmem:[%s719 + $0x60] sm:$0xff]
  %v2403 = vld [vmem:[%s719 + $0x68] sm:$0xff]
  %v2404 = vld [vmem:[%s719 + $0x78] sm:$0xff]
  %v2405 = vld [vmem:[%s719 + $0x80] sm:$0xff]
  %v2406 = vld [vmem:[%s719 + $0x90] sm:$0xff]
  %v2407 = vld [vmem:[%s719 + $0x98] sm:$0xff]
  %v2408 = vld [vmem:[%s719 + $0xa8] sm:$0xff]
  %v2409 = vld [vmem:[%s719 + $0xb0] sm:$0xff]
  %v2410 = vld [vmem:[%s719 + $0xc0] sm:$0xff]
  %v2411 = vld [vmem:[%s719 + $0xc8] sm:$0xff]
  %v2412 = vld [vmem:[%s719 + $0xd8] sm:$0xff]
  %v2413 = vld [vmem:[%s719 + $0xe0] sm:$0xff]
  %v2414 = vld [vmem:[%s719 + $0xf0] sm:$0xff]
  %v2415 = vld [vmem:[%s719 + $0xf8] sm:$0xff]
  %v2416 = vld [vmem:[%s719 + $0x108] sm:$0xff]
  %v2417 = vld [vmem:[%s719 + $0x110] sm:$0xff]
  %v2418 = vld [vmem:[%s719 + $0x120] sm:$0xff]
  %v2419 = vld [vmem:[%s719 + $0x128] sm:$0xff]
  %v2420 = vld [vmem:[%s719 + $0x138] sm:$0xff]
  %v2421 = vld [vmem:[%s719 + $0x140] sm:$0xff]
  %v2422 = vld [vmem:[%s719 + $0x150] sm:$0xff]
  %v2423 = vld [vmem:[%s719 + $0x158] sm:$0xff]
  %v2424 = vld [vmem:[%s719 + $0x168] sm:$0xff]
  %v2425 = vld [vmem:[%s719 + $0x170] sm:$0xff]
  %v2426 = vld [vmem:[%s719 + $0x1b0] sm:$0xff]
  %v2427 = vld [vmem:[%s719 + $0x1b8] sm:$0xff]
  %v2428 = vld [vmem:[%s719 + $0x1c8] sm:$0xff]
  %v2429 = vld [vmem:[%s719 + $0x1d0] sm:$0xff]
  %v2430 = vld [vmem:[%s719 + $0x1e0] sm:$0xff]
  %v2431 = vld [vmem:[%s719 + $0x1e8] sm:$0xff]
  %v2432 = vld [vmem:[%s719 + $0x1f8] sm:$0xff]
  %v2433 = vld [vmem:[%s719 + $0x200] sm:$0xff]
  %v2434 = vld [vmem:[%s719 + $0x210] sm:$0xff]
  %v2435 = vld [vmem:[%s719 + $0x218] sm:$0xff]
  %v2436 = vld [vmem:[%s719 + $0x228] sm:$0xff]
  %v2437 = vld [vmem:[%s719 + $0x230] sm:$0xff]
  %v2438 = vld [vmem:[%s719 + $0x240] sm:$0xff]
  %v2439 = vld [vmem:[%s719 + $0x248] sm:$0xff]
  %v2440 = vld [vmem:[%s719 + $0x258] sm:$0xff]
  %v2441 = vld [vmem:[%s719 + $0x260] sm:$0xff]
  %v2442 = vld [vmem:[%s719 + $0x270] sm:$0xff]
  %v2443 = vld [vmem:[%s719 + $0x278] sm:$0xff]
  %v2444 = vld [vmem:[%s719 + $0x288] sm:$0xff]
  %v2445 = vld [vmem:[%s719 + $0x290] sm:$0xff]
  %v2446 = vld [vmem:[%s719 + $0x2a0] sm:$0xff]
  %v2447 = vld [vmem:[%s719 + $0x2a8] sm:$0xff]
  %v2448 = vld [vmem:[%s719 + $0x2b8] sm:$0xff]
  %v2449 = vld [vmem:[%s719 + $0x2c0] sm:$0xff]
  %v2450 = vld [vmem:[%s719 + $0x2d0] sm:$0xff]
  %v2451 = vld [vmem:[%s719 + $0x2d8] sm:$0xff]
  %v2452 = vld [vmem:[%s719 + $0x2e8] sm:$0xff]
  %v2453 = vld [vmem:[%s719 + $0x2f0] sm:$0xff]
  %v2454 = vld [vmem:[%s719 + $0x300] sm:$0xff]
  %v2455 = vld [vmem:[%s719 + $0x308] sm:$0xff]
  %v2456 = vld [vmem:[%s719 + $0x318] sm:$0xff]
  %v2457 = vld [vmem:[%s719 + $0x320] sm:$0xff]
  %v2458 = vpack.c.bf16 %v2395, %v2394
  %v2459 = vpack.c.bf16 %v2397, %v2396
  %v2460 = vpack.c.bf16 %v2399, %v2398
  %v2461 = vpack.c.bf16 %v2401, %v2400
  %v2462 = vpack.c.bf16 %v2403, %v2402
  %v2463 = vpack.c.bf16 %v2405, %v2404
  %v2464 = vpack.c.bf16 %v2407, %v2406
  %v2465 = vpack.c.bf16 %v2409, %v2408
  %v2466 = vpack.c.bf16 %v2411, %v2410
  %v2467 = vpack.c.bf16 %v2413, %v2412
  %v2468 = vpack.c.bf16 %v2415, %v2414
  %v2469 = vpack.c.bf16 %v2417, %v2416
  %v2470 = vpack.c.bf16 %v2419, %v2418
  %v2471 = vpack.c.bf16 %v2421, %v2420
  %v2472 = vpack.c.bf16 %v2423, %v2422
  %v2473 = vpack.c.bf16 %v2425, %v2424
  %v2474 = vpack.c.bf16 %v2427, %v2426
  %v2475 = vpack.c.bf16 %v2429, %v2428
  %v2476 = vpack.c.bf16 %v2431, %v2430
  %v2477 = vpack.c.bf16 %v2433, %v2432
  %v2478 = vpack.c.bf16 %v2435, %v2434
  %v2479 = vpack.c.bf16 %v2437, %v2436
  %v2480 = vpack.c.bf16 %v2439, %v2438
  %v2481 = vpack.c.bf16 %v2441, %v2440
  %v2482 = vpack.c.bf16 %v2443, %v2442
  %v2483 = vpack.c.bf16 %v2445, %v2444
  %v2484 = vpack.c.bf16 %v2447, %v2446
  %v2485 = vpack.c.bf16 %v2449, %v2448
  %v2486 = vpack.c.bf16 %v2451, %v2450
  %v2487 = vpack.c.bf16 %v2453, %v2452
  %v2488 = vpack.c.bf16 %v2455, %v2454
  %v2489 = vpack.c.bf16 %v2457, %v2456
  %s2490 = scalar_lea.vmem %s2, 12
  %v2491 = vld [vmem:[%s2490] sm:$0xf]
  %v2493 = vsel %vm720, %v2458, 0
  %v2496 = vsel %vm720, %v2459, 0
  %v2499 = vsel %vm720, %v2460, 0
  %v2502 = vsel %vm720, %v2461, 0
  %v2505 = vsel %vm720, %v2462, 0
  %v2508 = vsel %vm720, %v2463, 0
  %v2511 = vsel %vm720, %v2464, 0
  %v2514 = vsel %vm720, %v2465, 0
  %v2517 = vsel %vm720, %v2466, 0
  %v2520 = vsel %vm720, %v2467, 0
  %v2523 = vsel %vm720, %v2468, 0
  %v2526 = vsel %vm720, %v2469, 0
  %v2529 = vsel %vm720, %v2470, 0
  %v2532 = vsel %vm720, %v2471, 0
  %v2535 = vsel %vm720, %v2472, 0
  %v2538 = vsel %vm720, %v2473, 0
  %v2541 = vsel %vm720, %v2474, 0
  %v2544 = vsel %vm720, %v2475, 0
  %v2547 = vsel %vm720, %v2476, 0
  %v2550 = vsel %vm720, %v2477, 0
  %v2553 = vsel %vm720, %v2478, 0
  %v2556 = vsel %vm720, %v2479, 0
  %v2559 = vsel %vm720, %v2480, 0
  %v2562 = vsel %vm720, %v2481, 0
  %v2565 = vsel %vm720, %v2482, 0
  %v2568 = vsel %vm720, %v2483, 0
  %v2571 = vsel %vm720, %v2484, 0
  %v2574 = vsel %vm720, %v2485, 0
  %v2577 = vsel %vm720, %v2486, 0
  %v2580 = vsel %vm720, %v2487, 0
  %v2583 = vsel %vm720, %v2488, 0
  %v2586 = vsel %vm720, %v2489, 0
  %v2589 = vsel %vm1163, %v2491, 0
  %2591 = vmatprep.subr.bf16.mxu0 0
  %2592 = vmatpush1.bf16.msra.mxu0 0
  %2593 = vmatprep.subr.bf16.mxu0 0
  %2594 = vmatpush1.bf16.msra.mxu0 0
  %2595 = vmatprep.subr.bf16.mxu0 0
  %2596 = vmatpush1.bf16.msra.mxu0 0
  %2597 = vmatprep.subr.bf16.mxu0 0
  %2598 = vmatpush1.bf16.msra.mxu0 0
  %2599 = vmatprep.subr.bf16.mxu0 0
  %2600 = vmatpush1.bf16.msra.mxu0 0
  %2601 = vmatprep.subr.bf16.mxu0 0
  %2602 = vmatpush1.bf16.msra.mxu0 0
  %2603 = vmatprep.subr.bf16.mxu0 0
  %2604 = vmatpush1.bf16.msra.mxu0 0
  %2605 = vmatprep.subr.bf16.mxu0 0
  %2606 = vmatpush1.bf16.msra.mxu0 %v2589
  %2607 = vmatprep.subr.bf16.mxu0 0
  %2608 = vmatpush2.bf16.msra.mxu0 0
  %2609 = vmatprep.subr.bf16.mxu0 0
  %2610 = vmatpush2.bf16.msra.mxu0 0
  %2611 = vmatprep.subr.bf16.mxu0 0
  %2612 = vmatpush2.bf16.msra.mxu0 0
  %2613 = vmatprep.subr.bf16.mxu0 0
  %2614 = vmatpush2.bf16.msra.mxu0 0
  %2615 = vmatprep.subr.bf16.mxu0 0
  %2616 = vmatpush2.bf16.msra.mxu0 0
  %2617 = vmatprep.subr.bf16.mxu0 0
  %2618 = vmatpush2.bf16.msra.mxu0 0
  %2619 = vmatprep.subr.bf16.mxu0 0
  %2620 = vmatpush2.bf16.msra.mxu0 0
  %2621 = vmatprep.subr.bf16.mxu0 0
  %2622 = vmatpush2.bf16.msra.mxu0 0
  %2623 = vmatprep.mubr.bf16.mxu0 0
  %2624 = vmatmul.mubr.bf16.gmra.mxu0 %v2493
  %v2625 = vpop.f32.mrf.mxu0
  %v2626 = vadd.f32 0.0, %v2625
  %v2627 = vpop.f32.mrf.mxu0
  %v2628 = vpop.f32.mrf.mxu0
  %v2629 = vadd.f32 0.0, %v2628
  %v2630 = vpop.f32.mrf.mxu0
  %2631 = vmatprep.mubr.bf16.mxu0 0
  %2632 = vmatmul.mubr.bf16.gmra.mxu0 %v2496
  %v2633 = vpop.f32.mrf.mxu0
  %v2634 = vadd.f32 0.0, %v2633
  %v2635 = vpop.f32.mrf.mxu0
  %v2636 = vpop.f32.mrf.mxu0
  %v2637 = vadd.f32 0.0, %v2636
  %v2638 = vpop.f32.mrf.mxu0
  %2639 = vmatprep.mubr.bf16.mxu0 0
  %2640 = vmatmul.mubr.bf16.gmra.mxu0 %v2499
  %v2641 = vpop.f32.mrf.mxu0
  %v2642 = vadd.f32 0.0, %v2641
  %v2643 = vpop.f32.mrf.mxu0
  %v2644 = vpop.f32.mrf.mxu0
  %v2645 = vadd.f32 0.0, %v2644
  %v2646 = vpop.f32.mrf.mxu0
  %2647 = vmatprep.mubr.bf16.mxu0 0
  %2648 = vmatmul.mubr.bf16.gmra.mxu0 %v2502
  %v2649 = vpop.f32.mrf.mxu0
  %v2650 = vadd.f32 0.0, %v2649
  %v2651 = vpop.f32.mrf.mxu0
  %v2652 = vpop.f32.mrf.mxu0
  %v2653 = vadd.f32 0.0, %v2652
  %v2654 = vpop.f32.mrf.mxu0
  %2655 = vmatprep.mubr.bf16.mxu0 0
  %2656 = vmatmul.mubr.bf16.gmra.mxu0 %v2505
  %v2657 = vpop.f32.mrf.mxu0
  %v2658 = vadd.f32 0.0, %v2657
  %v2659 = vpop.f32.mrf.mxu0
  %v2660 = vpop.f32.mrf.mxu0
  %v2661 = vadd.f32 0.0, %v2660
  %v2662 = vpop.f32.mrf.mxu0
  %2663 = vmatprep.mubr.bf16.mxu0 0
  %2664 = vmatmul.mubr.bf16.gmra.mxu0 %v2508
  %v2665 = vpop.f32.mrf.mxu0
  %v2666 = vadd.f32 0.0, %v2665
  %v2667 = vpop.f32.mrf.mxu0
  %v2668 = vpop.f32.mrf.mxu0
  %v2669 = vadd.f32 0.0, %v2668
  %v2670 = vpop.f32.mrf.mxu0
  %2671 = vmatprep.mubr.bf16.mxu0 0
  %2672 = vmatmul.mubr.bf16.gmra.mxu0 %v2511
  %v2673 = vpop.f32.mrf.mxu0
  %v2674 = vadd.f32 0.0, %v2673
  %v2675 = vpop.f32.mrf.mxu0
  %v2676 = vpop.f32.mrf.mxu0
  %v2677 = vadd.f32 0.0, %v2676
  %v2678 = vpop.f32.mrf.mxu0
  %2679 = vmatprep.mubr.bf16.mxu0 0
  %2680 = vmatmul.mubr.bf16.gmra.mxu0 %v2514
  %v2681 = vpop.f32.mrf.mxu0
  %v2682 = vadd.f32 0.0, %v2681
  %v2683 = vpop.f32.mrf.mxu0
  %v2684 = vpop.f32.mrf.mxu0
  %v2685 = vadd.f32 0.0, %v2684
  %v2686 = vpop.f32.mrf.mxu0
  %2687 = vmatprep.mubr.bf16.mxu0 0
  %2688 = vmatmul.mubr.bf16.gmra.mxu0 %v2517
  %v2689 = vpop.f32.mrf.mxu0
  %v2690 = vadd.f32 0.0, %v2689
  %v2691 = vpop.f32.mrf.mxu0
  %v2692 = vpop.f32.mrf.mxu0
  %v2693 = vadd.f32 0.0, %v2692
  %v2694 = vpop.f32.mrf.mxu0
  %2695 = vmatprep.mubr.bf16.mxu0 0
  %2696 = vmatmul.mubr.bf16.gmra.mxu0 %v2520
  %v2697 = vpop.f32.mrf.mxu0
  %v2698 = vadd.f32 0.0, %v2697
  %v2699 = vpop.f32.mrf.mxu0
  %v2700 = vpop.f32.mrf.mxu0
  %v2701 = vadd.f32 0.0, %v2700
  %v2702 = vpop.f32.mrf.mxu0
  %2703 = vmatprep.mubr.bf16.mxu0 0
  %2704 = vmatmul.mubr.bf16.gmra.mxu0 %v2523
  %v2705 = vpop.f32.mrf.mxu0
  %v2706 = vadd.f32 0.0, %v2705
  %v2707 = vpop.f32.mrf.mxu0
  %v2708 = vpop.f32.mrf.mxu0
  %v2709 = vadd.f32 0.0, %v2708
  %v2710 = vpop.f32.mrf.mxu0
  %2711 = vmatprep.mubr.bf16.mxu0 0
  %2712 = vmatmul.mubr.bf16.gmra.mxu0 %v2526
  %v2713 = vpop.f32.mrf.mxu0
  %v2714 = vadd.f32 0.0, %v2713
  %v2715 = vpop.f32.mrf.mxu0
  %v2716 = vpop.f32.mrf.mxu0
  %v2717 = vadd.f32 0.0, %v2716
  %v2718 = vpop.f32.mrf.mxu0
  %2719 = vmatprep.mubr.bf16.mxu0 0
  %2720 = vmatmul.mubr.bf16.gmra.mxu0 %v2529
  %v2721 = vpop.f32.mrf.mxu0
  %v2722 = vadd.f32 0.0, %v2721
  %v2723 = vpop.f32.mrf.mxu0
  %v2724 = vpop.f32.mrf.mxu0
  %v2725 = vadd.f32 0.0, %v2724
  %v2726 = vpop.f32.mrf.mxu0
  %2727 = vmatprep.mubr.bf16.mxu0 0
  %2728 = vmatmul.mubr.bf16.gmra.mxu0 %v2532
  %v2729 = vpop.f32.mrf.mxu0
  %v2730 = vadd.f32 0.0, %v2729
  %v2731 = vpop.f32.mrf.mxu0
  %v2732 = vpop.f32.mrf.mxu0
  %v2733 = vadd.f32 0.0, %v2732
  %v2734 = vpop.f32.mrf.mxu0
  %2735 = vmatprep.mubr.bf16.mxu0 0
  %2736 = vmatmul.mubr.bf16.gmra.mxu0 %v2535
  %v2737 = vpop.f32.mrf.mxu0
  %v2738 = vadd.f32 0.0, %v2737
  %v2739 = vpop.f32.mrf.mxu0
  %v2740 = vpop.f32.mrf.mxu0
  %v2741 = vadd.f32 0.0, %v2740
  %v2742 = vpop.f32.mrf.mxu0
  %2743 = vmatprep.mubr.bf16.mxu0 0
  %2744 = vmatmul.mubr.bf16.gmra.mxu0 %v2538
  %v2745 = vpop.f32.mrf.mxu0
  %v2746 = vadd.f32 0.0, %v2745
  %v2747 = vpop.f32.mrf.mxu0
  %v2748 = vpop.f32.mrf.mxu0
  %v2749 = vadd.f32 0.0, %v2748
  %v2750 = vpop.f32.mrf.mxu0
  %2751 = vmatprep.mubr.bf16.mxu0 0
  %2752 = vmatmul.mubr.bf16.gmra.mxu0 %v2541
  %v2753 = vpop.f32.mrf.mxu0
  %v2754 = vadd.f32 0.0, %v2753
  %v2755 = vpop.f32.mrf.mxu0
  %v2756 = vpop.f32.mrf.mxu0
  %v2757 = vadd.f32 0.0, %v2756
  %v2758 = vpop.f32.mrf.mxu0
  %2759 = vmatprep.mubr.bf16.mxu0 0
  %2760 = vmatmul.mubr.bf16.gmra.mxu0 %v2544
  %v2761 = vpop.f32.mrf.mxu0
  %v2762 = vadd.f32 0.0, %v2761
  %v2763 = vpop.f32.mrf.mxu0
  %v2764 = vpop.f32.mrf.mxu0
  %v2765 = vadd.f32 0.0, %v2764
  %v2766 = vpop.f32.mrf.mxu0
  %2767 = vmatprep.mubr.bf16.mxu0 0
  %2768 = vmatmul.mubr.bf16.gmra.mxu0 %v2547
  %v2769 = vpop.f32.mrf.mxu0
  %v2770 = vadd.f32 0.0, %v2769
  %v2771 = vpop.f32.mrf.mxu0
  %v2772 = vpop.f32.mrf.mxu0
  %v2773 = vadd.f32 0.0, %v2772
  %v2774 = vpop.f32.mrf.mxu0
  %2775 = vmatprep.mubr.bf16.mxu0 0
  %2776 = vmatmul.mubr.bf16.gmra.mxu0 %v2550
  %v2777 = vpop.f32.mrf.mxu0
  %v2778 = vadd.f32 0.0, %v2777
  %v2779 = vpop.f32.mrf.mxu0
  %v2780 = vpop.f32.mrf.mxu0
  %v2781 = vadd.f32 0.0, %v2780
  %v2782 = vpop.f32.mrf.mxu0
  %2783 = vmatprep.mubr.bf16.mxu0 0
  %2784 = vmatmul.mubr.bf16.gmra.mxu0 %v2553
  %v2785 = vpop.f32.mrf.mxu0
  %v2786 = vadd.f32 0.0, %v2785
  %v2787 = vpop.f32.mrf.mxu0
  %v2788 = vpop.f32.mrf.mxu0
  %v2789 = vadd.f32 0.0, %v2788
  %v2790 = vpop.f32.mrf.mxu0
  %2791 = vmatprep.mubr.bf16.mxu0 0
  %2792 = vmatmul.mubr.bf16.gmra.mxu0 %v2556
  %v2793 = vpop.f32.mrf.mxu0
  %v2794 = vadd.f32 0.0, %v2793
  %v2795 = vpop.f32.mrf.mxu0
  %v2796 = vpop.f32.mrf.mxu0
  %v2797 = vadd.f32 0.0, %v2796
  %v2798 = vpop.f32.mrf.mxu0
  %2799 = vmatprep.mubr.bf16.mxu0 0
  %2800 = vmatmul.mubr.bf16.gmra.mxu0 %v2559
  %v2801 = vpop.f32.mrf.mxu0
  %v2802 = vadd.f32 0.0, %v2801
  %v2803 = vpop.f32.mrf.mxu0
  %v2804 = vpop.f32.mrf.mxu0
  %v2805 = vadd.f32 0.0, %v2804
  %v2806 = vpop.f32.mrf.mxu0
  %2807 = vmatprep.mubr.bf16.mxu0 0
  %2808 = vmatmul.mubr.bf16.gmra.mxu0 %v2562
  %v2809 = vpop.f32.mrf.mxu0
  %v2810 = vadd.f32 0.0, %v2809
  %v2811 = vpop.f32.mrf.mxu0
  %v2812 = vpop.f32.mrf.mxu0
  %v2813 = vadd.f32 0.0, %v2812
  %v2814 = vpop.f32.mrf.mxu0
  %2815 = vmatprep.mubr.bf16.mxu0 0
  %2816 = vmatmul.mubr.bf16.gmra.mxu0 %v2565
  %v2817 = vpop.f32.mrf.mxu0
  %v2818 = vadd.f32 0.0, %v2817
  %v2819 = vpop.f32.mrf.mxu0
  %v2820 = vpop.f32.mrf.mxu0
  %v2821 = vadd.f32 0.0, %v2820
  %v2822 = vpop.f32.mrf.mxu0
  %2823 = vmatprep.mubr.bf16.mxu0 0
  %2824 = vmatmul.mubr.bf16.gmra.mxu0 %v2568
  %v2825 = vpop.f32.mrf.mxu0
  %v2826 = vadd.f32 0.0, %v2825
  %v2827 = vpop.f32.mrf.mxu0
  %v2828 = vpop.f32.mrf.mxu0
  %v2829 = vadd.f32 0.0, %v2828
  %v2830 = vpop.f32.mrf.mxu0
  %2831 = vmatprep.mubr.bf16.mxu0 0
  %2832 = vmatmul.mubr.bf16.gmra.mxu0 %v2571
  %v2833 = vpop.f32.mrf.mxu0
  %v2834 = vadd.f32 0.0, %v2833
  %v2835 = vpop.f32.mrf.mxu0
  %v2836 = vpop.f32.mrf.mxu0
  %v2837 = vadd.f32 0.0, %v2836
  %v2838 = vpop.f32.mrf.mxu0
  %2839 = vmatprep.mubr.bf16.mxu0 0
  %2840 = vmatmul.mubr.bf16.gmra.mxu0 %v2574
  %v2841 = vpop.f32.mrf.mxu0
  %v2842 = vadd.f32 0.0, %v2841
  %v2843 = vpop.f32.mrf.mxu0
  %v2844 = vpop.f32.mrf.mxu0
  %v2845 = vadd.f32 0.0, %v2844
  %v2846 = vpop.f32.mrf.mxu0
  %2847 = vmatprep.mubr.bf16.mxu0 0
  %2848 = vmatmul.mubr.bf16.gmra.mxu0 %v2577
  %v2849 = vpop.f32.mrf.mxu0
  %v2850 = vadd.f32 0.0, %v2849
  %v2851 = vpop.f32.mrf.mxu0
  %v2852 = vpop.f32.mrf.mxu0
  %v2853 = vadd.f32 0.0, %v2852
  %v2854 = vpop.f32.mrf.mxu0
  %2855 = vmatprep.mubr.bf16.mxu0 0
  %2856 = vmatmul.mubr.bf16.gmra.mxu0 %v2580
  %v2857 = vpop.f32.mrf.mxu0
  %v2858 = vadd.f32 0.0, %v2857
  %v2859 = vpop.f32.mrf.mxu0
  %v2860 = vpop.f32.mrf.mxu0
  %v2861 = vadd.f32 0.0, %v2860
  %v2862 = vpop.f32.mrf.mxu0
  %2863 = vmatprep.mubr.bf16.mxu0 0
  %2864 = vmatmul.mubr.bf16.gmra.mxu0 %v2583
  %v2865 = vpop.f32.mrf.mxu0
  %v2866 = vadd.f32 0.0, %v2865
  %v2867 = vpop.f32.mrf.mxu0
  %v2868 = vpop.f32.mrf.mxu0
  %v2869 = vadd.f32 0.0, %v2868
  %v2870 = vpop.f32.mrf.mxu0
  %2871 = vmatprep.mubr.bf16.mxu0 0
  %2872 = vmatmul.mubr.bf16.gmra.mxu0 %v2586
  %v2873 = vpop.f32.mrf.mxu0
  %v2874 = vadd.f32 0.0, %v2873
  %v2875 = vpop.f32.mrf.mxu0
  %v2876 = vpop.f32.mrf.mxu0
  %v2877 = vadd.f32 0.0, %v2876
  %v2878 = vpop.f32.mrf.mxu0
  %2879 = vdwg.mxu0
  %v2880 = vadd.f32 %v2330, %v2626
  %v2881 = vadd.f32 %v2331, %v2629
  %v2882 = vadd.f32 %v2332, %v2634
  %v2883 = vadd.f32 %v2333, %v2637
  %v2884 = vadd.f32 %v2334, %v2642
  %v2885 = vadd.f32 %v2335, %v2645
  %v2886 = vadd.f32 %v2336, %v2650
  %v2887 = vadd.f32 %v2337, %v2653
  %v2888 = vadd.f32 %v2338, %v2658
  %v2889 = vadd.f32 %v2339, %v2661
  %v2890 = vadd.f32 %v2340, %v2666
  %v2891 = vadd.f32 %v2341, %v2669
  %v2892 = vadd.f32 %v2342, %v2674
  %v2893 = vadd.f32 %v2343, %v2677
  %v2894 = vadd.f32 %v2344, %v2682
  %v2895 = vadd.f32 %v2345, %v2685
  %v2896 = vadd.f32 %v2346, %v2690
  %v2897 = vadd.f32 %v2347, %v2693
  %v2898 = vadd.f32 %v2348, %v2698
  %v2899 = vadd.f32 %v2349, %v2701
  %v2900 = vadd.f32 %v2350, %v2706
  %v2901 = vadd.f32 %v2351, %v2709
  %v2902 = vadd.f32 %v2352, %v2714
  %v2903 = vadd.f32 %v2353, %v2717
  %v2904 = vadd.f32 %v2354, %v2722
  %v2905 = vadd.f32 %v2355, %v2725
  %v2906 = vadd.f32 %v2356, %v2730
  %v2907 = vadd.f32 %v2357, %v2733
  %v2908 = vadd.f32 %v2358, %v2738
  %v2909 = vadd.f32 %v2359, %v2741
  %v2910 = vadd.f32 %v2360, %v2746
  %v2911 = vadd.f32 %v2361, %v2749
  %v2912 = vadd.f32 %v2362, %v2754
  %v2913 = vadd.f32 %v2363, %v2757
  %v2914 = vadd.f32 %v2364, %v2762
  %v2915 = vadd.f32 %v2365, %v2765
  %v2916 = vadd.f32 %v2366, %v2770
  %v2917 = vadd.f32 %v2367, %v2773
  %v2918 = vadd.f32 %v2368, %v2778
  %v2919 = vadd.f32 %v2369, %v2781
  %v2920 = vadd.f32 %v2370, %v2786
  %v2921 = vadd.f32 %v2371, %v2789
  %v2922 = vadd.f32 %v2372, %v2794
  %v2923 = vadd.f32 %v2373, %v2797
  %v2924 = vadd.f32 %v2374, %v2802
  %v2925 = vadd.f32 %v2375, %v2805
  %v2926 = vadd.f32 %v2376, %v2810
  %v2927 = vadd.f32 %v2377, %v2813
  %v2928 = vadd.f32 %v2378, %v2818
  %v2929 = vadd.f32 %v2379, %v2821
  %v2930 = vadd.f32 %v2380, %v2826
  %v2931 = vadd.f32 %v2381, %v2829
  %v2932 = vadd.f32 %v2382, %v2834
  %v2933 = vadd.f32 %v2383, %v2837
  %v2934 = vadd.f32 %v2384, %v2842
  %v2935 = vadd.f32 %v2385, %v2845
  %v2936 = vadd.f32 %v2386, %v2850
  %v2937 = vadd.f32 %v2387, %v2853
  %v2938 = vadd.f32 %v2388, %v2858
  %v2939 = vadd.f32 %v2389, %v2861
  %v2940 = vadd.f32 %v2390, %v2866
  %v2941 = vadd.f32 %v2391, %v2869
  %v2942 = vadd.f32 %v2392, %v2874
  %v2943 = vadd.f32 %v2393, %v2877
  %v2944 = vld [vmem:[%s719 + $0x1] sm:$0xff]
  %v2945 = vld [vmem:[%s719 + $0x9] sm:$0xff]
  %v2946 = vld [vmem:[%s719 + $0x19] sm:$0xff]
  %v2947 = vld [vmem:[%s719 + $0x21] sm:$0xff]
  %v2948 = vld [vmem:[%s719 + $0x31] sm:$0xff]
  %v2949 = vld [vmem:[%s719 + $0x39] sm:$0xff]
  %v2950 = vld [vmem:[%s719 + $0x49] sm:$0xff]
  %v2951 = vld [vmem:[%s719 + $0x51] sm:$0xff]
  %v2952 = vld [vmem:[%s719 + $0x61] sm:$0xff]
  %v2953 = vld [vmem:[%s719 + $0x69] sm:$0xff]
  %v2954 = vld [vmem:[%s719 + $0x79] sm:$0xff]
  %v2955 = vld [vmem:[%s719 + $0x81] sm:$0xff]
  %v2956 = vld [vmem:[%s719 + $0x91] sm:$0xff]
  %v2957 = vld [vmem:[%s719 + $0x99] sm:$0xff]
  %v2958 = vld [vmem:[%s719 + $0xa9] sm:$0xff]
  %v2959 = vld [vmem:[%s719 + $0xb1] sm:$0xff]
  %v2960 = vld [vmem:[%s719 + $0xc1] sm:$0xff]
  %v2961 = vld [vmem:[%s719 + $0xc9] sm:$0xff]
  %v2962 = vld [vmem:[%s719 + $0xd9] sm:$0xff]
  %v2963 = vld [vmem:[%s719 + $0xe1] sm:$0xff]
  %v2964 = vld [vmem:[%s719 + $0xf1] sm:$0xff]
  %v2965 = vld [vmem:[%s719 + $0xf9] sm:$0xff]
  %v2966 = vld [vmem:[%s719 + $0x109] sm:$0xff]
  %v2967 = vld [vmem:[%s719 + $0x111] sm:$0xff]
  %v2968 = vld [vmem:[%s719 + $0x121] sm:$0xff]
  %v2969 = vld [vmem:[%s719 + $0x129] sm:$0xff]
  %v2970 = vld [vmem:[%s719 + $0x139] sm:$0xff]
  %v2971 = vld [vmem:[%s719 + $0x141] sm:$0xff]
  %v2972 = vld [vmem:[%s719 + $0x151] sm:$0xff]
  %v2973 = vld [vmem:[%s719 + $0x159] sm:$0xff]
  %v2974 = vld [vmem:[%s719 + $0x169] sm:$0xff]
  %v2975 = vld [vmem:[%s719 + $0x171] sm:$0xff]
  %v2976 = vld [vmem:[%s719 + $0x1b1] sm:$0xff]
  %v2977 = vld [vmem:[%s719 + $0x1b9] sm:$0xff]
  %v2978 = vld [vmem:[%s719 + $0x1c9] sm:$0xff]
  %v2979 = vld [vmem:[%s719 + $0x1d1] sm:$0xff]
  %v2980 = vld [vmem:[%s719 + $0x1e1] sm:$0xff]
  %v2981 = vld [vmem:[%s719 + $0x1e9] sm:$0xff]
  %v2982 = vld [vmem:[%s719 + $0x1f9] sm:$0xff]
  %v2983 = vld [vmem:[%s719 + $0x201] sm:$0xff]
  %v2984 = vld [vmem:[%s719 + $0x211] sm:$0xff]
  %v2985 = vld [vmem:[%s719 + $0x219] sm:$0xff]
  %v2986 = vld [vmem:[%s719 + $0x229] sm:$0xff]
  %v2987 = vld [vmem:[%s719 + $0x231] sm:$0xff]
  %v2988 = vld [vmem:[%s719 + $0x241] sm:$0xff]
  %v2989 = vld [vmem:[%s719 + $0x249] sm:$0xff]
  %v2990 = vld [vmem:[%s719 + $0x259] sm:$0xff]
  %v2991 = vld [vmem:[%s719 + $0x261] sm:$0xff]
  %v2992 = vld [vmem:[%s719 + $0x271] sm:$0xff]
  %v2993 = vld [vmem:[%s719 + $0x279] sm:$0xff]
  %v2994 = vld [vmem:[%s719 + $0x289] sm:$0xff]
  %v2995 = vld [vmem:[%s719 + $0x291] sm:$0xff]
  %v2996 = vld [vmem:[%s719 + $0x2a1] sm:$0xff]
  %v2997 = vld [vmem:[%s719 + $0x2a9] sm:$0xff]
  %v2998 = vld [vmem:[%s719 + $0x2b9] sm:$0xff]
  %v2999 = vld [vmem:[%s719 + $0x2c1] sm:$0xff]
  %v3000 = vld [vmem:[%s719 + $0x2d1] sm:$0xff]
  %v3001 = vld [vmem:[%s719 + $0x2d9] sm:$0xff]
  %v3002 = vld [vmem:[%s719 + $0x2e9] sm:$0xff]
  %v3003 = vld [vmem:[%s719 + $0x2f1] sm:$0xff]
  %v3004 = vld [vmem:[%s719 + $0x301] sm:$0xff]
  %v3005 = vld [vmem:[%s719 + $0x309] sm:$0xff]
  %v3006 = vld [vmem:[%s719 + $0x319] sm:$0xff]
  %v3007 = vld [vmem:[%s719 + $0x321] sm:$0xff]
  %v3008 = vpack.c.bf16 %v2945, %v2944
  %v3009 = vpack.c.bf16 %v2947, %v2946
  %v3010 = vpack.c.bf16 %v2949, %v2948
  %v3011 = vpack.c.bf16 %v2951, %v2950
  %v3012 = vpack.c.bf16 %v2953, %v2952
  %v3013 = vpack.c.bf16 %v2955, %v2954
  %v3014 = vpack.c.bf16 %v2957, %v2956
  %v3015 = vpack.c.bf16 %v2959, %v2958
  %v3016 = vpack.c.bf16 %v2961, %v2960
  %v3017 = vpack.c.bf16 %v2963, %v2962
  %v3018 = vpack.c.bf16 %v2965, %v2964
  %v3019 = vpack.c.bf16 %v2967, %v2966
  %v3020 = vpack.c.bf16 %v2969, %v2968
  %v3021 = vpack.c.bf16 %v2971, %v2970
  %v3022 = vpack.c.bf16 %v2973, %v2972
  %v3023 = vpack.c.bf16 %v2975, %v2974
  %v3024 = vpack.c.bf16 %v2977, %v2976
  %v3025 = vpack.c.bf16 %v2979, %v2978
  %v3026 = vpack.c.bf16 %v2981, %v2980
  %v3027 = vpack.c.bf16 %v2983, %v2982
  %v3028 = vpack.c.bf16 %v2985, %v2984
  %v3029 = vpack.c.bf16 %v2987, %v2986
  %v3030 = vpack.c.bf16 %v2989, %v2988
  %v3031 = vpack.c.bf16 %v2991, %v2990
  %v3032 = vpack.c.bf16 %v2993, %v2992
  %v3033 = vpack.c.bf16 %v2995, %v2994
  %v3034 = vpack.c.bf16 %v2997, %v2996
  %v3035 = vpack.c.bf16 %v2999, %v2998
  %v3036 = vpack.c.bf16 %v3001, %v3000
  %v3037 = vpack.c.bf16 %v3003, %v3002
  %v3038 = vpack.c.bf16 %v3005, %v3004
  %v3039 = vpack.c.bf16 %v3007, %v3006
  %s3040 = scalar_lea.vmem %s2, 16
  %v3041 = vld [vmem:[%s3040] sm:$0xf]
  %v3043 = vsel %vm720, %v3008, 0
  %v3046 = vsel %vm720, %v3009, 0
  %v3049 = vsel %vm720, %v3010, 0
  %v3052 = vsel %vm720, %v3011, 0
  %v3055 = vsel %vm720, %v3012, 0
  %v3058 = vsel %vm720, %v3013, 0
  %v3061 = vsel %vm720, %v3014, 0
  %v3064 = vsel %vm720, %v3015, 0
  %v3067 = vsel %vm720, %v3016, 0
  %v3070 = vsel %vm720, %v3017, 0
  %v3073 = vsel %vm720, %v3018, 0
  %v3076 = vsel %vm720, %v3019, 0
  %v3079 = vsel %vm720, %v3020, 0
  %v3082 = vsel %vm720, %v3021, 0
  %v3085 = vsel %vm720, %v3022, 0
  %v3088 = vsel %vm720, %v3023, 0
  %v3091 = vsel %vm720, %v3024, 0
  %v3094 = vsel %vm720, %v3025, 0
  %v3097 = vsel %vm720, %v3026, 0
  %v3100 = vsel %vm720, %v3027, 0
  %v3103 = vsel %vm720, %v3028, 0
  %v3106 = vsel %vm720, %v3029, 0
  %v3109 = vsel %vm720, %v3030, 0
  %v3112 = vsel %vm720, %v3031, 0
  %v3115 = vsel %vm720, %v3032, 0
  %v3118 = vsel %vm720, %v3033, 0
  %v3121 = vsel %vm720, %v3034, 0
  %v3124 = vsel %vm720, %v3035, 0
  %v3127 = vsel %vm720, %v3036, 0
  %v3130 = vsel %vm720, %v3037, 0
  %v3133 = vsel %vm720, %v3038, 0
  %v3136 = vsel %vm720, %v3039, 0
  %v3139 = vsel %vm1163, %v3041, 0
  %3141 = vmatprep.subr.bf16.mxu0 0
  %3142 = vmatpush1.bf16.msra.mxu0 0
  %3143 = vmatprep.subr.bf16.mxu0 0
  %3144 = vmatpush1.bf16.msra.mxu0 0
  %3145 = vmatprep.subr.bf16.mxu0 0
  %3146 = vmatpush1.bf16.msra.mxu0 0
  %3147 = vmatprep.subr.bf16.mxu0 0
  %3148 = vmatpush1.bf16.msra.mxu0 0
  %3149 = vmatprep.subr.bf16.mxu0 0
  %3150 = vmatpush1.bf16.msra.mxu0 0
  %3151 = vmatprep.subr.bf16.mxu0 0
  %3152 = vmatpush1.bf16.msra.mxu0 0
  %3153 = vmatprep.subr.bf16.mxu0 0
  %3154 = vmatpush1.bf16.msra.mxu0 0
  %3155 = vmatprep.subr.bf16.mxu0 0
  %3156 = vmatpush1.bf16.msra.mxu0 %v3139
  %3157 = vmatprep.subr.bf16.mxu0 0
  %3158 = vmatpush2.bf16.msra.mxu0 0
  %3159 = vmatprep.subr.bf16.mxu0 0
  %3160 = vmatpush2.bf16.msra.mxu0 0
  %3161 = vmatprep.subr.bf16.mxu0 0
  %3162 = vmatpush2.bf16.msra.mxu0 0
  %3163 = vmatprep.subr.bf16.mxu0 0
  %3164 = vmatpush2.bf16.msra.mxu0 0
  %3165 = vmatprep.subr.bf16.mxu0 0
  %3166 = vmatpush2.bf16.msra.mxu0 0
  %3167 = vmatprep.subr.bf16.mxu0 0
  %3168 = vmatpush2.bf16.msra.mxu0 0
  %3169 = vmatprep.subr.bf16.mxu0 0
  %3170 = vmatpush2.bf16.msra.mxu0 0
  %3171 = vmatprep.subr.bf16.mxu0 0
  %3172 = vmatpush2.bf16.msra.mxu0 0
  %3173 = vmatprep.mubr.bf16.mxu0 0
  %3174 = vmatmul.mubr.bf16.gmra.mxu0 %v3043
  %v3175 = vpop.f32.mrf.mxu0
  %v3176 = vadd.f32 0.0, %v3175
  %v3177 = vpop.f32.mrf.mxu0
  %v3178 = vpop.f32.mrf.mxu0
  %v3179 = vadd.f32 0.0, %v3178
  %v3180 = vpop.f32.mrf.mxu0
  %3181 = vmatprep.mubr.bf16.mxu0 0
  %3182 = vmatmul.mubr.bf16.gmra.mxu0 %v3046
  %v3183 = vpop.f32.mrf.mxu0
  %v3184 = vadd.f32 0.0, %v3183
  %v3185 = vpop.f32.mrf.mxu0
  %v3186 = vpop.f32.mrf.mxu0
  %v3187 = vadd.f32 0.0, %v3186
  %v3188 = vpop.f32.mrf.mxu0
  %3189 = vmatprep.mubr.bf16.mxu0 0
  %3190 = vmatmul.mubr.bf16.gmra.mxu0 %v3049
  %v3191 = vpop.f32.mrf.mxu0
  %v3192 = vadd.f32 0.0, %v3191
  %v3193 = vpop.f32.mrf.mxu0
  %v3194 = vpop.f32.mrf.mxu0
  %v3195 = vadd.f32 0.0, %v3194
  %v3196 = vpop.f32.mrf.mxu0
  %3197 = vmatprep.mubr.bf16.mxu0 0
  %3198 = vmatmul.mubr.bf16.gmra.mxu0 %v3052
  %v3199 = vpop.f32.mrf.mxu0
  %v3200 = vadd.f32 0.0, %v3199
  %v3201 = vpop.f32.mrf.mxu0
  %v3202 = vpop.f32.mrf.mxu0
  %v3203 = vadd.f32 0.0, %v3202
  %v3204 = vpop.f32.mrf.mxu0
  %3205 = vmatprep.mubr.bf16.mxu0 0
  %3206 = vmatmul.mubr.bf16.gmra.mxu0 %v3055
  %v3207 = vpop.f32.mrf.mxu0
  %v3208 = vadd.f32 0.0, %v3207
  %v3209 = vpop.f32.mrf.mxu0
  %v3210 = vpop.f32.mrf.mxu0
  %v3211 = vadd.f32 0.0, %v3210
  %v3212 = vpop.f32.mrf.mxu0
  %3213 = vmatprep.mubr.bf16.mxu0 0
  %3214 = vmatmul.mubr.bf16.gmra.mxu0 %v3058
  %v3215 = vpop.f32.mrf.mxu0
  %v3216 = vadd.f32 0.0, %v3215
  %v3217 = vpop.f32.mrf.mxu0
  %v3218 = vpop.f32.mrf.mxu0
  %v3219 = vadd.f32 0.0, %v3218
  %v3220 = vpop.f32.mrf.mxu0
  %3221 = vmatprep.mubr.bf16.mxu0 0
  %3222 = vmatmul.mubr.bf16.gmra.mxu0 %v3061
  %v3223 = vpop.f32.mrf.mxu0
  %v3224 = vadd.f32 0.0, %v3223
  %v3225 = vpop.f32.mrf.mxu0
  %v3226 = vpop.f32.mrf.mxu0
  %v3227 = vadd.f32 0.0, %v3226
  %v3228 = vpop.f32.mrf.mxu0
  %3229 = vmatprep.mubr.bf16.mxu0 0
  %3230 = vmatmul.mubr.bf16.gmra.mxu0 %v3064
  %v3231 = vpop.f32.mrf.mxu0
  %v3232 = vadd.f32 0.0, %v3231
  %v3233 = vpop.f32.mrf.mxu0
  %v3234 = vpop.f32.mrf.mxu0
  %v3235 = vadd.f32 0.0, %v3234
  %v3236 = vpop.f32.mrf.mxu0
  %3237 = vmatprep.mubr.bf16.mxu0 0
  %3238 = vmatmul.mubr.bf16.gmra.mxu0 %v3067
  %v3239 = vpop.f32.mrf.mxu0
  %v3240 = vadd.f32 0.0, %v3239
  %v3241 = vpop.f32.mrf.mxu0
  %v3242 = vpop.f32.mrf.mxu0
  %v3243 = vadd.f32 0.0, %v3242
  %v3244 = vpop.f32.mrf.mxu0
  %3245 = vmatprep.mubr.bf16.mxu0 0
  %3246 = vmatmul.mubr.bf16.gmra.mxu0 %v3070
  %v3247 = vpop.f32.mrf.mxu0
  %v3248 = vadd.f32 0.0, %v3247
  %v3249 = vpop.f32.mrf.mxu0
  %v3250 = vpop.f32.mrf.mxu0
  %v3251 = vadd.f32 0.0, %v3250
  %v3252 = vpop.f32.mrf.mxu0
  %3253 = vmatprep.mubr.bf16.mxu0 0
  %3254 = vmatmul.mubr.bf16.gmra.mxu0 %v3073
  %v3255 = vpop.f32.mrf.mxu0
  %v3256 = vadd.f32 0.0, %v3255
  %v3257 = vpop.f32.mrf.mxu0
  %v3258 = vpop.f32.mrf.mxu0
  %v3259 = vadd.f32 0.0, %v3258
  %v3260 = vpop.f32.mrf.mxu0
  %3261 = vmatprep.mubr.bf16.mxu0 0
  %3262 = vmatmul.mubr.bf16.gmra.mxu0 %v3076
  %v3263 = vpop.f32.mrf.mxu0
  %v3264 = vadd.f32 0.0, %v3263
  %v3265 = vpop.f32.mrf.mxu0
  %v3266 = vpop.f32.mrf.mxu0
  %v3267 = vadd.f32 0.0, %v3266
  %v3268 = vpop.f32.mrf.mxu0
  %3269 = vmatprep.mubr.bf16.mxu0 0
  %3270 = vmatmul.mubr.bf16.gmra.mxu0 %v3079
  %v3271 = vpop.f32.mrf.mxu0
  %v3272 = vadd.f32 0.0, %v3271
  %v3273 = vpop.f32.mrf.mxu0
  %v3274 = vpop.f32.mrf.mxu0
  %v3275 = vadd.f32 0.0, %v3274
  %v3276 = vpop.f32.mrf.mxu0
  %3277 = vmatprep.mubr.bf16.mxu0 0
  %3278 = vmatmul.mubr.bf16.gmra.mxu0 %v3082
  %v3279 = vpop.f32.mrf.mxu0
  %v3280 = vadd.f32 0.0, %v3279
  %v3281 = vpop.f32.mrf.mxu0
  %v3282 = vpop.f32.mrf.mxu0
  %v3283 = vadd.f32 0.0, %v3282
  %v3284 = vpop.f32.mrf.mxu0
  %3285 = vmatprep.mubr.bf16.mxu0 0
  %3286 = vmatmul.mubr.bf16.gmra.mxu0 %v3085
  %v3287 = vpop.f32.mrf.mxu0
  %v3288 = vadd.f32 0.0, %v3287
  %v3289 = vpop.f32.mrf.mxu0
  %v3290 = vpop.f32.mrf.mxu0
  %v3291 = vadd.f32 0.0, %v3290
  %v3292 = vpop.f32.mrf.mxu0
  %3293 = vmatprep.mubr.bf16.mxu0 0
  %3294 = vmatmul.mubr.bf16.gmra.mxu0 %v3088
  %v3295 = vpop.f32.mrf.mxu0
  %v3296 = vadd.f32 0.0, %v3295
  %v3297 = vpop.f32.mrf.mxu0
  %v3298 = vpop.f32.mrf.mxu0
  %v3299 = vadd.f32 0.0, %v3298
  %v3300 = vpop.f32.mrf.mxu0
  %3301 = vmatprep.mubr.bf16.mxu0 0
  %3302 = vmatmul.mubr.bf16.gmra.mxu0 %v3091
  %v3303 = vpop.f32.mrf.mxu0
  %v3304 = vadd.f32 0.0, %v3303
  %v3305 = vpop.f32.mrf.mxu0
  %v3306 = vpop.f32.mrf.mxu0
  %v3307 = vadd.f32 0.0, %v3306
  %v3308 = vpop.f32.mrf.mxu0
  %3309 = vmatprep.mubr.bf16.mxu0 0
  %3310 = vmatmul.mubr.bf16.gmra.mxu0 %v3094
  %v3311 = vpop.f32.mrf.mxu0
  %v3312 = vadd.f32 0.0, %v3311
  %v3313 = vpop.f32.mrf.mxu0
  %v3314 = vpop.f32.mrf.mxu0
  %v3315 = vadd.f32 0.0, %v3314
  %v3316 = vpop.f32.mrf.mxu0
  %3317 = vmatprep.mubr.bf16.mxu0 0
  %3318 = vmatmul.mubr.bf16.gmra.mxu0 %v3097
  %v3319 = vpop.f32.mrf.mxu0
  %v3320 = vadd.f32 0.0, %v3319
  %v3321 = vpop.f32.mrf.mxu0
  %v3322 = vpop.f32.mrf.mxu0
  %v3323 = vadd.f32 0.0, %v3322
  %v3324 = vpop.f32.mrf.mxu0
  %3325 = vmatprep.mubr.bf16.mxu0 0
  %3326 = vmatmul.mubr.bf16.gmra.mxu0 %v3100
  %v3327 = vpop.f32.mrf.mxu0
  %v3328 = vadd.f32 0.0, %v3327
  %v3329 = vpop.f32.mrf.mxu0
  %v3330 = vpop.f32.mrf.mxu0
  %v3331 = vadd.f32 0.0, %v3330
  %v3332 = vpop.f32.mrf.mxu0
  %3333 = vmatprep.mubr.bf16.mxu0 0
  %3334 = vmatmul.mubr.bf16.gmra.mxu0 %v3103
  %v3335 = vpop.f32.mrf.mxu0
  %v3336 = vadd.f32 0.0, %v3335
  %v3337 = vpop.f32.mrf.mxu0
  %v3338 = vpop.f32.mrf.mxu0
  %v3339 = vadd.f32 0.0, %v3338
  %v3340 = vpop.f32.mrf.mxu0
  %3341 = vmatprep.mubr.bf16.mxu0 0
  %3342 = vmatmul.mubr.bf16.gmra.mxu0 %v3106
  %v3343 = vpop.f32.mrf.mxu0
  %v3344 = vadd.f32 0.0, %v3343
  %v3345 = vpop.f32.mrf.mxu0
  %v3346 = vpop.f32.mrf.mxu0
  %v3347 = vadd.f32 0.0, %v3346
  %v3348 = vpop.f32.mrf.mxu0
  %3349 = vmatprep.mubr.bf16.mxu0 0
  %3350 = vmatmul.mubr.bf16.gmra.mxu0 %v3109
  %v3351 = vpop.f32.mrf.mxu0
  %v3352 = vadd.f32 0.0, %v3351
  %v3353 = vpop.f32.mrf.mxu0
  %v3354 = vpop.f32.mrf.mxu0
  %v3355 = vadd.f32 0.0, %v3354
  %v3356 = vpop.f32.mrf.mxu0
  %3357 = vmatprep.mubr.bf16.mxu0 0
  %3358 = vmatmul.mubr.bf16.gmra.mxu0 %v3112
  %v3359 = vpop.f32.mrf.mxu0
  %v3360 = vadd.f32 0.0, %v3359
  %v3361 = vpop.f32.mrf.mxu0
  %v3362 = vpop.f32.mrf.mxu0
  %v3363 = vadd.f32 0.0, %v3362
  %v3364 = vpop.f32.mrf.mxu0
  %3365 = vmatprep.mubr.bf16.mxu0 0
  %3366 = vmatmul.mubr.bf16.gmra.mxu0 %v3115
  %v3367 = vpop.f32.mrf.mxu0
  %v3368 = vadd.f32 0.0, %v3367
  %v3369 = vpop.f32.mrf.mxu0
  %v3370 = vpop.f32.mrf.mxu0
  %v3371 = vadd.f32 0.0, %v3370
  %v3372 = vpop.f32.mrf.mxu0
  %3373 = vmatprep.mubr.bf16.mxu0 0
  %3374 = vmatmul.mubr.bf16.gmra.mxu0 %v3118
  %v3375 = vpop.f32.mrf.mxu0
  %v3376 = vadd.f32 0.0, %v3375
  %v3377 = vpop.f32.mrf.mxu0
  %v3378 = vpop.f32.mrf.mxu0
  %v3379 = vadd.f32 0.0, %v3378
  %v3380 = vpop.f32.mrf.mxu0
  %3381 = vmatprep.mubr.bf16.mxu0 0
  %3382 = vmatmul.mubr.bf16.gmra.mxu0 %v3121
  %v3383 = vpop.f32.mrf.mxu0
  %v3384 = vadd.f32 0.0, %v3383
  %v3385 = vpop.f32.mrf.mxu0
  %v3386 = vpop.f32.mrf.mxu0
  %v3387 = vadd.f32 0.0, %v3386
  %v3388 = vpop.f32.mrf.mxu0
  %3389 = vmatprep.mubr.bf16.mxu0 0
  %3390 = vmatmul.mubr.bf16.gmra.mxu0 %v3124
  %v3391 = vpop.f32.mrf.mxu0
  %v3392 = vadd.f32 0.0, %v3391
  %v3393 = vpop.f32.mrf.mxu0
  %v3394 = vpop.f32.mrf.mxu0
  %v3395 = vadd.f32 0.0, %v3394
  %v3396 = vpop.f32.mrf.mxu0
  %3397 = vmatprep.mubr.bf16.mxu0 0
  %3398 = vmatmul.mubr.bf16.gmra.mxu0 %v3127
  %v3399 = vpop.f32.mrf.mxu0
  %v3400 = vadd.f32 0.0, %v3399
  %v3401 = vpop.f32.mrf.mxu0
  %v3402 = vpop.f32.mrf.mxu0
  %v3403 = vadd.f32 0.0, %v3402
  %v3404 = vpop.f32.mrf.mxu0
  %3405 = vmatprep.mubr.bf16.mxu0 0
  %3406 = vmatmul.mubr.bf16.gmra.mxu0 %v3130
  %v3407 = vpop.f32.mrf.mxu0
  %v3408 = vadd.f32 0.0, %v3407
  %v3409 = vpop.f32.mrf.mxu0
  %v3410 = vpop.f32.mrf.mxu0
  %v3411 = vadd.f32 0.0, %v3410
  %v3412 = vpop.f32.mrf.mxu0
  %3413 = vmatprep.mubr.bf16.mxu0 0
  %3414 = vmatmul.mubr.bf16.gmra.mxu0 %v3133
  %v3415 = vpop.f32.mrf.mxu0
  %v3416 = vadd.f32 0.0, %v3415
  %v3417 = vpop.f32.mrf.mxu0
  %v3418 = vpop.f32.mrf.mxu0
  %v3419 = vadd.f32 0.0, %v3418
  %v3420 = vpop.f32.mrf.mxu0
  %3421 = vmatprep.mubr.bf16.mxu0 0
  %3422 = vmatmul.mubr.bf16.gmra.mxu0 %v3136
  %v3423 = vpop.f32.mrf.mxu0
  %v3424 = vadd.f32 0.0, %v3423
  %v3425 = vpop.f32.mrf.mxu0
  %v3426 = vpop.f32.mrf.mxu0
  %v3427 = vadd.f32 0.0, %v3426
  %v3428 = vpop.f32.mrf.mxu0
  %3429 = vdwg.mxu0
  %v3430 = vadd.f32 %v2880, %v3176
  %v3431 = vadd.f32 %v2881, %v3179
  %v3432 = vadd.f32 %v2882, %v3184
  %v3433 = vadd.f32 %v2883, %v3187
  %v3434 = vadd.f32 %v2884, %v3192
  %v3435 = vadd.f32 %v2885, %v3195
  %v3436 = vadd.f32 %v2886, %v3200
  %v3437 = vadd.f32 %v2887, %v3203
  %v3438 = vadd.f32 %v2888, %v3208
  %v3439 = vadd.f32 %v2889, %v3211
  %v3440 = vadd.f32 %v2890, %v3216
  %v3441 = vadd.f32 %v2891, %v3219
  %v3442 = vadd.f32 %v2892, %v3224
  %v3443 = vadd.f32 %v2893, %v3227
  %v3444 = vadd.f32 %v2894, %v3232
  %v3445 = vadd.f32 %v2895, %v3235
  %v3446 = vadd.f32 %v2896, %v3240
  %v3447 = vadd.f32 %v2897, %v3243
  %v3448 = vadd.f32 %v2898, %v3248
  %v3449 = vadd.f32 %v2899, %v3251
  %v3450 = vadd.f32 %v2900, %v3256
  %v3451 = vadd.f32 %v2901, %v3259
  %v3452 = vadd.f32 %v2902, %v3264
  %v3453 = vadd.f32 %v2903, %v3267
  %v3454 = vadd.f32 %v2904, %v3272
  %v3455 = vadd.f32 %v2905, %v3275
  %v3456 = vadd.f32 %v2906, %v3280
  %v3457 = vadd.f32 %v2907, %v3283
  %v3458 = vadd.f32 %v2908, %v3288
  %v3459 = vadd.f32 %v2909, %v3291
  %v3460 = vadd.f32 %v2910, %v3296
  %v3461 = vadd.f32 %v2911, %v3299
  %v3462 = vadd.f32 %v2912, %v3304
  %v3463 = vadd.f32 %v2913, %v3307
  %v3464 = vadd.f32 %v2914, %v3312
  %v3465 = vadd.f32 %v2915, %v3315
  %v3466 = vadd.f32 %v2916, %v3320
  %v3467 = vadd.f32 %v2917, %v3323
  %v3468 = vadd.f32 %v2918, %v3328
  %v3469 = vadd.f32 %v2919, %v3331
  %v3470 = vadd.f32 %v2920, %v3336
  %v3471 = vadd.f32 %v2921, %v3339
  %v3472 = vadd.f32 %v2922, %v3344
  %v3473 = vadd.f32 %v2923, %v3347
  %v3474 = vadd.f32 %v2924, %v3352
  %v3475 = vadd.f32 %v2925, %v3355
  %v3476 = vadd.f32 %v2926, %v3360
  %v3477 = vadd.f32 %v2927, %v3363
  %v3478 = vadd.f32 %v2928, %v3368
  %v3479 = vadd.f32 %v2929, %v3371
  %v3480 = vadd.f32 %v2930, %v3376
  %v3481 = vadd.f32 %v2931, %v3379
  %v3482 = vadd.f32 %v2932, %v3384
  %v3483 = vadd.f32 %v2933, %v3387
  %v3484 = vadd.f32 %v2934, %v3392
  %v3485 = vadd.f32 %v2935, %v3395
  %v3486 = vadd.f32 %v2936, %v3400
  %v3487 = vadd.f32 %v2937, %v3403
  %v3488 = vadd.f32 %v2938, %v3408
  %v3489 = vadd.f32 %v2939, %v3411
  %v3490 = vadd.f32 %v2940, %v3416
  %v3491 = vadd.f32 %v2941, %v3419
  %v3492 = vadd.f32 %v2942, %v3424
  %v3493 = vadd.f32 %v2943, %v3427
  %v3494 = vld [vmem:[%s719 + $0x2] sm:$0xff]
  %v3495 = vld [vmem:[%s719 + $0xa] sm:$0xff]
  %v3496 = vld [vmem:[%s719 + $0x1a] sm:$0xff]
  %v3497 = vld [vmem:[%s719 + $0x22] sm:$0xff]
  %v3498 = vld [vmem:[%s719 + $0x32] sm:$0xff]
  %v3499 = vld [vmem:[%s719 + $0x3a] sm:$0xff]
  %v3500 = vld [vmem:[%s719 + $0x4a] sm:$0xff]
  %v3501 = vld [vmem:[%s719 + $0x52] sm:$0xff]
  %v3502 = vld [vmem:[%s719 + $0x62] sm:$0xff]
  %v3503 = vld [vmem:[%s719 + $0x6a] sm:$0xff]
  %v3504 = vld [vmem:[%s719 + $0x7a] sm:$0xff]
  %v3505 = vld [vmem:[%s719 + $0x82] sm:$0xff]
  %v3506 = vld [vmem:[%s719 + $0x92] sm:$0xff]
  %v3507 = vld [vmem:[%s719 + $0x9a] sm:$0xff]
  %v3508 = vld [vmem:[%s719 + $0xaa] sm:$0xff]
  %v3509 = vld [vmem:[%s719 + $0xb2] sm:$0xff]
  %v3510 = vld [vmem:[%s719 + $0xc2] sm:$0xff]
  %v3511 = vld [vmem:[%s719 + $0xca] sm:$0xff]
  %v3512 = vld [vmem:[%s719 + $0xda] sm:$0xff]
  %v3513 = vld [vmem:[%s719 + $0xe2] sm:$0xff]
  %v3514 = vld [vmem:[%s719 + $0xf2] sm:$0xff]
  %v3515 = vld [vmem:[%s719 + $0xfa] sm:$0xff]
  %v3516 = vld [vmem:[%s719 + $0x10a] sm:$0xff]
  %v3517 = vld [vmem:[%s719 + $0x112] sm:$0xff]
  %v3518 = vld [vmem:[%s719 + $0x122] sm:$0xff]
  %v3519 = vld [vmem:[%s719 + $0x12a] sm:$0xff]
  %v3520 = vld [vmem:[%s719 + $0x13a] sm:$0xff]
  %v3521 = vld [vmem:[%s719 + $0x142] sm:$0xff]
  %v3522 = vld [vmem:[%s719 + $0x152] sm:$0xff]
  %v3523 = vld [vmem:[%s719 + $0x15a] sm:$0xff]
  %v3524 = vld [vmem:[%s719 + $0x16a] sm:$0xff]
  %v3525 = vld [vmem:[%s719 + $0x172] sm:$0xff]
  %v3526 = vld [vmem:[%s719 + $0x1b2] sm:$0xff]
  %v3527 = vld [vmem:[%s719 + $0x1ba] sm:$0xff]
  %v3528 = vld [vmem:[%s719 + $0x1ca] sm:$0xff]
  %v3529 = vld [vmem:[%s719 + $0x1d2] sm:$0xff]
  %v3530 = vld [vmem:[%s719 + $0x1e2] sm:$0xff]
  %v3531 = vld [vmem:[%s719 + $0x1ea] sm:$0xff]
  %v3532 = vld [vmem:[%s719 + $0x1fa] sm:$0xff]
  %v3533 = vld [vmem:[%s719 + $0x202] sm:$0xff]
  %v3534 = vld [vmem:[%s719 + $0x212] sm:$0xff]
  %v3535 = vld [vmem:[%s719 + $0x21a] sm:$0xff]
  %v3536 = vld [vmem:[%s719 + $0x22a] sm:$0xff]
  %v3537 = vld [vmem:[%s719 + $0x232] sm:$0xff]
  %v3538 = vld [vmem:[%s719 + $0x242] sm:$0xff]
  %v3539 = vld [vmem:[%s719 + $0x24a] sm:$0xff]
  %v3540 = vld [vmem:[%s719 + $0x25a] sm:$0xff]
  %v3541 = vld [vmem:[%s719 + $0x262] sm:$0xff]
  %v3542 = vld [vmem:[%s719 + $0x272] sm:$0xff]
  %v3543 = vld [vmem:[%s719 + $0x27a] sm:$0xff]
  %v3544 = vld [vmem:[%s719 + $0x28a] sm:$0xff]
  %v3545 = vld [vmem:[%s719 + $0x292] sm:$0xff]
  %v3546 = vld [vmem:[%s719 + $0x2a2] sm:$0xff]
  %v3547 = vld [vmem:[%s719 + $0x2aa] sm:$0xff]
  %v3548 = vld [vmem:[%s719 + $0x2ba] sm:$0xff]
  %v3549 = vld [vmem:[%s719 + $0x2c2] sm:$0xff]
  %v3550 = vld [vmem:[%s719 + $0x2d2] sm:$0xff]
  %v3551 = vld [vmem:[%s719 + $0x2da] sm:$0xff]
  %v3552 = vld [vmem:[%s719 + $0x2ea] sm:$0xff]
  %v3553 = vld [vmem:[%s719 + $0x2f2] sm:$0xff]
  %v3554 = vld [vmem:[%s719 + $0x302] sm:$0xff]
  %v3555 = vld [vmem:[%s719 + $0x30a] sm:$0xff]
  %v3556 = vld [vmem:[%s719 + $0x31a] sm:$0xff]
  %v3557 = vld [vmem:[%s719 + $0x322] sm:$0xff]
  %v3558 = vpack.c.bf16 %v3495, %v3494
  %v3559 = vpack.c.bf16 %v3497, %v3496
  %v3560 = vpack.c.bf16 %v3499, %v3498
  %v3561 = vpack.c.bf16 %v3501, %v3500
  %v3562 = vpack.c.bf16 %v3503, %v3502
  %v3563 = vpack.c.bf16 %v3505, %v3504
  %v3564 = vpack.c.bf16 %v3507, %v3506
  %v3565 = vpack.c.bf16 %v3509, %v3508
  %v3566 = vpack.c.bf16 %v3511, %v3510
  %v3567 = vpack.c.bf16 %v3513, %v3512
  %v3568 = vpack.c.bf16 %v3515, %v3514
  %v3569 = vpack.c.bf16 %v3517, %v3516
  %v3570 = vpack.c.bf16 %v3519, %v3518
  %v3571 = vpack.c.bf16 %v3521, %v3520
  %v3572 = vpack.c.bf16 %v3523, %v3522
  %v3573 = vpack.c.bf16 %v3525, %v3524
  %v3574 = vpack.c.bf16 %v3527, %v3526
  %v3575 = vpack.c.bf16 %v3529, %v3528
  %v3576 = vpack.c.bf16 %v3531, %v3530
  %v3577 = vpack.c.bf16 %v3533, %v3532
  %v3578 = vpack.c.bf16 %v3535, %v3534
  %v3579 = vpack.c.bf16 %v3537, %v3536
  %v3580 = vpack.c.bf16 %v3539, %v3538
  %v3581 = vpack.c.bf16 %v3541, %v3540
  %v3582 = vpack.c.bf16 %v3543, %v3542
  %v3583 = vpack.c.bf16 %v3545, %v3544
  %v3584 = vpack.c.bf16 %v3547, %v3546
  %v3585 = vpack.c.bf16 %v3549, %v3548
  %v3586 = vpack.c.bf16 %v3551, %v3550
  %v3587 = vpack.c.bf16 %v3553, %v3552
  %v3588 = vpack.c.bf16 %v3555, %v3554
  %v3589 = vpack.c.bf16 %v3557, %v3556
  %s3590 = scalar_lea.vmem %s2, 20
  %v3591 = vld [vmem:[%s3590] sm:$0xf]
  %v3593 = vsel %vm720, %v3558, 0
  %v3596 = vsel %vm720, %v3559, 0
  %v3599 = vsel %vm720, %v3560, 0
  %v3602 = vsel %vm720, %v3561, 0
  %v3605 = vsel %vm720, %v3562, 0
  %v3608 = vsel %vm720, %v3563, 0
  %v3611 = vsel %vm720, %v3564, 0
  %v3614 = vsel %vm720, %v3565, 0
  %v3617 = vsel %vm720, %v3566, 0
  %v3620 = vsel %vm720, %v3567, 0
  %v3623 = vsel %vm720, %v3568, 0
  %v3626 = vsel %vm720, %v3569, 0
  %v3629 = vsel %vm720, %v3570, 0
  %v3632 = vsel %vm720, %v3571, 0
  %v3635 = vsel %vm720, %v3572, 0
  %v3638 = vsel %vm720, %v3573, 0
  %v3641 = vsel %vm720, %v3574, 0
  %v3644 = vsel %vm720, %v3575, 0
  %v3647 = vsel %vm720, %v3576, 0
  %v3650 = vsel %vm720, %v3577, 0
  %v3653 = vsel %vm720, %v3578, 0
  %v3656 = vsel %vm720, %v3579, 0
  %v3659 = vsel %vm720, %v3580, 0
  %v3662 = vsel %vm720, %v3581, 0
  %v3665 = vsel %vm720, %v3582, 0
  %v3668 = vsel %vm720, %v3583, 0
  %v3671 = vsel %vm720, %v3584, 0
  %v3674 = vsel %vm720, %v3585, 0
  %v3677 = vsel %vm720, %v3586, 0
  %v3680 = vsel %vm720, %v3587, 0
  %v3683 = vsel %vm720, %v3588, 0
  %v3686 = vsel %vm720, %v3589, 0
  %v3689 = vsel %vm1163, %v3591, 0
  %3691 = vmatprep.subr.bf16.mxu0 0
  %3692 = vmatpush1.bf16.msra.mxu0 0
  %3693 = vmatprep.subr.bf16.mxu0 0
  %3694 = vmatpush1.bf16.msra.mxu0 0
  %3695 = vmatprep.subr.bf16.mxu0 0
  %3696 = vmatpush1.bf16.msra.mxu0 0
  %3697 = vmatprep.subr.bf16.mxu0 0
  %3698 = vmatpush1.bf16.msra.mxu0 0
  %3699 = vmatprep.subr.bf16.mxu0 0
  %3700 = vmatpush1.bf16.msra.mxu0 0
  %3701 = vmatprep.subr.bf16.mxu0 0
  %3702 = vmatpush1.bf16.msra.mxu0 0
  %3703 = vmatprep.subr.bf16.mxu0 0
  %3704 = vmatpush1.bf16.msra.mxu0 0
  %3705 = vmatprep.subr.bf16.mxu0 0
  %3706 = vmatpush1.bf16.msra.mxu0 %v3689
  %3707 = vmatprep.subr.bf16.mxu0 0
  %3708 = vmatpush2.bf16.msra.mxu0 0
  %3709 = vmatprep.subr.bf16.mxu0 0
  %3710 = vmatpush2.bf16.msra.mxu0 0
  %3711 = vmatprep.subr.bf16.mxu0 0
  %3712 = vmatpush2.bf16.msra.mxu0 0
  %3713 = vmatprep.subr.bf16.mxu0 0
  %3714 = vmatpush2.bf16.msra.mxu0 0
  %3715 = vmatprep.subr.bf16.mxu0 0
  %3716 = vmatpush2.bf16.msra.mxu0 0
  %3717 = vmatprep.subr.bf16.mxu0 0
  %3718 = vmatpush2.bf16.msra.mxu0 0
  %3719 = vmatprep.subr.bf16.mxu0 0
  %3720 = vmatpush2.bf16.msra.mxu0 0
  %3721 = vmatprep.subr.bf16.mxu0 0
  %3722 = vmatpush2.bf16.msra.mxu0 0
  %3723 = vmatprep.mubr.bf16.mxu0 0
  %3724 = vmatmul.mubr.bf16.gmra.mxu0 %v3593
  %v3725 = vpop.f32.mrf.mxu0
  %v3726 = vadd.f32 0.0, %v3725
  %v3727 = vpop.f32.mrf.mxu0
  %v3728 = vpop.f32.mrf.mxu0
  %v3729 = vadd.f32 0.0, %v3728
  %v3730 = vpop.f32.mrf.mxu0
  %3731 = vmatprep.mubr.bf16.mxu0 0
  %3732 = vmatmul.mubr.bf16.gmra.mxu0 %v3596
  %v3733 = vpop.f32.mrf.mxu0
  %v3734 = vadd.f32 0.0, %v3733
  %v3735 = vpop.f32.mrf.mxu0
  %v3736 = vpop.f32.mrf.mxu0
  %v3737 = vadd.f32 0.0, %v3736
  %v3738 = vpop.f32.mrf.mxu0
  %3739 = vmatprep.mubr.bf16.mxu0 0
  %3740 = vmatmul.mubr.bf16.gmra.mxu0 %v3599
  %v3741 = vpop.f32.mrf.mxu0
  %v3742 = vadd.f32 0.0, %v3741
  %v3743 = vpop.f32.mrf.mxu0
  %v3744 = vpop.f32.mrf.mxu0
  %v3745 = vadd.f32 0.0, %v3744
  %v3746 = vpop.f32.mrf.mxu0
  %3747 = vmatprep.mubr.bf16.mxu0 0
  %3748 = vmatmul.mubr.bf16.gmra.mxu0 %v3602
  %v3749 = vpop.f32.mrf.mxu0
  %v3750 = vadd.f32 0.0, %v3749
  %v3751 = vpop.f32.mrf.mxu0
  %v3752 = vpop.f32.mrf.mxu0
  %v3753 = vadd.f32 0.0, %v3752
  %v3754 = vpop.f32.mrf.mxu0
  %3755 = vmatprep.mubr.bf16.mxu0 0
  %3756 = vmatmul.mubr.bf16.gmra.mxu0 %v3605
  %v3757 = vpop.f32.mrf.mxu0
  %v3758 = vadd.f32 0.0, %v3757
  %v3759 = vpop.f32.mrf.mxu0
  %v3760 = vpop.f32.mrf.mxu0
  %v3761 = vadd.f32 0.0, %v3760
  %v3762 = vpop.f32.mrf.mxu0
  %3763 = vmatprep.mubr.bf16.mxu0 0
  %3764 = vmatmul.mubr.bf16.gmra.mxu0 %v3608
  %v3765 = vpop.f32.mrf.mxu0
  %v3766 = vadd.f32 0.0, %v3765
  %v3767 = vpop.f32.mrf.mxu0
  %v3768 = vpop.f32.mrf.mxu0
  %v3769 = vadd.f32 0.0, %v3768
  %v3770 = vpop.f32.mrf.mxu0
  %3771 = vmatprep.mubr.bf16.mxu0 0
  %3772 = vmatmul.mubr.bf16.gmra.mxu0 %v3611
  %v3773 = vpop.f32.mrf.mxu0
  %v3774 = vadd.f32 0.0, %v3773
  %v3775 = vpop.f32.mrf.mxu0
  %v3776 = vpop.f32.mrf.mxu0
  %v3777 = vadd.f32 0.0, %v3776
  %v3778 = vpop.f32.mrf.mxu0
  %3779 = vmatprep.mubr.bf16.mxu0 0
  %3780 = vmatmul.mubr.bf16.gmra.mxu0 %v3614
  %v3781 = vpop.f32.mrf.mxu0
  %v3782 = vadd.f32 0.0, %v3781
  %v3783 = vpop.f32.mrf.mxu0
  %v3784 = vpop.f32.mrf.mxu0
  %v3785 = vadd.f32 0.0, %v3784
  %v3786 = vpop.f32.mrf.mxu0
  %3787 = vmatprep.mubr.bf16.mxu0 0
  %3788 = vmatmul.mubr.bf16.gmra.mxu0 %v3617
  %v3789 = vpop.f32.mrf.mxu0
  %v3790 = vadd.f32 0.0, %v3789
  %v3791 = vpop.f32.mrf.mxu0
  %v3792 = vpop.f32.mrf.mxu0
  %v3793 = vadd.f32 0.0, %v3792
  %v3794 = vpop.f32.mrf.mxu0
  %3795 = vmatprep.mubr.bf16.mxu0 0
  %3796 = vmatmul.mubr.bf16.gmra.mxu0 %v3620
  %v3797 = vpop.f32.mrf.mxu0
  %v3798 = vadd.f32 0.0, %v3797
  %v3799 = vpop.f32.mrf.mxu0
  %v3800 = vpop.f32.mrf.mxu0
  %v3801 = vadd.f32 0.0, %v3800
  %v3802 = vpop.f32.mrf.mxu0
  %3803 = vmatprep.mubr.bf16.mxu0 0
  %3804 = vmatmul.mubr.bf16.gmra.mxu0 %v3623
  %v3805 = vpop.f32.mrf.mxu0
  %v3806 = vadd.f32 0.0, %v3805
  %v3807 = vpop.f32.mrf.mxu0
  %v3808 = vpop.f32.mrf.mxu0
  %v3809 = vadd.f32 0.0, %v3808
  %v3810 = vpop.f32.mrf.mxu0
  %3811 = vmatprep.mubr.bf16.mxu0 0
  %3812 = vmatmul.mubr.bf16.gmra.mxu0 %v3626
  %v3813 = vpop.f32.mrf.mxu0
  %v3814 = vadd.f32 0.0, %v3813
  %v3815 = vpop.f32.mrf.mxu0
  %v3816 = vpop.f32.mrf.mxu0
  %v3817 = vadd.f32 0.0, %v3816
  %v3818 = vpop.f32.mrf.mxu0
  %3819 = vmatprep.mubr.bf16.mxu0 0
  %3820 = vmatmul.mubr.bf16.gmra.mxu0 %v3629
  %v3821 = vpop.f32.mrf.mxu0
  %v3822 = vadd.f32 0.0, %v3821
  %v3823 = vpop.f32.mrf.mxu0
  %v3824 = vpop.f32.mrf.mxu0
  %v3825 = vadd.f32 0.0, %v3824
  %v3826 = vpop.f32.mrf.mxu0
  %3827 = vmatprep.mubr.bf16.mxu0 0
  %3828 = vmatmul.mubr.bf16.gmra.mxu0 %v3632
  %v3829 = vpop.f32.mrf.mxu0
  %v3830 = vadd.f32 0.0, %v3829
  %v3831 = vpop.f32.mrf.mxu0
  %v3832 = vpop.f32.mrf.mxu0
  %v3833 = vadd.f32 0.0, %v3832
  %v3834 = vpop.f32.mrf.mxu0
  %3835 = vmatprep.mubr.bf16.mxu0 0
  %3836 = vmatmul.mubr.bf16.gmra.mxu0 %v3635
  %v3837 = vpop.f32.mrf.mxu0
  %v3838 = vadd.f32 0.0, %v3837
  %v3839 = vpop.f32.mrf.mxu0
  %v3840 = vpop.f32.mrf.mxu0
  %v3841 = vadd.f32 0.0, %v3840
  %v3842 = vpop.f32.mrf.mxu0
  %3843 = vmatprep.mubr.bf16.mxu0 0
  %3844 = vmatmul.mubr.bf16.gmra.mxu0 %v3638
  %v3845 = vpop.f32.mrf.mxu0
  %v3846 = vadd.f32 0.0, %v3845
  %v3847 = vpop.f32.mrf.mxu0
  %v3848 = vpop.f32.mrf.mxu0
  %v3849 = vadd.f32 0.0, %v3848
  %v3850 = vpop.f32.mrf.mxu0
  %3851 = vmatprep.mubr.bf16.mxu0 0
  %3852 = vmatmul.mubr.bf16.gmra.mxu0 %v3641
  %v3853 = vpop.f32.mrf.mxu0
  %v3854 = vadd.f32 0.0, %v3853
  %v3855 = vpop.f32.mrf.mxu0
  %v3856 = vpop.f32.mrf.mxu0
  %v3857 = vadd.f32 0.0, %v3856
  %v3858 = vpop.f32.mrf.mxu0
  %3859 = vmatprep.mubr.bf16.mxu0 0
  %3860 = vmatmul.mubr.bf16.gmra.mxu0 %v3644
  %v3861 = vpop.f32.mrf.mxu0
  %v3862 = vadd.f32 0.0, %v3861
  %v3863 = vpop.f32.mrf.mxu0
  %v3864 = vpop.f32.mrf.mxu0
  %v3865 = vadd.f32 0.0, %v3864
  %v3866 = vpop.f32.mrf.mxu0
  %3867 = vmatprep.mubr.bf16.mxu0 0
  %3868 = vmatmul.mubr.bf16.gmra.mxu0 %v3647
  %v3869 = vpop.f32.mrf.mxu0
  %v3870 = vadd.f32 0.0, %v3869
  %v3871 = vpop.f32.mrf.mxu0
  %v3872 = vpop.f32.mrf.mxu0
  %v3873 = vadd.f32 0.0, %v3872
  %v3874 = vpop.f32.mrf.mxu0
  %3875 = vmatprep.mubr.bf16.mxu0 0
  %3876 = vmatmul.mubr.bf16.gmra.mxu0 %v3650
  %v3877 = vpop.f32.mrf.mxu0
  %v3878 = vadd.f32 0.0, %v3877
  %v3879 = vpop.f32.mrf.mxu0
  %v3880 = vpop.f32.mrf.mxu0
  %v3881 = vadd.f32 0.0, %v3880
  %v3882 = vpop.f32.mrf.mxu0
  %3883 = vmatprep.mubr.bf16.mxu0 0
  %3884 = vmatmul.mubr.bf16.gmra.mxu0 %v3653
  %v3885 = vpop.f32.mrf.mxu0
  %v3886 = vadd.f32 0.0, %v3885
  %v3887 = vpop.f32.mrf.mxu0
  %v3888 = vpop.f32.mrf.mxu0
  %v3889 = vadd.f32 0.0, %v3888
  %v3890 = vpop.f32.mrf.mxu0
  %3891 = vmatprep.mubr.bf16.mxu0 0
  %3892 = vmatmul.mubr.bf16.gmra.mxu0 %v3656
  %v3893 = vpop.f32.mrf.mxu0
  %v3894 = vadd.f32 0.0, %v3893
  %v3895 = vpop.f32.mrf.mxu0
  %v3896 = vpop.f32.mrf.mxu0
  %v3897 = vadd.f32 0.0, %v3896
  %v3898 = vpop.f32.mrf.mxu0
  %3899 = vmatprep.mubr.bf16.mxu0 0
  %3900 = vmatmul.mubr.bf16.gmra.mxu0 %v3659
  %v3901 = vpop.f32.mrf.mxu0
  %v3902 = vadd.f32 0.0, %v3901
  %v3903 = vpop.f32.mrf.mxu0
  %v3904 = vpop.f32.mrf.mxu0
  %v3905 = vadd.f32 0.0, %v3904
  %v3906 = vpop.f32.mrf.mxu0
  %3907 = vmatprep.mubr.bf16.mxu0 0
  %3908 = vmatmul.mubr.bf16.gmra.mxu0 %v3662
  %v3909 = vpop.f32.mrf.mxu0
  %v3910 = vadd.f32 0.0, %v3909
  %v3911 = vpop.f32.mrf.mxu0
  %v3912 = vpop.f32.mrf.mxu0
  %v3913 = vadd.f32 0.0, %v3912
  %v3914 = vpop.f32.mrf.mxu0
  %3915 = vmatprep.mubr.bf16.mxu0 0
  %3916 = vmatmul.mubr.bf16.gmra.mxu0 %v3665
  %v3917 = vpop.f32.mrf.mxu0
  %v3918 = vadd.f32 0.0, %v3917
  %v3919 = vpop.f32.mrf.mxu0
  %v3920 = vpop.f32.mrf.mxu0
  %v3921 = vadd.f32 0.0, %v3920
  %v3922 = vpop.f32.mrf.mxu0
  %3923 = vmatprep.mubr.bf16.mxu0 0
  %3924 = vmatmul.mubr.bf16.gmra.mxu0 %v3668
  %v3925 = vpop.f32.mrf.mxu0
  %v3926 = vadd.f32 0.0, %v3925
  %v3927 = vpop.f32.mrf.mxu0
  %v3928 = vpop.f32.mrf.mxu0
  %v3929 = vadd.f32 0.0, %v3928
  %v3930 = vpop.f32.mrf.mxu0
  %3931 = vmatprep.mubr.bf16.mxu0 0
  %3932 = vmatmul.mubr.bf16.gmra.mxu0 %v3671
  %v3933 = vpop.f32.mrf.mxu0
  %v3934 = vadd.f32 0.0, %v3933
  %v3935 = vpop.f32.mrf.mxu0
  %v3936 = vpop.f32.mrf.mxu0
  %v3937 = vadd.f32 0.0, %v3936
  %v3938 = vpop.f32.mrf.mxu0
  %3939 = vmatprep.mubr.bf16.mxu0 0
  %3940 = vmatmul.mubr.bf16.gmra.mxu0 %v3674
  %v3941 = vpop.f32.mrf.mxu0
  %v3942 = vadd.f32 0.0, %v3941
  %v3943 = vpop.f32.mrf.mxu0
  %v3944 = vpop.f32.mrf.mxu0
  %v3945 = vadd.f32 0.0, %v3944
  %v3946 = vpop.f32.mrf.mxu0
  %3947 = vmatprep.mubr.bf16.mxu0 0
  %3948 = vmatmul.mubr.bf16.gmra.mxu0 %v3677
  %v3949 = vpop.f32.mrf.mxu0
  %v3950 = vadd.f32 0.0, %v3949
  %v3951 = vpop.f32.mrf.mxu0
  %v3952 = vpop.f32.mrf.mxu0
  %v3953 = vadd.f32 0.0, %v3952
  %v3954 = vpop.f32.mrf.mxu0
  %3955 = vmatprep.mubr.bf16.mxu0 0
  %3956 = vmatmul.mubr.bf16.gmra.mxu0 %v3680
  %v3957 = vpop.f32.mrf.mxu0
  %v3958 = vadd.f32 0.0, %v3957
  %v3959 = vpop.f32.mrf.mxu0
  %v3960 = vpop.f32.mrf.mxu0
  %v3961 = vadd.f32 0.0, %v3960
  %v3962 = vpop.f32.mrf.mxu0
  %3963 = vmatprep.mubr.bf16.mxu0 0
  %3964 = vmatmul.mubr.bf16.gmra.mxu0 %v3683
  %v3965 = vpop.f32.mrf.mxu0
  %v3966 = vadd.f32 0.0, %v3965
  %v3967 = vpop.f32.mrf.mxu0
  %v3968 = vpop.f32.mrf.mxu0
  %v3969 = vadd.f32 0.0, %v3968
  %v3970 = vpop.f32.mrf.mxu0
  %3971 = vmatprep.mubr.bf16.mxu0 0
  %3972 = vmatmul.mubr.bf16.gmra.mxu0 %v3686
  %v3973 = vpop.f32.mrf.mxu0
  %v3974 = vadd.f32 0.0, %v3973
  %v3975 = vpop.f32.mrf.mxu0
  %v3976 = vpop.f32.mrf.mxu0
  %v3977 = vadd.f32 0.0, %v3976
  %v3978 = vpop.f32.mrf.mxu0
  %3979 = vdwg.mxu0
  %v3980 = vadd.f32 %v3430, %v3726
  %v3981 = vadd.f32 %v3431, %v3729
  %v3982 = vadd.f32 %v3432, %v3734
  %v3983 = vadd.f32 %v3433, %v3737
  %v3984 = vadd.f32 %v3434, %v3742
  %v3985 = vadd.f32 %v3435, %v3745
  %v3986 = vadd.f32 %v3436, %v3750
  %v3987 = vadd.f32 %v3437, %v3753
  %v3988 = vadd.f32 %v3438, %v3758
  %v3989 = vadd.f32 %v3439, %v3761
  %v3990 = vadd.f32 %v3440, %v3766
  %v3991 = vadd.f32 %v3441, %v3769
  %v3992 = vadd.f32 %v3442, %v3774
  %v3993 = vadd.f32 %v3443, %v3777
  %v3994 = vadd.f32 %v3444, %v3782
  %v3995 = vadd.f32 %v3445, %v3785
  %v3996 = vadd.f32 %v3446, %v3790
  %v3997 = vadd.f32 %v3447, %v3793
  %v3998 = vadd.f32 %v3448, %v3798
  %v3999 = vadd.f32 %v3449, %v3801
  %v4000 = vadd.f32 %v3450, %v3806
  %v4001 = vadd.f32 %v3451, %v3809
  %v4002 = vadd.f32 %v3452, %v3814
  %v4003 = vadd.f32 %v3453, %v3817
  %v4004 = vadd.f32 %v3454, %v3822
  %v4005 = vadd.f32 %v3455, %v3825
  %v4006 = vadd.f32 %v3456, %v3830
  %v4007 = vadd.f32 %v3457, %v3833
  %v4008 = vadd.f32 %v3458, %v3838
  %v4009 = vadd.f32 %v3459, %v3841
  %v4010 = vadd.f32 %v3460, %v3846
  %v4011 = vadd.f32 %v3461, %v3849
  %v4012 = vadd.f32 %v3462, %v3854
  %v4013 = vadd.f32 %v3463, %v3857
  %v4014 = vadd.f32 %v3464, %v3862
  %v4015 = vadd.f32 %v3465, %v3865
  %v4016 = vadd.f32 %v3466, %v3870
  %v4017 = vadd.f32 %v3467, %v3873
  %v4018 = vadd.f32 %v3468, %v3878
  %v4019 = vadd.f32 %v3469, %v3881
  %v4020 = vadd.f32 %v3470, %v3886
  %v4021 = vadd.f32 %v3471, %v3889
  %v4022 = vadd.f32 %v3472, %v3894
  %v4023 = vadd.f32 %v3473, %v3897
  %v4024 = vadd.f32 %v3474, %v3902
  %v4025 = vadd.f32 %v3475, %v3905
  %v4026 = vadd.f32 %v3476, %v3910
  %v4027 = vadd.f32 %v3477, %v3913
  %v4028 = vadd.f32 %v3478, %v3918
  %v4029 = vadd.f32 %v3479, %v3921
  %v4030 = vadd.f32 %v3480, %v3926
  %v4031 = vadd.f32 %v3481, %v3929
  %v4032 = vadd.f32 %v3482, %v3934
  %v4033 = vadd.f32 %v3483, %v3937
  %v4034 = vadd.f32 %v3484, %v3942
  %v4035 = vadd.f32 %v3485, %v3945
  %v4036 = vadd.f32 %v3486, %v3950
  %v4037 = vadd.f32 %v3487, %v3953
  %v4038 = vadd.f32 %v3488, %v3958
  %v4039 = vadd.f32 %v3489, %v3961
  %v4040 = vadd.f32 %v3490, %v3966
  %v4041 = vadd.f32 %v3491, %v3969
  %v4042 = vadd.f32 %v3492, %v3974
  %v4043 = vadd.f32 %v3493, %v3977
  %s4044 = scalar_lea.vmem [#allocation2], 48
  %v4045 = vld [vmem:[%s4044] sm:$0xff]
  %v4046 = vld [vmem:[%s4044 + $0x8] sm:$0xff]
  %v4047 = vld [vmem:[%s4044 + $0x18] sm:$0xff]
  %v4048 = vld [vmem:[%s4044 + $0x20] sm:$0xff]
  %v4049 = vld [vmem:[%s4044 + $0x30] sm:$0xff]
  %v4050 = vld [vmem:[%s4044 + $0x38] sm:$0xff]
  %v4051 = vld [vmem:[%s4044 + $0x48] sm:$0xff]
  %v4052 = vld [vmem:[%s4044 + $0x50] sm:$0xff]
  %v4053 = vld [vmem:[%s4044 + $0x60] sm:$0xff]
  %v4054 = vld [vmem:[%s4044 + $0x68] sm:$0xff]
  %v4055 = vld [vmem:[%s4044 + $0x78] sm:$0xff]
  %v4056 = vld [vmem:[%s4044 + $0x80] sm:$0xff]
  %v4057 = vld [vmem:[%s4044 + $0x90] sm:$0xff]
  %v4058 = vld [vmem:[%s4044 + $0x98] sm:$0xff]
  %v4059 = vld [vmem:[%s4044 + $0xa8] sm:$0xff]
  %v4060 = vld [vmem:[%s4044 + $0xb0] sm:$0xff]
  %v4061 = vld [vmem:[%s4044 + $0xc0] sm:$0xff]
  %v4062 = vld [vmem:[%s4044 + $0xc8] sm:$0xff]
  %v4063 = vld [vmem:[%s4044 + $0xd8] sm:$0xff]
  %v4064 = vld [vmem:[%s4044 + $0xe0] sm:$0xff]
  %v4065 = vld [vmem:[%s4044 + $0xf0] sm:$0xff]
  %v4066 = vld [vmem:[%s4044 + $0xf8] sm:$0xff]
  %v4067 = vld [vmem:[%s4044 + $0x108] sm:$0xff]
  %v4068 = vld [vmem:[%s4044 + $0x110] sm:$0xff]
  %v4069 = vld [vmem:[%s4044 + $0x120] sm:$0xff]
  %v4070 = vld [vmem:[%s4044 + $0x128] sm:$0xff]
  %v4071 = vld [vmem:[%s4044 + $0x138] sm:$0xff]
  %v4072 = vld [vmem:[%s4044 + $0x140] sm:$0xff]
  %v4073 = vld [vmem:[%s4044 + $0x150] sm:$0xff]
  %v4074 = vld [vmem:[%s4044 + $0x158] sm:$0xff]
  %v4075 = vld [vmem:[%s4044 + $0x168] sm:$0xff]
  %v4076 = vld [vmem:[%s4044 + $0x170] sm:$0xff]
  %v4077 = vld [vmem:[%s4044 + $0x1b0] sm:$0xff]
  %v4078 = vld [vmem:[%s4044 + $0x1b8] sm:$0xff]
  %v4079 = vld [vmem:[%s4044 + $0x1c8] sm:$0xff]
  %v4080 = vld [vmem:[%s4044 + $0x1d0] sm:$0xff]
  %v4081 = vld [vmem:[%s4044 + $0x1e0] sm:$0xff]
  %v4082 = vld [vmem:[%s4044 + $0x1e8] sm:$0xff]
  %v4083 = vld [vmem:[%s4044 + $0x1f8] sm:$0xff]
  %v4084 = vld [vmem:[%s4044 + $0x200] sm:$0xff]
  %v4085 = vld [vmem:[%s4044 + $0x210] sm:$0xff]
  %v4086 = vld [vmem:[%s4044 + $0x218] sm:$0xff]
  %v4087 = vld [vmem:[%s4044 + $0x228] sm:$0xff]
  %v4088 = vld [vmem:[%s4044 + $0x230] sm:$0xff]
  %v4089 = vld [vmem:[%s4044 + $0x240] sm:$0xff]
  %v4090 = vld [vmem:[%s4044 + $0x248] sm:$0xff]
  %v4091 = vld [vmem:[%s4044 + $0x258] sm:$0xff]
  %v4092 = vld [vmem:[%s4044 + $0x260] sm:$0xff]
  %v4093 = vld [vmem:[%s4044 + $0x270] sm:$0xff]
  %v4094 = vld [vmem:[%s4044 + $0x278] sm:$0xff]
  %v4095 = vld [vmem:[%s4044 + $0x288] sm:$0xff]
  %v4096 = vld [vmem:[%s4044 + $0x290] sm:$0xff]
  %v4097 = vld [vmem:[%s4044 + $0x2a0] sm:$0xff]
  %v4098 = vld [vmem:[%s4044 + $0x2a8] sm:$0xff]
  %v4099 = vld [vmem:[%s4044 + $0x2b8] sm:$0xff]
  %v4100 = vld [vmem:[%s4044 + $0x2c0] sm:$0xff]
  %v4101 = vld [vmem:[%s4044 + $0x2d0] sm:$0xff]
  %v4102 = vld [vmem:[%s4044 + $0x2d8] sm:$0xff]
  %v4103 = vld [vmem:[%s4044 + $0x2e8] sm:$0xff]
  %v4104 = vld [vmem:[%s4044 + $0x2f0] sm:$0xff]
  %v4105 = vld [vmem:[%s4044 + $0x300] sm:$0xff]
  %v4106 = vld [vmem:[%s4044 + $0x308] sm:$0xff]
  %v4107 = vld [vmem:[%s4044 + $0x318] sm:$0xff]
  %v4108 = vld [vmem:[%s4044 + $0x320] sm:$0xff]
  %v4109 = vpack.c.bf16 %v4046, %v4045
  %v4110 = vpack.c.bf16 %v4048, %v4047
  %v4111 = vpack.c.bf16 %v4050, %v4049
  %v4112 = vpack.c.bf16 %v4052, %v4051
  %v4113 = vpack.c.bf16 %v4054, %v4053
  %v4114 = vpack.c.bf16 %v4056, %v4055
  %v4115 = vpack.c.bf16 %v4058, %v4057
  %v4116 = vpack.c.bf16 %v4060, %v4059
  %v4117 = vpack.c.bf16 %v4062, %v4061
  %v4118 = vpack.c.bf16 %v4064, %v4063
  %v4119 = vpack.c.bf16 %v4066, %v4065
  %v4120 = vpack.c.bf16 %v4068, %v4067
  %v4121 = vpack.c.bf16 %v4070, %v4069
  %v4122 = vpack.c.bf16 %v4072, %v4071
  %v4123 = vpack.c.bf16 %v4074, %v4073
  %v4124 = vpack.c.bf16 %v4076, %v4075
  %v4125 = vpack.c.bf16 %v4078, %v4077
  %v4126 = vpack.c.bf16 %v4080, %v4079
  %v4127 = vpack.c.bf16 %v4082, %v4081
  %v4128 = vpack.c.bf16 %v4084, %v4083
  %v4129 = vpack.c.bf16 %v4086, %v4085
  %v4130 = vpack.c.bf16 %v4088, %v4087
  %v4131 = vpack.c.bf16 %v4090, %v4089
  %v4132 = vpack.c.bf16 %v4092, %v4091
  %v4133 = vpack.c.bf16 %v4094, %v4093
  %v4134 = vpack.c.bf16 %v4096, %v4095
  %v4135 = vpack.c.bf16 %v4098, %v4097
  %v4136 = vpack.c.bf16 %v4100, %v4099
  %v4137 = vpack.c.bf16 %v4102, %v4101
  %v4138 = vpack.c.bf16 %v4104, %v4103
  %v4139 = vpack.c.bf16 %v4106, %v4105
  %v4140 = vpack.c.bf16 %v4108, %v4107
  %s4141 = scalar_lea.vmem %s2, 24
  %v4142 = vld [vmem:[%s4141] sm:$0xf]
  %v4144 = vsel %vm720, %v4109, 0
  %v4147 = vsel %vm720, %v4110, 0
  %v4150 = vsel %vm720, %v4111, 0
  %v4153 = vsel %vm720, %v4112, 0
  %v4156 = vsel %vm720, %v4113, 0
  %v4159 = vsel %vm720, %v4114, 0
  %v4162 = vsel %vm720, %v4115, 0
  %v4165 = vsel %vm720, %v4116, 0
  %v4168 = vsel %vm720, %v4117, 0
  %v4171 = vsel %vm720, %v4118, 0
  %v4174 = vsel %vm720, %v4119, 0
  %v4177 = vsel %vm720, %v4120, 0
  %v4180 = vsel %vm720, %v4121, 0
  %v4183 = vsel %vm720, %v4122, 0
  %v4186 = vsel %vm720, %v4123, 0
  %v4189 = vsel %vm720, %v4124, 0
  %v4192 = vsel %vm720, %v4125, 0
  %v4195 = vsel %vm720, %v4126, 0
  %v4198 = vsel %vm720, %v4127, 0
  %v4201 = vsel %vm720, %v4128, 0
  %v4204 = vsel %vm720, %v4129, 0
  %v4207 = vsel %vm720, %v4130, 0
  %v4210 = vsel %vm720, %v4131, 0
  %v4213 = vsel %vm720, %v4132, 0
  %v4216 = vsel %vm720, %v4133, 0
  %v4219 = vsel %vm720, %v4134, 0
  %v4222 = vsel %vm720, %v4135, 0
  %v4225 = vsel %vm720, %v4136, 0
  %v4228 = vsel %vm720, %v4137, 0
  %v4231 = vsel %vm720, %v4138, 0
  %v4234 = vsel %vm720, %v4139, 0
  %v4237 = vsel %vm720, %v4140, 0
  %v4240 = vsel %vm1163, %v4142, 0
  %4242 = vmatprep.subr.bf16.mxu0 0
  %4243 = vmatpush1.bf16.msra.mxu0 0
  %4244 = vmatprep.subr.bf16.mxu0 0
  %4245 = vmatpush1.bf16.msra.mxu0 0
  %4246 = vmatprep.subr.bf16.mxu0 0
  %4247 = vmatpush1.bf16.msra.mxu0 0
  %4248 = vmatprep.subr.bf16.mxu0 0
  %4249 = vmatpush1.bf16.msra.mxu0 0
  %4250 = vmatprep.subr.bf16.mxu0 0
  %4251 = vmatpush1.bf16.msra.mxu0 0
  %4252 = vmatprep.subr.bf16.mxu0 0
  %4253 = vmatpush1.bf16.msra.mxu0 0
  %4254 = vmatprep.subr.bf16.mxu0 0
  %4255 = vmatpush1.bf16.msra.mxu0 0
  %4256 = vmatprep.subr.bf16.mxu0 0
  %4257 = vmatpush1.bf16.msra.mxu0 %v4240
  %4258 = vmatprep.subr.bf16.mxu0 0
  %4259 = vmatpush2.bf16.msra.mxu0 0
  %4260 = vmatprep.subr.bf16.mxu0 0
  %4261 = vmatpush2.bf16.msra.mxu0 0
  %4262 = vmatprep.subr.bf16.mxu0 0
  %4263 = vmatpush2.bf16.msra.mxu0 0
  %4264 = vmatprep.subr.bf16.mxu0 0
  %4265 = vmatpush2.bf16.msra.mxu0 0
  %4266 = vmatprep.subr.bf16.mxu0 0
  %4267 = vmatpush2.bf16.msra.mxu0 0
  %4268 = vmatprep.subr.bf16.mxu0 0
  %4269 = vmatpush2.bf16.msra.mxu0 0
  %4270 = vmatprep.subr.bf16.mxu0 0
  %4271 = vmatpush2.bf16.msra.mxu0 0
  %4272 = vmatprep.subr.bf16.mxu0 0
  %4273 = vmatpush2.bf16.msra.mxu0 0
  %4274 = vmatprep.mubr.bf16.mxu0 0
  %4275 = vmatmul.mubr.bf16.gmra.mxu0 %v4144
  %v4276 = vpop.f32.mrf.mxu0
  %v4277 = vadd.f32 0.0, %v4276
  %v4278 = vpop.f32.mrf.mxu0
  %v4279 = vpop.f32.mrf.mxu0
  %v4280 = vadd.f32 0.0, %v4279
  %v4281 = vpop.f32.mrf.mxu0
  %4282 = vmatprep.mubr.bf16.mxu0 0
  %4283 = vmatmul.mubr.bf16.gmra.mxu0 %v4147
  %v4284 = vpop.f32.mrf.mxu0
  %v4285 = vadd.f32 0.0, %v4284
  %v4286 = vpop.f32.mrf.mxu0
  %v4287 = vpop.f32.mrf.mxu0
  %v4288 = vadd.f32 0.0, %v4287
  %v4289 = vpop.f32.mrf.mxu0
  %4290 = vmatprep.mubr.bf16.mxu0 0
  %4291 = vmatmul.mubr.bf16.gmra.mxu0 %v4150
  %v4292 = vpop.f32.mrf.mxu0
  %v4293 = vadd.f32 0.0, %v4292
  %v4294 = vpop.f32.mrf.mxu0
  %v4295 = vpop.f32.mrf.mxu0
  %v4296 = vadd.f32 0.0, %v4295
  %v4297 = vpop.f32.mrf.mxu0
  %4298 = vmatprep.mubr.bf16.mxu0 0
  %4299 = vmatmul.mubr.bf16.gmra.mxu0 %v4153
  %v4300 = vpop.f32.mrf.mxu0
  %v4301 = vadd.f32 0.0, %v4300
  %v4302 = vpop.f32.mrf.mxu0
  %v4303 = vpop.f32.mrf.mxu0
  %v4304 = vadd.f32 0.0, %v4303
  %v4305 = vpop.f32.mrf.mxu0
  %4306 = vmatprep.mubr.bf16.mxu0 0
  %4307 = vmatmul.mubr.bf16.gmra.mxu0 %v4156
  %v4308 = vpop.f32.mrf.mxu0
  %v4309 = vadd.f32 0.0, %v4308
  %v4310 = vpop.f32.mrf.mxu0
  %v4311 = vpop.f32.mrf.mxu0
  %v4312 = vadd.f32 0.0, %v4311
  %v4313 = vpop.f32.mrf.mxu0
  %4314 = vmatprep.mubr.bf16.mxu0 0
  %4315 = vmatmul.mubr.bf16.gmra.mxu0 %v4159
  %v4316 = vpop.f32.mrf.mxu0
  %v4317 = vadd.f32 0.0, %v4316
  %v4318 = vpop.f32.mrf.mxu0
  %v4319 = vpop.f32.mrf.mxu0
  %v4320 = vadd.f32 0.0, %v4319
  %v4321 = vpop.f32.mrf.mxu0
  %4322 = vmatprep.mubr.bf16.mxu0 0
  %4323 = vmatmul.mubr.bf16.gmra.mxu0 %v4162
  %v4324 = vpop.f32.mrf.mxu0
  %v4325 = vadd.f32 0.0, %v4324
  %v4326 = vpop.f32.mrf.mxu0
  %v4327 = vpop.f32.mrf.mxu0
  %v4328 = vadd.f32 0.0, %v4327
  %v4329 = vpop.f32.mrf.mxu0
  %4330 = vmatprep.mubr.bf16.mxu0 0
  %4331 = vmatmul.mubr.bf16.gmra.mxu0 %v4165
  %v4332 = vpop.f32.mrf.mxu0
  %v4333 = vadd.f32 0.0, %v4332
  %v4334 = vpop.f32.mrf.mxu0
  %v4335 = vpop.f32.mrf.mxu0
  %v4336 = vadd.f32 0.0, %v4335
  %v4337 = vpop.f32.mrf.mxu0
  %4338 = vmatprep.mubr.bf16.mxu0 0
  %4339 = vmatmul.mubr.bf16.gmra.mxu0 %v4168
  %v4340 = vpop.f32.mrf.mxu0
  %v4341 = vadd.f32 0.0, %v4340
  %v4342 = vpop.f32.mrf.mxu0
  %v4343 = vpop.f32.mrf.mxu0
  %v4344 = vadd.f32 0.0, %v4343
  %v4345 = vpop.f32.mrf.mxu0
  %4346 = vmatprep.mubr.bf16.mxu0 0
  %4347 = vmatmul.mubr.bf16.gmra.mxu0 %v4171
  %v4348 = vpop.f32.mrf.mxu0
  %v4349 = vadd.f32 0.0, %v4348
  %v4350 = vpop.f32.mrf.mxu0
  %v4351 = vpop.f32.mrf.mxu0
  %v4352 = vadd.f32 0.0, %v4351
  %v4353 = vpop.f32.mrf.mxu0
  %4354 = vmatprep.mubr.bf16.mxu0 0
  %4355 = vmatmul.mubr.bf16.gmra.mxu0 %v4174
  %v4356 = vpop.f32.mrf.mxu0
  %v4357 = vadd.f32 0.0, %v4356
  %v4358 = vpop.f32.mrf.mxu0
  %v4359 = vpop.f32.mrf.mxu0
  %v4360 = vadd.f32 0.0, %v4359
  %v4361 = vpop.f32.mrf.mxu0
  %4362 = vmatprep.mubr.bf16.mxu0 0
  %4363 = vmatmul.mubr.bf16.gmra.mxu0 %v4177
  %v4364 = vpop.f32.mrf.mxu0
  %v4365 = vadd.f32 0.0, %v4364
  %v4366 = vpop.f32.mrf.mxu0
  %v4367 = vpop.f32.mrf.mxu0
  %v4368 = vadd.f32 0.0, %v4367
  %v4369 = vpop.f32.mrf.mxu0
  %4370 = vmatprep.mubr.bf16.mxu0 0
  %4371 = vmatmul.mubr.bf16.gmra.mxu0 %v4180
  %v4372 = vpop.f32.mrf.mxu0
  %v4373 = vadd.f32 0.0, %v4372
  %v4374 = vpop.f32.mrf.mxu0
  %v4375 = vpop.f32.mrf.mxu0
  %v4376 = vadd.f32 0.0, %v4375
  %v4377 = vpop.f32.mrf.mxu0
  %4378 = vmatprep.mubr.bf16.mxu0 0
  %4379 = vmatmul.mubr.bf16.gmra.mxu0 %v4183
  %v4380 = vpop.f32.mrf.mxu0
  %v4381 = vadd.f32 0.0, %v4380
  %v4382 = vpop.f32.mrf.mxu0
  %v4383 = vpop.f32.mrf.mxu0
  %v4384 = vadd.f32 0.0, %v4383
  %v4385 = vpop.f32.mrf.mxu0
  %4386 = vmatprep.mubr.bf16.mxu0 0
  %4387 = vmatmul.mubr.bf16.gmra.mxu0 %v4186
  %v4388 = vpop.f32.mrf.mxu0
  %v4389 = vadd.f32 0.0, %v4388
  %v4390 = vpop.f32.mrf.mxu0
  %v4391 = vpop.f32.mrf.mxu0
  %v4392 = vadd.f32 0.0, %v4391
  %v4393 = vpop.f32.mrf.mxu0
  %4394 = vmatprep.mubr.bf16.mxu0 0
  %4395 = vmatmul.mubr.bf16.gmra.mxu0 %v4189
  %v4396 = vpop.f32.mrf.mxu0
  %v4397 = vadd.f32 0.0, %v4396
  %v4398 = vpop.f32.mrf.mxu0
  %v4399 = vpop.f32.mrf.mxu0
  %v4400 = vadd.f32 0.0, %v4399
  %v4401 = vpop.f32.mrf.mxu0
  %4402 = vmatprep.mubr.bf16.mxu0 0
  %4403 = vmatmul.mubr.bf16.gmra.mxu0 %v4192
  %v4404 = vpop.f32.mrf.mxu0
  %v4405 = vadd.f32 0.0, %v4404
  %v4406 = vpop.f32.mrf.mxu0
  %v4407 = vpop.f32.mrf.mxu0
  %v4408 = vadd.f32 0.0, %v4407
  %v4409 = vpop.f32.mrf.mxu0
  %4410 = vmatprep.mubr.bf16.mxu0 0
  %4411 = vmatmul.mubr.bf16.gmra.mxu0 %v4195
  %v4412 = vpop.f32.mrf.mxu0
  %v4413 = vadd.f32 0.0, %v4412
  %v4414 = vpop.f32.mrf.mxu0
  %v4415 = vpop.f32.mrf.mxu0
  %v4416 = vadd.f32 0.0, %v4415
  %v4417 = vpop.f32.mrf.mxu0
  %4418 = vmatprep.mubr.bf16.mxu0 0
  %4419 = vmatmul.mubr.bf16.gmra.mxu0 %v4198
  %v4420 = vpop.f32.mrf.mxu0
  %v4421 = vadd.f32 0.0, %v4420
  %v4422 = vpop.f32.mrf.mxu0
  %v4423 = vpop.f32.mrf.mxu0
  %v4424 = vadd.f32 0.0, %v4423
  %v4425 = vpop.f32.mrf.mxu0
  %4426 = vmatprep.mubr.bf16.mxu0 0
  %4427 = vmatmul.mubr.bf16.gmra.mxu0 %v4201
  %v4428 = vpop.f32.mrf.mxu0
  %v4429 = vadd.f32 0.0, %v4428
  %v4430 = vpop.f32.mrf.mxu0
  %v4431 = vpop.f32.mrf.mxu0
  %v4432 = vadd.f32 0.0, %v4431
  %v4433 = vpop.f32.mrf.mxu0
  %4434 = vmatprep.mubr.bf16.mxu0 0
  %4435 = vmatmul.mubr.bf16.gmra.mxu0 %v4204
  %v4436 = vpop.f32.mrf.mxu0
  %v4437 = vadd.f32 0.0, %v4436
  %v4438 = vpop.f32.mrf.mxu0
  %v4439 = vpop.f32.mrf.mxu0
  %v4440 = vadd.f32 0.0, %v4439
  %v4441 = vpop.f32.mrf.mxu0
  %4442 = vmatprep.mubr.bf16.mxu0 0
  %4443 = vmatmul.mubr.bf16.gmra.mxu0 %v4207
  %v4444 = vpop.f32.mrf.mxu0
  %v4445 = vadd.f32 0.0, %v4444
  %v4446 = vpop.f32.mrf.mxu0
  %v4447 = vpop.f32.mrf.mxu0
  %v4448 = vadd.f32 0.0, %v4447
  %v4449 = vpop.f32.mrf.mxu0
  %4450 = vmatprep.mubr.bf16.mxu0 0
  %4451 = vmatmul.mubr.bf16.gmra.mxu0 %v4210
  %v4452 = vpop.f32.mrf.mxu0
  %v4453 = vadd.f32 0.0, %v4452
  %v4454 = vpop.f32.mrf.mxu0
  %v4455 = vpop.f32.mrf.mxu0
  %v4456 = vadd.f32 0.0, %v4455
  %v4457 = vpop.f32.mrf.mxu0
  %4458 = vmatprep.mubr.bf16.mxu0 0
  %4459 = vmatmul.mubr.bf16.gmra.mxu0 %v4213
  %v4460 = vpop.f32.mrf.mxu0
  %v4461 = vadd.f32 0.0, %v4460
  %v4462 = vpop.f32.mrf.mxu0
  %v4463 = vpop.f32.mrf.mxu0
  %v4464 = vadd.f32 0.0, %v4463
  %v4465 = vpop.f32.mrf.mxu0
  %4466 = vmatprep.mubr.bf16.mxu0 0
  %4467 = vmatmul.mubr.bf16.gmra.mxu0 %v4216
  %v4468 = vpop.f32.mrf.mxu0
  %v4469 = vadd.f32 0.0, %v4468
  %v4470 = vpop.f32.mrf.mxu0
  %v4471 = vpop.f32.mrf.mxu0
  %v4472 = vadd.f32 0.0, %v4471
  %v4473 = vpop.f32.mrf.mxu0
  %4474 = vmatprep.mubr.bf16.mxu0 0
  %4475 = vmatmul.mubr.bf16.gmra.mxu0 %v4219
  %v4476 = vpop.f32.mrf.mxu0
  %v4477 = vadd.f32 0.0, %v4476
  %v4478 = vpop.f32.mrf.mxu0
  %v4479 = vpop.f32.mrf.mxu0
  %v4480 = vadd.f32 0.0, %v4479
  %v4481 = vpop.f32.mrf.mxu0
  %4482 = vmatprep.mubr.bf16.mxu0 0
  %4483 = vmatmul.mubr.bf16.gmra.mxu0 %v4222
  %v4484 = vpop.f32.mrf.mxu0
  %v4485 = vadd.f32 0.0, %v4484
  %v4486 = vpop.f32.mrf.mxu0
  %v4487 = vpop.f32.mrf.mxu0
  %v4488 = vadd.f32 0.0, %v4487
  %v4489 = vpop.f32.mrf.mxu0
  %4490 = vmatprep.mubr.bf16.mxu0 0
  %4491 = vmatmul.mubr.bf16.gmra.mxu0 %v4225
  %v4492 = vpop.f32.mrf.mxu0
  %v4493 = vadd.f32 0.0, %v4492
  %v4494 = vpop.f32.mrf.mxu0
  %v4495 = vpop.f32.mrf.mxu0
  %v4496 = vadd.f32 0.0, %v4495
  %v4497 = vpop.f32.mrf.mxu0
  %4498 = vmatprep.mubr.bf16.mxu0 0
  %4499 = vmatmul.mubr.bf16.gmra.mxu0 %v4228
  %v4500 = vpop.f32.mrf.mxu0
  %v4501 = vadd.f32 0.0, %v4500
  %v4502 = vpop.f32.mrf.mxu0
  %v4503 = vpop.f32.mrf.mxu0
  %v4504 = vadd.f32 0.0, %v4503
  %v4505 = vpop.f32.mrf.mxu0
  %4506 = vmatprep.mubr.bf16.mxu0 0
  %4507 = vmatmul.mubr.bf16.gmra.mxu0 %v4231
  %v4508 = vpop.f32.mrf.mxu0
  %v4509 = vadd.f32 0.0, %v4508
  %v4510 = vpop.f32.mrf.mxu0
  %v4511 = vpop.f32.mrf.mxu0
  %v4512 = vadd.f32 0.0, %v4511
  %v4513 = vpop.f32.mrf.mxu0
  %4514 = vmatprep.mubr.bf16.mxu0 0
  %4515 = vmatmul.mubr.bf16.gmra.mxu0 %v4234
  %v4516 = vpop.f32.mrf.mxu0
  %v4517 = vadd.f32 0.0, %v4516
  %v4518 = vpop.f32.mrf.mxu0
  %v4519 = vpop.f32.mrf.mxu0
  %v4520 = vadd.f32 0.0, %v4519
  %v4521 = vpop.f32.mrf.mxu0
  %4522 = vmatprep.mubr.bf16.mxu0 0
  %4523 = vmatmul.mubr.bf16.gmra.mxu0 %v4237
  %v4524 = vpop.f32.mrf.mxu0
  %v4525 = vadd.f32 0.0, %v4524
  %v4526 = vpop.f32.mrf.mxu0
  %v4527 = vpop.f32.mrf.mxu0
  %v4528 = vadd.f32 0.0, %v4527
  %v4529 = vpop.f32.mrf.mxu0
  %4530 = vdwg.mxu0
  %v4531 = vadd.f32 %v3980, %v4277
  %v4532 = vadd.f32 %v3981, %v4280
  %v4533 = vadd.f32 %v3982, %v4285
  %v4534 = vadd.f32 %v3983, %v4288
  %v4535 = vadd.f32 %v3984, %v4293
  %v4536 = vadd.f32 %v3985, %v4296
  %v4537 = vadd.f32 %v3986, %v4301
  %v4538 = vadd.f32 %v3987, %v4304
  %v4539 = vadd.f32 %v3988, %v4309
  %v4540 = vadd.f32 %v3989, %v4312
  %v4541 = vadd.f32 %v3990, %v4317
  %v4542 = vadd.f32 %v3991, %v4320
  %v4543 = vadd.f32 %v3992, %v4325
  %v4544 = vadd.f32 %v3993, %v4328
  %v4545 = vadd.f32 %v3994, %v4333
  %v4546 = vadd.f32 %v3995, %v4336
  %v4547 = vadd.f32 %v3996, %v4341
  %v4548 = vadd.f32 %v3997, %v4344
  %v4549 = vadd.f32 %v3998, %v4349
  %v4550 = vadd.f32 %v3999, %v4352
  %v4551 = vadd.f32 %v4000, %v4357
  %v4552 = vadd.f32 %v4001, %v4360
  %v4553 = vadd.f32 %v4002, %v4365
  %v4554 = vadd.f32 %v4003, %v4368
  %v4555 = vadd.f32 %v4004, %v4373
  %v4556 = vadd.f32 %v4005, %v4376
  %v4557 = vadd.f32 %v4006, %v4381
  %v4558 = vadd.f32 %v4007, %v4384
  %v4559 = vadd.f32 %v4008, %v4389
  %v4560 = vadd.f32 %v4009, %v4392
  %v4561 = vadd.f32 %v4010, %v4397
  %v4562 = vadd.f32 %v4011, %v4400
  %v4563 = vadd.f32 %v4012, %v4405
  %v4564 = vadd.f32 %v4013, %v4408
  %v4565 = vadd.f32 %v4014, %v4413
  %v4566 = vadd.f32 %v4015, %v4416
  %v4567 = vadd.f32 %v4016, %v4421
  %v4568 = vadd.f32 %v4017, %v4424
  %v4569 = vadd.f32 %v4018, %v4429
  %v4570 = vadd.f32 %v4019, %v4432
  %v4571 = vadd.f32 %v4020, %v4437
  %v4572 = vadd.f32 %v4021, %v4440
  %v4573 = vadd.f32 %v4022, %v4445
  %v4574 = vadd.f32 %v4023, %v4448
  %v4575 = vadd.f32 %v4024, %v4453
  %v4576 = vadd.f32 %v4025, %v4456
  %v4577 = vadd.f32 %v4026, %v4461
  %v4578 = vadd.f32 %v4027, %v4464
  %v4579 = vadd.f32 %v4028, %v4469
  %v4580 = vadd.f32 %v4029, %v4472
  %v4581 = vadd.f32 %v4030, %v4477
  %v4582 = vadd.f32 %v4031, %v4480
  %v4583 = vadd.f32 %v4032, %v4485
  %v4584 = vadd.f32 %v4033, %v4488
  %v4585 = vadd.f32 %v4034, %v4493
  %v4586 = vadd.f32 %v4035, %v4496
  %v4587 = vadd.f32 %v4036, %v4501
  %v4588 = vadd.f32 %v4037, %v4504
  %v4589 = vadd.f32 %v4038, %v4509
  %v4590 = vadd.f32 %v4039, %v4512
  %v4591 = vadd.f32 %v4040, %v4517
  %v4592 = vadd.f32 %v4041, %v4520
  %v4593 = vadd.f32 %v4042, %v4525
  %v4594 = vadd.f32 %v4043, %v4528
  %v4595 = vld [vmem:[%s4044 + $0x1] sm:$0xff]
  %v4596 = vld [vmem:[%s4044 + $0x9] sm:$0xff]
  %v4597 = vld [vmem:[%s4044 + $0x19] sm:$0xff]
  %v4598 = vld [vmem:[%s4044 + $0x21] sm:$0xff]
  %v4599 = vld [vmem:[%s4044 + $0x31] sm:$0xff]
  %v4600 = vld [vmem:[%s4044 + $0x39] sm:$0xff]
  %v4601 = vld [vmem:[%s4044 + $0x49] sm:$0xff]
  %v4602 = vld [vmem:[%s4044 + $0x51] sm:$0xff]
  %v4603 = vld [vmem:[%s4044 + $0x61] sm:$0xff]
  %v4604 = vld [vmem:[%s4044 + $0x69] sm:$0xff]
  %v4605 = vld [vmem:[%s4044 + $0x79] sm:$0xff]
  %v4606 = vld [vmem:[%s4044 + $0x81] sm:$0xff]
  %v4607 = vld [vmem:[%s4044 + $0x91] sm:$0xff]
  %v4608 = vld [vmem:[%s4044 + $0x99] sm:$0xff]
  %v4609 = vld [vmem:[%s4044 + $0xa9] sm:$0xff]
  %v4610 = vld [vmem:[%s4044 + $0xb1] sm:$0xff]
  %v4611 = vld [vmem:[%s4044 + $0xc1] sm:$0xff]
  %v4612 = vld [vmem:[%s4044 + $0xc9] sm:$0xff]
  %v4613 = vld [vmem:[%s4044 + $0xd9] sm:$0xff]
  %v4614 = vld [vmem:[%s4044 + $0xe1] sm:$0xff]
  %v4615 = vld [vmem:[%s4044 + $0xf1] sm:$0xff]
  %v4616 = vld [vmem:[%s4044 + $0xf9] sm:$0xff]
  %v4617 = vld [vmem:[%s4044 + $0x109] sm:$0xff]
  %v4618 = vld [vmem:[%s4044 + $0x111] sm:$0xff]
  %v4619 = vld [vmem:[%s4044 + $0x121] sm:$0xff]
  %v4620 = vld [vmem:[%s4044 + $0x129] sm:$0xff]
  %v4621 = vld [vmem:[%s4044 + $0x139] sm:$0xff]
  %v4622 = vld [vmem:[%s4044 + $0x141] sm:$0xff]
  %v4623 = vld [vmem:[%s4044 + $0x151] sm:$0xff]
  %v4624 = vld [vmem:[%s4044 + $0x159] sm:$0xff]
  %v4625 = vld [vmem:[%s4044 + $0x169] sm:$0xff]
  %v4626 = vld [vmem:[%s4044 + $0x171] sm:$0xff]
  %v4627 = vld [vmem:[%s4044 + $0x1b1] sm:$0xff]
  %v4628 = vld [vmem:[%s4044 + $0x1b9] sm:$0xff]
  %v4629 = vld [vmem:[%s4044 + $0x1c9] sm:$0xff]
  %v4630 = vld [vmem:[%s4044 + $0x1d1] sm:$0xff]
  %v4631 = vld [vmem:[%s4044 + $0x1e1] sm:$0xff]
  %v4632 = vld [vmem:[%s4044 + $0x1e9] sm:$0xff]
  %v4633 = vld [vmem:[%s4044 + $0x1f9] sm:$0xff]
  %v4634 = vld [vmem:[%s4044 + $0x201] sm:$0xff]
  %v4635 = vld [vmem:[%s4044 + $0x211] sm:$0xff]
  %v4636 = vld [vmem:[%s4044 + $0x219] sm:$0xff]
  %v4637 = vld [vmem:[%s4044 + $0x229] sm:$0xff]
  %v4638 = vld [vmem:[%s4044 + $0x231] sm:$0xff]
  %v4639 = vld [vmem:[%s4044 + $0x241] sm:$0xff]
  %v4640 = vld [vmem:[%s4044 + $0x249] sm:$0xff]
  %v4641 = vld [vmem:[%s4044 + $0x259] sm:$0xff]
  %v4642 = vld [vmem:[%s4044 + $0x261] sm:$0xff]
  %v4643 = vld [vmem:[%s4044 + $0x271] sm:$0xff]
  %v4644 = vld [vmem:[%s4044 + $0x279] sm:$0xff]
  %v4645 = vld [vmem:[%s4044 + $0x289] sm:$0xff]
  %v4646 = vld [vmem:[%s4044 + $0x291] sm:$0xff]
  %v4647 = vld [vmem:[%s4044 + $0x2a1] sm:$0xff]
  %v4648 = vld [vmem:[%s4044 + $0x2a9] sm:$0xff]
  %v4649 = vld [vmem:[%s4044 + $0x2b9] sm:$0xff]
  %v4650 = vld [vmem:[%s4044 + $0x2c1] sm:$0xff]
  %v4651 = vld [vmem:[%s4044 + $0x2d1] sm:$0xff]
  %v4652 = vld [vmem:[%s4044 + $0x2d9] sm:$0xff]
  %v4653 = vld [vmem:[%s4044 + $0x2e9] sm:$0xff]
  %v4654 = vld [vmem:[%s4044 + $0x2f1] sm:$0xff]
  %v4655 = vld [vmem:[%s4044 + $0x301] sm:$0xff]
  %v4656 = vld [vmem:[%s4044 + $0x309] sm:$0xff]
  %v4657 = vld [vmem:[%s4044 + $0x319] sm:$0xff]
  %v4658 = vld [vmem:[%s4044 + $0x321] sm:$0xff]
  %v4659 = vpack.c.bf16 %v4596, %v4595
  %v4660 = vpack.c.bf16 %v4598, %v4597
  %v4661 = vpack.c.bf16 %v4600, %v4599
  %v4662 = vpack.c.bf16 %v4602, %v4601
  %v4663 = vpack.c.bf16 %v4604, %v4603
  %v4664 = vpack.c.bf16 %v4606, %v4605
  %v4665 = vpack.c.bf16 %v4608, %v4607
  %v4666 = vpack.c.bf16 %v4610, %v4609
  %v4667 = vpack.c.bf16 %v4612, %v4611
  %v4668 = vpack.c.bf16 %v4614, %v4613
  %v4669 = vpack.c.bf16 %v4616, %v4615
  %v4670 = vpack.c.bf16 %v4618, %v4617
  %v4671 = vpack.c.bf16 %v4620, %v4619
  %v4672 = vpack.c.bf16 %v4622, %v4621
  %v4673 = vpack.c.bf16 %v4624, %v4623
  %v4674 = vpack.c.bf16 %v4626, %v4625
  %v4675 = vpack.c.bf16 %v4628, %v4627
  %v4676 = vpack.c.bf16 %v4630, %v4629
  %v4677 = vpack.c.bf16 %v4632, %v4631
  %v4678 = vpack.c.bf16 %v4634, %v4633
  %v4679 = vpack.c.bf16 %v4636, %v4635
  %v4680 = vpack.c.bf16 %v4638, %v4637
  %v4681 = vpack.c.bf16 %v4640, %v4639
  %v4682 = vpack.c.bf16 %v4642, %v4641
  %v4683 = vpack.c.bf16 %v4644, %v4643
  %v4684 = vpack.c.bf16 %v4646, %v4645
  %v4685 = vpack.c.bf16 %v4648, %v4647
  %v4686 = vpack.c.bf16 %v4650, %v4649
  %v4687 = vpack.c.bf16 %v4652, %v4651
  %v4688 = vpack.c.bf16 %v4654, %v4653
  %v4689 = vpack.c.bf16 %v4656, %v4655
  %v4690 = vpack.c.bf16 %v4658, %v4657
  %s4691 = scalar_lea.vmem %s2, 28
  %v4692 = vld [vmem:[%s4691] sm:$0xf]
  %v4694 = vsel %vm720, %v4659, 0
  %v4697 = vsel %vm720, %v4660, 0
  %v4700 = vsel %vm720, %v4661, 0
  %v4703 = vsel %vm720, %v4662, 0
  %v4706 = vsel %vm720, %v4663, 0
  %v4709 = vsel %vm720, %v4664, 0
  %v4712 = vsel %vm720, %v4665, 0
  %v4715 = vsel %vm720, %v4666, 0
  %v4718 = vsel %vm720, %v4667, 0
  %v4721 = vsel %vm720, %v4668, 0
  %v4724 = vsel %vm720, %v4669, 0
  %v4727 = vsel %vm720, %v4670, 0
  %v4730 = vsel %vm720, %v4671, 0
  %v4733 = vsel %vm720, %v4672, 0
  %v4736 = vsel %vm720, %v4673, 0
  %v4739 = vsel %vm720, %v4674, 0
  %v4742 = vsel %vm720, %v4675, 0
  %v4745 = vsel %vm720, %v4676, 0
  %v4748 = vsel %vm720, %v4677, 0
  %v4751 = vsel %vm720, %v4678, 0
  %v4754 = vsel %vm720, %v4679, 0
  %v4757 = vsel %vm720, %v4680, 0
  %v4760 = vsel %vm720, %v4681, 0
  %v4763 = vsel %vm720, %v4682, 0
  %v4766 = vsel %vm720, %v4683, 0
  %v4769 = vsel %vm720, %v4684, 0
  %v4772 = vsel %vm720, %v4685, 0
  %v4775 = vsel %vm720, %v4686, 0
  %v4778 = vsel %vm720, %v4687, 0
  %v4781 = vsel %vm720, %v4688, 0
  %v4784 = vsel %vm720, %v4689, 0
  %v4787 = vsel %vm720, %v4690, 0
  %v4790 = vsel %vm1163, %v4692, 0
  %4792 = vmatprep.subr.bf16.mxu0 0
  %4793 = vmatpush1.bf16.msra.mxu0 0
  %4794 = vmatprep.subr.bf16.mxu0 0
  %4795 = vmatpush1.bf16.msra.mxu0 0
  %4796 = vmatprep.subr.bf16.mxu0 0
  %4797 = vmatpush1.bf16.msra.mxu0 0
  %4798 = vmatprep.subr.bf16.mxu0 0
  %4799 = vmatpush1.bf16.msra.mxu0 0
  %4800 = vmatprep.subr.bf16.mxu0 0
  %4801 = vmatpush1.bf16.msra.mxu0 0
  %4802 = vmatprep.subr.bf16.mxu0 0
  %4803 = vmatpush1.bf16.msra.mxu0 0
  %4804 = vmatprep.subr.bf16.mxu0 0
  %4805 = vmatpush1.bf16.msra.mxu0 0
  %4806 = vmatprep.subr.bf16.mxu0 0
  %4807 = vmatpush1.bf16.msra.mxu0 %v4790
  %4808 = vmatprep.subr.bf16.mxu0 0
  %4809 = vmatpush2.bf16.msra.mxu0 0
  %4810 = vmatprep.subr.bf16.mxu0 0
  %4811 = vmatpush2.bf16.msra.mxu0 0
  %4812 = vmatprep.subr.bf16.mxu0 0
  %4813 = vmatpush2.bf16.msra.mxu0 0
  %4814 = vmatprep.subr.bf16.mxu0 0
  %4815 = vmatpush2.bf16.msra.mxu0 0
  %4816 = vmatprep.subr.bf16.mxu0 0
  %4817 = vmatpush2.bf16.msra.mxu0 0
  %4818 = vmatprep.subr.bf16.mxu0 0
  %4819 = vmatpush2.bf16.msra.mxu0 0
  %4820 = vmatprep.subr.bf16.mxu0 0
  %4821 = vmatpush2.bf16.msra.mxu0 0
  %4822 = vmatprep.subr.bf16.mxu0 0
  %4823 = vmatpush2.bf16.msra.mxu0 0
  %4824 = vmatprep.mubr.bf16.mxu0 0
  %4825 = vmatmul.mubr.bf16.gmra.mxu0 %v4694
  %v4826 = vpop.f32.mrf.mxu0
  %v4827 = vadd.f32 0.0, %v4826
  %v4828 = vpop.f32.mrf.mxu0
  %v4829 = vpop.f32.mrf.mxu0
  %v4830 = vadd.f32 0.0, %v4829
  %v4831 = vpop.f32.mrf.mxu0
  %4832 = vmatprep.mubr.bf16.mxu0 0
  %4833 = vmatmul.mubr.bf16.gmra.mxu0 %v4697
  %v4834 = vpop.f32.mrf.mxu0
  %v4835 = vadd.f32 0.0, %v4834
  %v4836 = vpop.f32.mrf.mxu0
  %v4837 = vpop.f32.mrf.mxu0
  %v4838 = vadd.f32 0.0, %v4837
  %v4839 = vpop.f32.mrf.mxu0
  %4840 = vmatprep.mubr.bf16.mxu0 0
  %4841 = vmatmul.mubr.bf16.gmra.mxu0 %v4700
  %v4842 = vpop.f32.mrf.mxu0
  %v4843 = vadd.f32 0.0, %v4842
  %v4844 = vpop.f32.mrf.mxu0
  %v4845 = vpop.f32.mrf.mxu0
  %v4846 = vadd.f32 0.0, %v4845
  %v4847 = vpop.f32.mrf.mxu0
  %4848 = vmatprep.mubr.bf16.mxu0 0
  %4849 = vmatmul.mubr.bf16.gmra.mxu0 %v4703
  %v4850 = vpop.f32.mrf.mxu0
  %v4851 = vadd.f32 0.0, %v4850
  %v4852 = vpop.f32.mrf.mxu0
  %v4853 = vpop.f32.mrf.mxu0
  %v4854 = vadd.f32 0.0, %v4853
  %v4855 = vpop.f32.mrf.mxu0
  %4856 = vmatprep.mubr.bf16.mxu0 0
  %4857 = vmatmul.mubr.bf16.gmra.mxu0 %v4706
  %v4858 = vpop.f32.mrf.mxu0
  %v4859 = vadd.f32 0.0, %v4858
  %v4860 = vpop.f32.mrf.mxu0
  %v4861 = vpop.f32.mrf.mxu0
  %v4862 = vadd.f32 0.0, %v4861
  %v4863 = vpop.f32.mrf.mxu0
  %4864 = vmatprep.mubr.bf16.mxu0 0
  %4865 = vmatmul.mubr.bf16.gmra.mxu0 %v4709
  %v4866 = vpop.f32.mrf.mxu0
  %v4867 = vadd.f32 0.0, %v4866
  %v4868 = vpop.f32.mrf.mxu0
  %v4869 = vpop.f32.mrf.mxu0
  %v4870 = vadd.f32 0.0, %v4869
  %v4871 = vpop.f32.mrf.mxu0
  %4872 = vmatprep.mubr.bf16.mxu0 0
  %4873 = vmatmul.mubr.bf16.gmra.mxu0 %v4712
  %v4874 = vpop.f32.mrf.mxu0
  %v4875 = vadd.f32 0.0, %v4874
  %v4876 = vpop.f32.mrf.mxu0
  %v4877 = vpop.f32.mrf.mxu0
  %v4878 = vadd.f32 0.0, %v4877
  %v4879 = vpop.f32.mrf.mxu0
  %4880 = vmatprep.mubr.bf16.mxu0 0
  %4881 = vmatmul.mubr.bf16.gmra.mxu0 %v4715
  %v4882 = vpop.f32.mrf.mxu0
  %v4883 = vadd.f32 0.0, %v4882
  %v4884 = vpop.f32.mrf.mxu0
  %v4885 = vpop.f32.mrf.mxu0
  %v4886 = vadd.f32 0.0, %v4885
  %v4887 = vpop.f32.mrf.mxu0
  %4888 = vmatprep.mubr.bf16.mxu0 0
  %4889 = vmatmul.mubr.bf16.gmra.mxu0 %v4718
  %v4890 = vpop.f32.mrf.mxu0
  %v4891 = vadd.f32 0.0, %v4890
  %v4892 = vpop.f32.mrf.mxu0
  %v4893 = vpop.f32.mrf.mxu0
  %v4894 = vadd.f32 0.0, %v4893
  %v4895 = vpop.f32.mrf.mxu0
  %4896 = vmatprep.mubr.bf16.mxu0 0
  %4897 = vmatmul.mubr.bf16.gmra.mxu0 %v4721
  %v4898 = vpop.f32.mrf.mxu0
  %v4899 = vadd.f32 0.0, %v4898
  %v4900 = vpop.f32.mrf.mxu0
  %v4901 = vpop.f32.mrf.mxu0
  %v4902 = vadd.f32 0.0, %v4901
  %v4903 = vpop.f32.mrf.mxu0
  %4904 = vmatprep.mubr.bf16.mxu0 0
  %4905 = vmatmul.mubr.bf16.gmra.mxu0 %v4724
  %v4906 = vpop.f32.mrf.mxu0
  %v4907 = vadd.f32 0.0, %v4906
  %v4908 = vpop.f32.mrf.mxu0
  %v4909 = vpop.f32.mrf.mxu0
  %v4910 = vadd.f32 0.0, %v4909
  %v4911 = vpop.f32.mrf.mxu0
  %4912 = vmatprep.mubr.bf16.mxu0 0
  %4913 = vmatmul.mubr.bf16.gmra.mxu0 %v4727
  %v4914 = vpop.f32.mrf.mxu0
  %v4915 = vadd.f32 0.0, %v4914
  %v4916 = vpop.f32.mrf.mxu0
  %v4917 = vpop.f32.mrf.mxu0
  %v4918 = vadd.f32 0.0, %v4917
  %v4919 = vpop.f32.mrf.mxu0
  %4920 = vmatprep.mubr.bf16.mxu0 0
  %4921 = vmatmul.mubr.bf16.gmra.mxu0 %v4730
  %v4922 = vpop.f32.mrf.mxu0
  %v4923 = vadd.f32 0.0, %v4922
  %v4924 = vpop.f32.mrf.mxu0
  %v4925 = vpop.f32.mrf.mxu0
  %v4926 = vadd.f32 0.0, %v4925
  %v4927 = vpop.f32.mrf.mxu0
  %4928 = vmatprep.mubr.bf16.mxu0 0
  %4929 = vmatmul.mubr.bf16.gmra.mxu0 %v4733
  %v4930 = vpop.f32.mrf.mxu0
  %v4931 = vadd.f32 0.0, %v4930
  %v4932 = vpop.f32.mrf.mxu0
  %v4933 = vpop.f32.mrf.mxu0
  %v4934 = vadd.f32 0.0, %v4933
  %v4935 = vpop.f32.mrf.mxu0
  %4936 = vmatprep.mubr.bf16.mxu0 0
  %4937 = vmatmul.mubr.bf16.gmra.mxu0 %v4736
  %v4938 = vpop.f32.mrf.mxu0
  %v4939 = vadd.f32 0.0, %v4938
  %v4940 = vpop.f32.mrf.mxu0
  %v4941 = vpop.f32.mrf.mxu0
  %v4942 = vadd.f32 0.0, %v4941
  %v4943 = vpop.f32.mrf.mxu0
  %4944 = vmatprep.mubr.bf16.mxu0 0
  %4945 = vmatmul.mubr.bf16.gmra.mxu0 %v4739
  %v4946 = vpop.f32.mrf.mxu0
  %v4947 = vadd.f32 0.0, %v4946
  %v4948 = vpop.f32.mrf.mxu0
  %v4949 = vpop.f32.mrf.mxu0
  %v4950 = vadd.f32 0.0, %v4949
  %v4951 = vpop.f32.mrf.mxu0
  %4952 = vmatprep.mubr.bf16.mxu0 0
  %4953 = vmatmul.mubr.bf16.gmra.mxu0 %v4742
  %v4954 = vpop.f32.mrf.mxu0
  %v4955 = vadd.f32 0.0, %v4954
  %v4956 = vpop.f32.mrf.mxu0
  %v4957 = vpop.f32.mrf.mxu0
  %v4958 = vadd.f32 0.0, %v4957
  %v4959 = vpop.f32.mrf.mxu0
  %4960 = vmatprep.mubr.bf16.mxu0 0
  %4961 = vmatmul.mubr.bf16.gmra.mxu0 %v4745
  %v4962 = vpop.f32.mrf.mxu0
  %v4963 = vadd.f32 0.0, %v4962
  %v4964 = vpop.f32.mrf.mxu0
  %v4965 = vpop.f32.mrf.mxu0
  %v4966 = vadd.f32 0.0, %v4965
  %v4967 = vpop.f32.mrf.mxu0
  %4968 = vmatprep.mubr.bf16.mxu0 0
  %4969 = vmatmul.mubr.bf16.gmra.mxu0 %v4748
  %v4970 = vpop.f32.mrf.mxu0
  %v4971 = vadd.f32 0.0, %v4970
  %v4972 = vpop.f32.mrf.mxu0
  %v4973 = vpop.f32.mrf.mxu0
  %v4974 = vadd.f32 0.0, %v4973
  %v4975 = vpop.f32.mrf.mxu0
  %4976 = vmatprep.mubr.bf16.mxu0 0
  %4977 = vmatmul.mubr.bf16.gmra.mxu0 %v4751
  %v4978 = vpop.f32.mrf.mxu0
  %v4979 = vadd.f32 0.0, %v4978
  %v4980 = vpop.f32.mrf.mxu0
  %v4981 = vpop.f32.mrf.mxu0
  %v4982 = vadd.f32 0.0, %v4981
  %v4983 = vpop.f32.mrf.mxu0
  %4984 = vmatprep.mubr.bf16.mxu0 0
  %4985 = vmatmul.mubr.bf16.gmra.mxu0 %v4754
  %v4986 = vpop.f32.mrf.mxu0
  %v4987 = vadd.f32 0.0, %v4986
  %v4988 = vpop.f32.mrf.mxu0
  %v4989 = vpop.f32.mrf.mxu0
  %v4990 = vadd.f32 0.0, %v4989
  %v4991 = vpop.f32.mrf.mxu0
  %4992 = vmatprep.mubr.bf16.mxu0 0
  %4993 = vmatmul.mubr.bf16.gmra.mxu0 %v4757
  %v4994 = vpop.f32.mrf.mxu0
  %v4995 = vadd.f32 0.0, %v4994
  %v4996 = vpop.f32.mrf.mxu0
  %v4997 = vpop.f32.mrf.mxu0
  %v4998 = vadd.f32 0.0, %v4997
  %v4999 = vpop.f32.mrf.mxu0
  %5000 = vmatprep.mubr.bf16.mxu0 0
  %5001 = vmatmul.mubr.bf16.gmra.mxu0 %v4760
  %v5002 = vpop.f32.mrf.mxu0
  %v5003 = vadd.f32 0.0, %v5002
  %v5004 = vpop.f32.mrf.mxu0
  %v5005 = vpop.f32.mrf.mxu0
  %v5006 = vadd.f32 0.0, %v5005
  %v5007 = vpop.f32.mrf.mxu0
  %5008 = vmatprep.mubr.bf16.mxu0 0
  %5009 = vmatmul.mubr.bf16.gmra.mxu0 %v4763
  %v5010 = vpop.f32.mrf.mxu0
  %v5011 = vadd.f32 0.0, %v5010
  %v5012 = vpop.f32.mrf.mxu0
  %v5013 = vpop.f32.mrf.mxu0
  %v5014 = vadd.f32 0.0, %v5013
  %v5015 = vpop.f32.mrf.mxu0
  %5016 = vmatprep.mubr.bf16.mxu0 0
  %5017 = vmatmul.mubr.bf16.gmra.mxu0 %v4766
  %v5018 = vpop.f32.mrf.mxu0
  %v5019 = vadd.f32 0.0, %v5018
  %v5020 = vpop.f32.mrf.mxu0
  %v5021 = vpop.f32.mrf.mxu0
  %v5022 = vadd.f32 0.0, %v5021
  %v5023 = vpop.f32.mrf.mxu0
  %5024 = vmatprep.mubr.bf16.mxu0 0
  %5025 = vmatmul.mubr.bf16.gmra.mxu0 %v4769
  %v5026 = vpop.f32.mrf.mxu0
  %v5027 = vadd.f32 0.0, %v5026
  %v5028 = vpop.f32.mrf.mxu0
  %v5029 = vpop.f32.mrf.mxu0
  %v5030 = vadd.f32 0.0, %v5029
  %v5031 = vpop.f32.mrf.mxu0
  %5032 = vmatprep.mubr.bf16.mxu0 0
  %5033 = vmatmul.mubr.bf16.gmra.mxu0 %v4772
  %v5034 = vpop.f32.mrf.mxu0
  %v5035 = vadd.f32 0.0, %v5034
  %v5036 = vpop.f32.mrf.mxu0
  %v5037 = vpop.f32.mrf.mxu0
  %v5038 = vadd.f32 0.0, %v5037
  %v5039 = vpop.f32.mrf.mxu0
  %5040 = vmatprep.mubr.bf16.mxu0 0
  %5041 = vmatmul.mubr.bf16.gmra.mxu0 %v4775
  %v5042 = vpop.f32.mrf.mxu0
  %v5043 = vadd.f32 0.0, %v5042
  %v5044 = vpop.f32.mrf.mxu0
  %v5045 = vpop.f32.mrf.mxu0
  %v5046 = vadd.f32 0.0, %v5045
  %v5047 = vpop.f32.mrf.mxu0
  %5048 = vmatprep.mubr.bf16.mxu0 0
  %5049 = vmatmul.mubr.bf16.gmra.mxu0 %v4778
  %v5050 = vpop.f32.mrf.mxu0
  %v5051 = vadd.f32 0.0, %v5050
  %v5052 = vpop.f32.mrf.mxu0
  %v5053 = vpop.f32.mrf.mxu0
  %v5054 = vadd.f32 0.0, %v5053
  %v5055 = vpop.f32.mrf.mxu0
  %5056 = vmatprep.mubr.bf16.mxu0 0
  %5057 = vmatmul.mubr.bf16.gmra.mxu0 %v4781
  %v5058 = vpop.f32.mrf.mxu0
  %v5059 = vadd.f32 0.0, %v5058
  %v5060 = vpop.f32.mrf.mxu0
  %v5061 = vpop.f32.mrf.mxu0
  %v5062 = vadd.f32 0.0, %v5061
  %v5063 = vpop.f32.mrf.mxu0
  %5064 = vmatprep.mubr.bf16.mxu0 0
  %5065 = vmatmul.mubr.bf16.gmra.mxu0 %v4784
  %v5066 = vpop.f32.mrf.mxu0
  %v5067 = vadd.f32 0.0, %v5066
  %v5068 = vpop.f32.mrf.mxu0
  %v5069 = vpop.f32.mrf.mxu0
  %v5070 = vadd.f32 0.0, %v5069
  %v5071 = vpop.f32.mrf.mxu0
  %5072 = vmatprep.mubr.bf16.mxu0 0
  %5073 = vmatmul.mubr.bf16.gmra.mxu0 %v4787
  %v5074 = vpop.f32.mrf.mxu0
  %v5075 = vadd.f32 0.0, %v5074
  %v5076 = vpop.f32.mrf.mxu0
  %v5077 = vpop.f32.mrf.mxu0
  %v5078 = vadd.f32 0.0, %v5077
  %v5079 = vpop.f32.mrf.mxu0
  %5080 = vdwg.mxu0
  %v5081 = vadd.f32 %v4531, %v4827
  %v5082 = vadd.f32 %v4532, %v4830
  %v5083 = vadd.f32 %v4533, %v4835
  %v5084 = vadd.f32 %v4534, %v4838
  %v5085 = vadd.f32 %v4535, %v4843
  %v5086 = vadd.f32 %v4536, %v4846
  %v5087 = vadd.f32 %v4537, %v4851
  %v5088 = vadd.f32 %v4538, %v4854
  %v5089 = vadd.f32 %v4539, %v4859
  %v5090 = vadd.f32 %v4540, %v4862
  %v5091 = vadd.f32 %v4541, %v4867
  %v5092 = vadd.f32 %v4542, %v4870
  %v5093 = vadd.f32 %v4543, %v4875
  %v5094 = vadd.f32 %v4544, %v4878
  %v5095 = vadd.f32 %v4545, %v4883
  %v5096 = vadd.f32 %v4546, %v4886
  %v5097 = vadd.f32 %v4547, %v4891
  %v5098 = vadd.f32 %v4548, %v4894
  %v5099 = vadd.f32 %v4549, %v4899
  %v5100 = vadd.f32 %v4550, %v4902
  %v5101 = vadd.f32 %v4551, %v4907
  %v5102 = vadd.f32 %v4552, %v4910
  %v5103 = vadd.f32 %v4553, %v4915
  %v5104 = vadd.f32 %v4554, %v4918
  %v5105 = vadd.f32 %v4555, %v4923
  %v5106 = vadd.f32 %v4556, %v4926
  %v5107 = vadd.f32 %v4557, %v4931
  %v5108 = vadd.f32 %v4558, %v4934
  %v5109 = vadd.f32 %v4559, %v4939
  %v5110 = vadd.f32 %v4560, %v4942
  %v5111 = vadd.f32 %v4561, %v4947
  %v5112 = vadd.f32 %v4562, %v4950
  %v5113 = vadd.f32 %v4563, %v4955
  %v5114 = vadd.f32 %v4564, %v4958
  %v5115 = vadd.f32 %v4565, %v4963
  %v5116 = vadd.f32 %v4566, %v4966
  %v5117 = vadd.f32 %v4567, %v4971
  %v5118 = vadd.f32 %v4568, %v4974
  %v5119 = vadd.f32 %v4569, %v4979
  %v5120 = vadd.f32 %v4570, %v4982
  %v5121 = vadd.f32 %v4571, %v4987
  %v5122 = vadd.f32 %v4572, %v4990
  %v5123 = vadd.f32 %v4573, %v4995
  %v5124 = vadd.f32 %v4574, %v4998
  %v5125 = vadd.f32 %v4575, %v5003
  %v5126 = vadd.f32 %v4576, %v5006
  %v5127 = vadd.f32 %v4577, %v5011
  %v5128 = vadd.f32 %v4578, %v5014
  %v5129 = vadd.f32 %v4579, %v5019
  %v5130 = vadd.f32 %v4580, %v5022
  %v5131 = vadd.f32 %v4581, %v5027
  %v5132 = vadd.f32 %v4582, %v5030
  %v5133 = vadd.f32 %v4583, %v5035
  %v5134 = vadd.f32 %v4584, %v5038
  %v5135 = vadd.f32 %v4585, %v5043
  %v5136 = vadd.f32 %v4586, %v5046
  %v5137 = vadd.f32 %v4587, %v5051
  %v5138 = vadd.f32 %v4588, %v5054
  %v5139 = vadd.f32 %v4589, %v5059
  %v5140 = vadd.f32 %v4590, %v5062
  %v5141 = vadd.f32 %v4591, %v5067
  %v5142 = vadd.f32 %v4592, %v5070
  %v5143 = vadd.f32 %v4593, %v5075
  %v5144 = vadd.f32 %v4594, %v5078
  %v5145 = vld [vmem:[%s4044 + $0x2] sm:$0xff]
  %v5146 = vld [vmem:[%s4044 + $0xa] sm:$0xff]
  %v5147 = vld [vmem:[%s4044 + $0x1a] sm:$0xff]
  %v5148 = vld [vmem:[%s4044 + $0x22] sm:$0xff]
  %v5149 = vld [vmem:[%s4044 + $0x32] sm:$0xff]
  %v5150 = vld [vmem:[%s4044 + $0x3a] sm:$0xff]
  %v5151 = vld [vmem:[%s4044 + $0x4a] sm:$0xff]
  %v5152 = vld [vmem:[%s4044 + $0x52] sm:$0xff]
  %v5153 = vld [vmem:[%s4044 + $0x62] sm:$0xff]
  %v5154 = vld [vmem:[%s4044 + $0x6a] sm:$0xff]
  %v5155 = vld [vmem:[%s4044 + $0x7a] sm:$0xff]
  %v5156 = vld [vmem:[%s4044 + $0x82] sm:$0xff]
  %v5157 = vld [vmem:[%s4044 + $0x92] sm:$0xff]
  %v5158 = vld [vmem:[%s4044 + $0x9a] sm:$0xff]
  %v5159 = vld [vmem:[%s4044 + $0xaa] sm:$0xff]
  %v5160 = vld [vmem:[%s4044 + $0xb2] sm:$0xff]
  %v5161 = vld [vmem:[%s4044 + $0xc2] sm:$0xff]
  %v5162 = vld [vmem:[%s4044 + $0xca] sm:$0xff]
  %v5163 = vld [vmem:[%s4044 + $0xda] sm:$0xff]
  %v5164 = vld [vmem:[%s4044 + $0xe2] sm:$0xff]
  %v5165 = vld [vmem:[%s4044 + $0xf2] sm:$0xff]
  %v5166 = vld [vmem:[%s4044 + $0xfa] sm:$0xff]
  %v5167 = vld [vmem:[%s4044 + $0x10a] sm:$0xff]
  %v5168 = vld [vmem:[%s4044 + $0x112] sm:$0xff]
  %v5169 = vld [vmem:[%s4044 + $0x122] sm:$0xff]
  %v5170 = vld [vmem:[%s4044 + $0x12a] sm:$0xff]
  %v5171 = vld [vmem:[%s4044 + $0x13a] sm:$0xff]
  %v5172 = vld [vmem:[%s4044 + $0x142] sm:$0xff]
  %v5173 = vld [vmem:[%s4044 + $0x152] sm:$0xff]
  %v5174 = vld [vmem:[%s4044 + $0x15a] sm:$0xff]
  %v5175 = vld [vmem:[%s4044 + $0x16a] sm:$0xff]
  %v5176 = vld [vmem:[%s4044 + $0x172] sm:$0xff]
  %v5177 = vld [vmem:[%s4044 + $0x1b2] sm:$0xff]
  %v5178 = vld [vmem:[%s4044 + $0x1ba] sm:$0xff]
  %v5179 = vld [vmem:[%s4044 + $0x1ca] sm:$0xff]
  %v5180 = vld [vmem:[%s4044 + $0x1d2] sm:$0xff]
  %v5181 = vld [vmem:[%s4044 + $0x1e2] sm:$0xff]
  %v5182 = vld [vmem:[%s4044 + $0x1ea] sm:$0xff]
  %v5183 = vld [vmem:[%s4044 + $0x1fa] sm:$0xff]
  %v5184 = vld [vmem:[%s4044 + $0x202] sm:$0xff]
  %v5185 = vld [vmem:[%s4044 + $0x212] sm:$0xff]
  %v5186 = vld [vmem:[%s4044 + $0x21a] sm:$0xff]
  %v5187 = vld [vmem:[%s4044 + $0x22a] sm:$0xff]
  %v5188 = vld [vmem:[%s4044 + $0x232] sm:$0xff]
  %v5189 = vld [vmem:[%s4044 + $0x242] sm:$0xff]
  %v5190 = vld [vmem:[%s4044 + $0x24a] sm:$0xff]
  %v5191 = vld [vmem:[%s4044 + $0x25a] sm:$0xff]
  %v5192 = vld [vmem:[%s4044 + $0x262] sm:$0xff]
  %v5193 = vld [vmem:[%s4044 + $0x272] sm:$0xff]
  %v5194 = vld [vmem:[%s4044 + $0x27a] sm:$0xff]
  %v5195 = vld [vmem:[%s4044 + $0x28a] sm:$0xff]
  %v5196 = vld [vmem:[%s4044 + $0x292] sm:$0xff]
  %v5197 = vld [vmem:[%s4044 + $0x2a2] sm:$0xff]
  %v5198 = vld [vmem:[%s4044 + $0x2aa] sm:$0xff]
  %v5199 = vld [vmem:[%s4044 + $0x2ba] sm:$0xff]
  %v5200 = vld [vmem:[%s4044 + $0x2c2] sm:$0xff]
  %v5201 = vld [vmem:[%s4044 + $0x2d2] sm:$0xff]
  %v5202 = vld [vmem:[%s4044 + $0x2da] sm:$0xff]
  %v5203 = vld [vmem:[%s4044 + $0x2ea] sm:$0xff]
  %v5204 = vld [vmem:[%s4044 + $0x2f2] sm:$0xff]
  %v5205 = vld [vmem:[%s4044 + $0x302] sm:$0xff]
  %v5206 = vld [vmem:[%s4044 + $0x30a] sm:$0xff]
  %v5207 = vld [vmem:[%s4044 + $0x31a] sm:$0xff]
  %v5208 = vld [vmem:[%s4044 + $0x322] sm:$0xff]
  %v5209 = vpack.c.bf16 %v5146, %v5145
  %v5210 = vpack.c.bf16 %v5148, %v5147
  %v5211 = vpack.c.bf16 %v5150, %v5149
  %v5212 = vpack.c.bf16 %v5152, %v5151
  %v5213 = vpack.c.bf16 %v5154, %v5153
  %v5214 = vpack.c.bf16 %v5156, %v5155
  %v5215 = vpack.c.bf16 %v5158, %v5157
  %v5216 = vpack.c.bf16 %v5160, %v5159
  %v5217 = vpack.c.bf16 %v5162, %v5161
  %v5218 = vpack.c.bf16 %v5164, %v5163
  %v5219 = vpack.c.bf16 %v5166, %v5165
  %v5220 = vpack.c.bf16 %v5168, %v5167
  %v5221 = vpack.c.bf16 %v5170, %v5169
  %v5222 = vpack.c.bf16 %v5172, %v5171
  %v5223 = vpack.c.bf16 %v5174, %v5173
  %v5224 = vpack.c.bf16 %v5176, %v5175
  %v5225 = vpack.c.bf16 %v5178, %v5177
  %v5226 = vpack.c.bf16 %v5180, %v5179
  %v5227 = vpack.c.bf16 %v5182, %v5181
  %v5228 = vpack.c.bf16 %v5184, %v5183
  %v5229 = vpack.c.bf16 %v5186, %v5185
  %v5230 = vpack.c.bf16 %v5188, %v5187
  %v5231 = vpack.c.bf16 %v5190, %v5189
  %v5232 = vpack.c.bf16 %v5192, %v5191
  %v5233 = vpack.c.bf16 %v5194, %v5193
  %v5234 = vpack.c.bf16 %v5196, %v5195
  %v5235 = vpack.c.bf16 %v5198, %v5197
  %v5236 = vpack.c.bf16 %v5200, %v5199
  %v5237 = vpack.c.bf16 %v5202, %v5201
  %v5238 = vpack.c.bf16 %v5204, %v5203
  %v5239 = vpack.c.bf16 %v5206, %v5205
  %v5240 = vpack.c.bf16 %v5208, %v5207
  %s5241 = scalar_lea.vmem %s2, 32
  %v5242 = vld [vmem:[%s5241] sm:$0xf]
  %v5244 = vsel %vm720, %v5209, 0
  %v5247 = vsel %vm720, %v5210, 0
  %v5250 = vsel %vm720, %v5211, 0
  %v5253 = vsel %vm720, %v5212, 0
  %v5256 = vsel %vm720, %v5213, 0
  %v5259 = vsel %vm720, %v5214, 0
  %v5262 = vsel %vm720, %v5215, 0
  %v5265 = vsel %vm720, %v5216, 0
  %v5268 = vsel %vm720, %v5217, 0
  %v5271 = vsel %vm720, %v5218, 0
  %v5274 = vsel %vm720, %v5219, 0
  %v5277 = vsel %vm720, %v5220, 0
  %v5280 = vsel %vm720, %v5221, 0
  %v5283 = vsel %vm720, %v5222, 0
  %v5286 = vsel %vm720, %v5223, 0
  %v5289 = vsel %vm720, %v5224, 0
  %v5292 = vsel %vm720, %v5225, 0
  %v5295 = vsel %vm720, %v5226, 0
  %v5298 = vsel %vm720, %v5227, 0
  %v5301 = vsel %vm720, %v5228, 0
  %v5304 = vsel %vm720, %v5229, 0
  %v5307 = vsel %vm720, %v5230, 0
  %v5310 = vsel %vm720, %v5231, 0
  %v5313 = vsel %vm720, %v5232, 0
  %v5316 = vsel %vm720, %v5233, 0
  %v5319 = vsel %vm720, %v5234, 0
  %v5322 = vsel %vm720, %v5235, 0
  %v5325 = vsel %vm720, %v5236, 0
  %v5328 = vsel %vm720, %v5237, 0
  %v5331 = vsel %vm720, %v5238, 0
  %v5334 = vsel %vm720, %v5239, 0
  %v5337 = vsel %vm720, %v5240, 0
  %v5340 = vsel %vm1163, %v5242, 0
  %5342 = vmatprep.subr.bf16.mxu0 0
  %5343 = vmatpush1.bf16.msra.mxu0 0
  %5344 = vmatprep.subr.bf16.mxu0 0
  %5345 = vmatpush1.bf16.msra.mxu0 0
  %5346 = vmatprep.subr.bf16.mxu0 0
  %5347 = vmatpush1.bf16.msra.mxu0 0
  %5348 = vmatprep.subr.bf16.mxu0 0
  %5349 = vmatpush1.bf16.msra.mxu0 0
  %5350 = vmatprep.subr.bf16.mxu0 0
  %5351 = vmatpush1.bf16.msra.mxu0 0
  %5352 = vmatprep.subr.bf16.mxu0 0
  %5353 = vmatpush1.bf16.msra.mxu0 0
  %5354 = vmatprep.subr.bf16.mxu0 0
  %5355 = vmatpush1.bf16.msra.mxu0 0
  %5356 = vmatprep.subr.bf16.mxu0 0
  %5357 = vmatpush1.bf16.msra.mxu0 %v5340
  %5358 = vmatprep.subr.bf16.mxu0 0
  %5359 = vmatpush2.bf16.msra.mxu0 0
  %5360 = vmatprep.subr.bf16.mxu0 0
  %5361 = vmatpush2.bf16.msra.mxu0 0
  %5362 = vmatprep.subr.bf16.mxu0 0
  %5363 = vmatpush2.bf16.msra.mxu0 0
  %5364 = vmatprep.subr.bf16.mxu0 0
  %5365 = vmatpush2.bf16.msra.mxu0 0
  %5366 = vmatprep.subr.bf16.mxu0 0
  %5367 = vmatpush2.bf16.msra.mxu0 0
  %5368 = vmatprep.subr.bf16.mxu0 0
  %5369 = vmatpush2.bf16.msra.mxu0 0
  %5370 = vmatprep.subr.bf16.mxu0 0
  %5371 = vmatpush2.bf16.msra.mxu0 0
  %5372 = vmatprep.subr.bf16.mxu0 0
  %5373 = vmatpush2.bf16.msra.mxu0 0
  %5374 = vmatprep.mubr.bf16.mxu0 0
  %5375 = vmatmul.mubr.bf16.gmra.mxu0 %v5244
  %v5376 = vpop.f32.mrf.mxu0
  %v5377 = vadd.f32 0.0, %v5376
  %v5378 = vpop.f32.mrf.mxu0
  %v5379 = vpop.f32.mrf.mxu0
  %v5380 = vadd.f32 0.0, %v5379
  %v5381 = vpop.f32.mrf.mxu0
  %5382 = vmatprep.mubr.bf16.mxu0 0
  %5383 = vmatmul.mubr.bf16.gmra.mxu0 %v5247
  %v5384 = vpop.f32.mrf.mxu0
  %v5385 = vadd.f32 0.0, %v5384
  %v5386 = vpop.f32.mrf.mxu0
  %v5387 = vpop.f32.mrf.mxu0
  %v5388 = vadd.f32 0.0, %v5387
  %v5389 = vpop.f32.mrf.mxu0
  %5390 = vmatprep.mubr.bf16.mxu0 0
  %5391 = vmatmul.mubr.bf16.gmra.mxu0 %v5250
  %v5392 = vpop.f32.mrf.mxu0
  %v5393 = vadd.f32 0.0, %v5392
  %v5394 = vpop.f32.mrf.mxu0
  %v5395 = vpop.f32.mrf.mxu0
  %v5396 = vadd.f32 0.0, %v5395
  %v5397 = vpop.f32.mrf.mxu0
  %5398 = vmatprep.mubr.bf16.mxu0 0
  %5399 = vmatmul.mubr.bf16.gmra.mxu0 %v5253
  %v5400 = vpop.f32.mrf.mxu0
  %v5401 = vadd.f32 0.0, %v5400
  %v5402 = vpop.f32.mrf.mxu0
  %v5403 = vpop.f32.mrf.mxu0
  %v5404 = vadd.f32 0.0, %v5403
  %v5405 = vpop.f32.mrf.mxu0
  %5406 = vmatprep.mubr.bf16.mxu0 0
  %5407 = vmatmul.mubr.bf16.gmra.mxu0 %v5256
  %v5408 = vpop.f32.mrf.mxu0
  %v5409 = vadd.f32 0.0, %v5408
  %v5410 = vpop.f32.mrf.mxu0
  %v5411 = vpop.f32.mrf.mxu0
  %v5412 = vadd.f32 0.0, %v5411
  %v5413 = vpop.f32.mrf.mxu0
  %5414 = vmatprep.mubr.bf16.mxu0 0
  %5415 = vmatmul.mubr.bf16.gmra.mxu0 %v5259
  %v5416 = vpop.f32.mrf.mxu0
  %v5417 = vadd.f32 0.0, %v5416
  %v5418 = vpop.f32.mrf.mxu0
  %v5419 = vpop.f32.mrf.mxu0
  %v5420 = vadd.f32 0.0, %v5419
  %v5421 = vpop.f32.mrf.mxu0
  %5422 = vmatprep.mubr.bf16.mxu0 0
  %5423 = vmatmul.mubr.bf16.gmra.mxu0 %v5262
  %v5424 = vpop.f32.mrf.mxu0
  %v5425 = vadd.f32 0.0, %v5424
  %v5426 = vpop.f32.mrf.mxu0
  %v5427 = vpop.f32.mrf.mxu0
  %v5428 = vadd.f32 0.0, %v5427
  %v5429 = vpop.f32.mrf.mxu0
  %5430 = vmatprep.mubr.bf16.mxu0 0
  %5431 = vmatmul.mubr.bf16.gmra.mxu0 %v5265
  %v5432 = vpop.f32.mrf.mxu0
  %v5433 = vadd.f32 0.0, %v5432
  %v5434 = vpop.f32.mrf.mxu0
  %v5435 = vpop.f32.mrf.mxu0
  %v5436 = vadd.f32 0.0, %v5435
  %v5437 = vpop.f32.mrf.mxu0
  %5438 = vmatprep.mubr.bf16.mxu0 0
  %5439 = vmatmul.mubr.bf16.gmra.mxu0 %v5268
  %v5440 = vpop.f32.mrf.mxu0
  %v5441 = vadd.f32 0.0, %v5440
  %v5442 = vpop.f32.mrf.mxu0
  %v5443 = vpop.f32.mrf.mxu0
  %v5444 = vadd.f32 0.0, %v5443
  %v5445 = vpop.f32.mrf.mxu0
  %5446 = vmatprep.mubr.bf16.mxu0 0
  %5447 = vmatmul.mubr.bf16.gmra.mxu0 %v5271
  %v5448 = vpop.f32.mrf.mxu0
  %v5449 = vadd.f32 0.0, %v5448
  %v5450 = vpop.f32.mrf.mxu0
  %v5451 = vpop.f32.mrf.mxu0
  %v5452 = vadd.f32 0.0, %v5451
  %v5453 = vpop.f32.mrf.mxu0
  %5454 = vmatprep.mubr.bf16.mxu0 0
  %5455 = vmatmul.mubr.bf16.gmra.mxu0 %v5274
  %v5456 = vpop.f32.mrf.mxu0
  %v5457 = vadd.f32 0.0, %v5456
  %v5458 = vpop.f32.mrf.mxu0
  %v5459 = vpop.f32.mrf.mxu0
  %v5460 = vadd.f32 0.0, %v5459
  %v5461 = vpop.f32.mrf.mxu0
  %5462 = vmatprep.mubr.bf16.mxu0 0
  %5463 = vmatmul.mubr.bf16.gmra.mxu0 %v5277
  %v5464 = vpop.f32.mrf.mxu0
  %v5465 = vadd.f32 0.0, %v5464
  %v5466 = vpop.f32.mrf.mxu0
  %v5467 = vpop.f32.mrf.mxu0
  %v5468 = vadd.f32 0.0, %v5467
  %v5469 = vpop.f32.mrf.mxu0
  %5470 = vmatprep.mubr.bf16.mxu0 0
  %5471 = vmatmul.mubr.bf16.gmra.mxu0 %v5280
  %v5472 = vpop.f32.mrf.mxu0
  %v5473 = vadd.f32 0.0, %v5472
  %v5474 = vpop.f32.mrf.mxu0
  %v5475 = vpop.f32.mrf.mxu0
  %v5476 = vadd.f32 0.0, %v5475
  %v5477 = vpop.f32.mrf.mxu0
  %5478 = vmatprep.mubr.bf16.mxu0 0
  %5479 = vmatmul.mubr.bf16.gmra.mxu0 %v5283
  %v5480 = vpop.f32.mrf.mxu0
  %v5481 = vadd.f32 0.0, %v5480
  %v5482 = vpop.f32.mrf.mxu0
  %v5483 = vpop.f32.mrf.mxu0
  %v5484 = vadd.f32 0.0, %v5483
  %v5485 = vpop.f32.mrf.mxu0
  %5486 = vmatprep.mubr.bf16.mxu0 0
  %5487 = vmatmul.mubr.bf16.gmra.mxu0 %v5286
  %v5488 = vpop.f32.mrf.mxu0
  %v5489 = vadd.f32 0.0, %v5488
  %v5490 = vpop.f32.mrf.mxu0
  %v5491 = vpop.f32.mrf.mxu0
  %v5492 = vadd.f32 0.0, %v5491
  %v5493 = vpop.f32.mrf.mxu0
  %5494 = vmatprep.mubr.bf16.mxu0 0
  %5495 = vmatmul.mubr.bf16.gmra.mxu0 %v5289
  %v5496 = vpop.f32.mrf.mxu0
  %v5497 = vadd.f32 0.0, %v5496
  %v5498 = vpop.f32.mrf.mxu0
  %v5499 = vpop.f32.mrf.mxu0
  %v5500 = vadd.f32 0.0, %v5499
  %v5501 = vpop.f32.mrf.mxu0
  %5502 = vmatprep.mubr.bf16.mxu0 0
  %5503 = vmatmul.mubr.bf16.gmra.mxu0 %v5292
  %v5504 = vpop.f32.mrf.mxu0
  %v5505 = vadd.f32 0.0, %v5504
  %v5506 = vpop.f32.mrf.mxu0
  %v5507 = vpop.f32.mrf.mxu0
  %v5508 = vadd.f32 0.0, %v5507
  %v5509 = vpop.f32.mrf.mxu0
  %5510 = vmatprep.mubr.bf16.mxu0 0
  %5511 = vmatmul.mubr.bf16.gmra.mxu0 %v5295
  %v5512 = vpop.f32.mrf.mxu0
  %v5513 = vadd.f32 0.0, %v5512
  %v5514 = vpop.f32.mrf.mxu0
  %v5515 = vpop.f32.mrf.mxu0
  %v5516 = vadd.f32 0.0, %v5515
  %v5517 = vpop.f32.mrf.mxu0
  %5518 = vmatprep.mubr.bf16.mxu0 0
  %5519 = vmatmul.mubr.bf16.gmra.mxu0 %v5298
  %v5520 = vpop.f32.mrf.mxu0
  %v5521 = vadd.f32 0.0, %v5520
  %v5522 = vpop.f32.mrf.mxu0
  %v5523 = vpop.f32.mrf.mxu0
  %v5524 = vadd.f32 0.0, %v5523
  %v5525 = vpop.f32.mrf.mxu0
  %5526 = vmatprep.mubr.bf16.mxu0 0
  %5527 = vmatmul.mubr.bf16.gmra.mxu0 %v5301
  %v5528 = vpop.f32.mrf.mxu0
  %v5529 = vadd.f32 0.0, %v5528
  %v5530 = vpop.f32.mrf.mxu0
  %v5531 = vpop.f32.mrf.mxu0
  %v5532 = vadd.f32 0.0, %v5531
  %v5533 = vpop.f32.mrf.mxu0
  %5534 = vmatprep.mubr.bf16.mxu0 0
  %5535 = vmatmul.mubr.bf16.gmra.mxu0 %v5304
  %v5536 = vpop.f32.mrf.mxu0
  %v5537 = vadd.f32 0.0, %v5536
  %v5538 = vpop.f32.mrf.mxu0
  %v5539 = vpop.f32.mrf.mxu0
  %v5540 = vadd.f32 0.0, %v5539
  %v5541 = vpop.f32.mrf.mxu0
  %5542 = vmatprep.mubr.bf16.mxu0 0
  %5543 = vmatmul.mubr.bf16.gmra.mxu0 %v5307
  %v5544 = vpop.f32.mrf.mxu0
  %v5545 = vadd.f32 0.0, %v5544
  %v5546 = vpop.f32.mrf.mxu0
  %v5547 = vpop.f32.mrf.mxu0
  %v5548 = vadd.f32 0.0, %v5547
  %v5549 = vpop.f32.mrf.mxu0
  %5550 = vmatprep.mubr.bf16.mxu0 0
  %5551 = vmatmul.mubr.bf16.gmra.mxu0 %v5310
  %v5552 = vpop.f32.mrf.mxu0
  %v5553 = vadd.f32 0.0, %v5552
  %v5554 = vpop.f32.mrf.mxu0
  %v5555 = vpop.f32.mrf.mxu0
  %v5556 = vadd.f32 0.0, %v5555
  %v5557 = vpop.f32.mrf.mxu0
  %5558 = vmatprep.mubr.bf16.mxu0 0
  %5559 = vmatmul.mubr.bf16.gmra.mxu0 %v5313
  %v5560 = vpop.f32.mrf.mxu0
  %v5561 = vadd.f32 0.0, %v5560
  %v5562 = vpop.f32.mrf.mxu0
  %v5563 = vpop.f32.mrf.mxu0
  %v5564 = vadd.f32 0.0, %v5563
  %v5565 = vpop.f32.mrf.mxu0
  %5566 = vmatprep.mubr.bf16.mxu0 0
  %5567 = vmatmul.mubr.bf16.gmra.mxu0 %v5316
  %v5568 = vpop.f32.mrf.mxu0
  %v5569 = vadd.f32 0.0, %v5568
  %v5570 = vpop.f32.mrf.mxu0
  %v5571 = vpop.f32.mrf.mxu0
  %v5572 = vadd.f32 0.0, %v5571
  %v5573 = vpop.f32.mrf.mxu0
  %5574 = vmatprep.mubr.bf16.mxu0 0
  %5575 = vmatmul.mubr.bf16.gmra.mxu0 %v5319
  %v5576 = vpop.f32.mrf.mxu0
  %v5577 = vadd.f32 0.0, %v5576
  %v5578 = vpop.f32.mrf.mxu0
  %v5579 = vpop.f32.mrf.mxu0
  %v5580 = vadd.f32 0.0, %v5579
  %v5581 = vpop.f32.mrf.mxu0
  %5582 = vmatprep.mubr.bf16.mxu0 0
  %5583 = vmatmul.mubr.bf16.gmra.mxu0 %v5322
  %v5584 = vpop.f32.mrf.mxu0
  %v5585 = vadd.f32 0.0, %v5584
  %v5586 = vpop.f32.mrf.mxu0
  %v5587 = vpop.f32.mrf.mxu0
  %v5588 = vadd.f32 0.0, %v5587
  %v5589 = vpop.f32.mrf.mxu0
  %5590 = vmatprep.mubr.bf16.mxu0 0
  %5591 = vmatmul.mubr.bf16.gmra.mxu0 %v5325
  %v5592 = vpop.f32.mrf.mxu0
  %v5593 = vadd.f32 0.0, %v5592
  %v5594 = vpop.f32.mrf.mxu0
  %v5595 = vpop.f32.mrf.mxu0
  %v5596 = vadd.f32 0.0, %v5595
  %v5597 = vpop.f32.mrf.mxu0
  %5598 = vmatprep.mubr.bf16.mxu0 0
  %5599 = vmatmul.mubr.bf16.gmra.mxu0 %v5328
  %v5600 = vpop.f32.mrf.mxu0
  %v5601 = vadd.f32 0.0, %v5600
  %v5602 = vpop.f32.mrf.mxu0
  %v5603 = vpop.f32.mrf.mxu0
  %v5604 = vadd.f32 0.0, %v5603
  %v5605 = vpop.f32.mrf.mxu0
  %5606 = vmatprep.mubr.bf16.mxu0 0
  %5607 = vmatmul.mubr.bf16.gmra.mxu0 %v5331
  %v5608 = vpop.f32.mrf.mxu0
  %v5609 = vadd.f32 0.0, %v5608
  %v5610 = vpop.f32.mrf.mxu0
  %v5611 = vpop.f32.mrf.mxu0
  %v5612 = vadd.f32 0.0, %v5611
  %v5613 = vpop.f32.mrf.mxu0
  %5614 = vmatprep.mubr.bf16.mxu0 0
  %5615 = vmatmul.mubr.bf16.gmra.mxu0 %v5334
  %v5616 = vpop.f32.mrf.mxu0
  %v5617 = vadd.f32 0.0, %v5616
  %v5618 = vpop.f32.mrf.mxu0
  %v5619 = vpop.f32.mrf.mxu0
  %v5620 = vadd.f32 0.0, %v5619
  %v5621 = vpop.f32.mrf.mxu0
  %5622 = vmatprep.mubr.bf16.mxu0 0
  %5623 = vmatmul.mubr.bf16.gmra.mxu0 %v5337
  %v5624 = vpop.f32.mrf.mxu0
  %v5625 = vadd.f32 0.0, %v5624
  %v5626 = vpop.f32.mrf.mxu0
  %v5627 = vpop.f32.mrf.mxu0
  %v5628 = vadd.f32 0.0, %v5627
  %v5629 = vpop.f32.mrf.mxu0
  %5630 = vdwg.mxu0
  %v5631 = vadd.f32 %v5081, %v5377
  %v5632 = vadd.f32 %v5082, %v5380
  %v5633 = vadd.f32 %v5083, %v5385
  %v5634 = vadd.f32 %v5084, %v5388
  %v5635 = vadd.f32 %v5085, %v5393
  %v5636 = vadd.f32 %v5086, %v5396
  %v5637 = vadd.f32 %v5087, %v5401
  %v5638 = vadd.f32 %v5088, %v5404
  %v5639 = vadd.f32 %v5089, %v5409
  %v5640 = vadd.f32 %v5090, %v5412
  %v5641 = vadd.f32 %v5091, %v5417
  %v5642 = vadd.f32 %v5092, %v5420
  %v5643 = vadd.f32 %v5093, %v5425
  %v5644 = vadd.f32 %v5094, %v5428
  %v5645 = vadd.f32 %v5095, %v5433
  %v5646 = vadd.f32 %v5096, %v5436
  %v5647 = vadd.f32 %v5097, %v5441
  %v5648 = vadd.f32 %v5098, %v5444
  %v5649 = vadd.f32 %v5099, %v5449
  %v5650 = vadd.f32 %v5100, %v5452
  %v5651 = vadd.f32 %v5101, %v5457
  %v5652 = vadd.f32 %v5102, %v5460
  %v5653 = vadd.f32 %v5103, %v5465
  %v5654 = vadd.f32 %v5104, %v5468
  %v5655 = vadd.f32 %v5105, %v5473
  %v5656 = vadd.f32 %v5106, %v5476
  %v5657 = vadd.f32 %v5107, %v5481
  %v5658 = vadd.f32 %v5108, %v5484
  %v5659 = vadd.f32 %v5109, %v5489
  %v5660 = vadd.f32 %v5110, %v5492
  %v5661 = vadd.f32 %v5111, %v5497
  %v5662 = vadd.f32 %v5112, %v5500
  %v5663 = vadd.f32 %v5113, %v5505
  %v5664 = vadd.f32 %v5114, %v5508
  %v5665 = vadd.f32 %v5115, %v5513
  %v5666 = vadd.f32 %v5116, %v5516
  %v5667 = vadd.f32 %v5117, %v5521
  %v5668 = vadd.f32 %v5118, %v5524
  %v5669 = vadd.f32 %v5119, %v5529
  %v5670 = vadd.f32 %v5120, %v5532
  %v5671 = vadd.f32 %v5121, %v5537
  %v5672 = vadd.f32 %v5122, %v5540
  %v5673 = vadd.f32 %v5123, %v5545
  %v5674 = vadd.f32 %v5124, %v5548
  %v5675 = vadd.f32 %v5125, %v5553
  %v5676 = vadd.f32 %v5126, %v5556
  %v5677 = vadd.f32 %v5127, %v5561
  %v5678 = vadd.f32 %v5128, %v5564
  %v5679 = vadd.f32 %v5129, %v5569
  %v5680 = vadd.f32 %v5130, %v5572
  %v5681 = vadd.f32 %v5131, %v5577
  %v5682 = vadd.f32 %v5132, %v5580
  %v5683 = vadd.f32 %v5133, %v5585
  %v5684 = vadd.f32 %v5134, %v5588
  %v5685 = vadd.f32 %v5135, %v5593
  %v5686 = vadd.f32 %v5136, %v5596
  %v5687 = vadd.f32 %v5137, %v5601
  %v5688 = vadd.f32 %v5138, %v5604
  %v5689 = vadd.f32 %v5139, %v5609
  %v5690 = vadd.f32 %v5140, %v5612
  %v5691 = vadd.f32 %v5141, %v5617
  %v5692 = vadd.f32 %v5142, %v5620
  %v5693 = vadd.f32 %v5143, %v5625
  %v5694 = vadd.f32 %v5144, %v5628
  %v5695 = vmax.f32 %v5631, 0.0
  %v5696 = vmax.f32 %v5632, 0.0
  %v5697 = vmax.f32 %v5633, 0.0
  %v5698 = vmax.f32 %v5634, 0.0
  %v5699 = vmax.f32 %v5635, 0.0
  %v5700 = vmax.f32 %v5636, 0.0
  %v5701 = vmax.f32 %v5637, 0.0
  %v5702 = vmax.f32 %v5638, 0.0
  %v5703 = vmax.f32 %v5639, 0.0
  %v5704 = vmax.f32 %v5640, 0.0
  %v5705 = vmax.f32 %v5641, 0.0
  %v5706 = vmax.f32 %v5642, 0.0
  %v5707 = vmax.f32 %v5643, 0.0
  %v5708 = vmax.f32 %v5644, 0.0
  %v5709 = vmax.f32 %v5645, 0.0
  %v5710 = vmax.f32 %v5646, 0.0
  %v5711 = vmax.f32 %v5647, 0.0
  %v5712 = vmax.f32 %v5648, 0.0
  %v5713 = vmax.f32 %v5649, 0.0
  %v5714 = vmax.f32 %v5650, 0.0
  %v5715 = vmax.f32 %v5651, 0.0
  %v5716 = vmax.f32 %v5652, 0.0
  %v5717 = vmax.f32 %v5653, 0.0
  %v5718 = vmax.f32 %v5654, 0.0
  %v5719 = vmax.f32 %v5655, 0.0
  %v5720 = vmax.f32 %v5656, 0.0
  %v5721 = vmax.f32 %v5657, 0.0
  %v5722 = vmax.f32 %v5658, 0.0
  %v5723 = vmax.f32 %v5659, 0.0
  %v5724 = vmax.f32 %v5660, 0.0
  %v5725 = vmax.f32 %v5661, 0.0
  %v5726 = vmax.f32 %v5662, 0.0
  %v5727 = vmax.f32 %v5663, 0.0
  %v5728 = vmax.f32 %v5664, 0.0
  %v5729 = vmax.f32 %v5665, 0.0
  %v5730 = vmax.f32 %v5666, 0.0
  %v5731 = vmax.f32 %v5667, 0.0
  %v5732 = vmax.f32 %v5668, 0.0
  %v5733 = vmax.f32 %v5669, 0.0
  %v5734 = vmax.f32 %v5670, 0.0
  %v5735 = vmax.f32 %v5671, 0.0
  %v5736 = vmax.f32 %v5672, 0.0
  %v5737 = vmax.f32 %v5673, 0.0
  %v5738 = vmax.f32 %v5674, 0.0
  %v5739 = vmax.f32 %v5675, 0.0
  %v5740 = vmax.f32 %v5676, 0.0
  %v5741 = vmax.f32 %v5677, 0.0
  %v5742 = vmax.f32 %v5678, 0.0
  %v5743 = vmax.f32 %v5679, 0.0
  %v5744 = vmax.f32 %v5680, 0.0
  %v5745 = vmax.f32 %v5681, 0.0
  %v5746 = vmax.f32 %v5682, 0.0
  %v5747 = vmax.f32 %v5683, 0.0
  %v5748 = vmax.f32 %v5684, 0.0
  %v5749 = vmax.f32 %v5685, 0.0
  %v5750 = vmax.f32 %v5686, 0.0
  %v5751 = vmax.f32 %v5687, 0.0
  %v5752 = vmax.f32 %v5688, 0.0
  %v5753 = vmax.f32 %v5689, 0.0
  %v5754 = vmax.f32 %v5690, 0.0
  %v5755 = vmax.f32 %v5691, 0.0
  %v5756 = vmax.f32 %v5692, 0.0
  %v5757 = vmax.f32 %v5693, 0.0
  %v5758 = vmax.f32 %v5694, 0.0
  %v5759 = vsel %vm720, %v5695, 0.0
  %v5760 = vsel %vm720, %v5696, 0.0
  %v5761 = vadd.f32 %v5759, %v5760
  %v5762 = vsel %vm720, %v5697, 0.0
  %v5763 = vadd.f32 %v5761, %v5762
  %v5764 = vsel %vm720, %v5698, 0.0
  %v5765 = vadd.f32 %v5763, %v5764
  %v5766 = vsel %vm720, %v5699, 0.0
  %v5767 = vadd.f32 %v5765, %v5766
  %v5768 = vsel %vm720, %v5700, 0.0
  %v5769 = vadd.f32 %v5767, %v5768
  %v5770 = vsel %vm720, %v5701, 0.0
  %v5771 = vadd.f32 %v5769, %v5770
  %v5772 = vsel %vm720, %v5702, 0.0
  %v5773 = vadd.f32 %v5771, %v5772
  %v5774 = vsel %vm720, %v5703, 0.0
  %v5775 = vadd.f32 %v5773, %v5774
  %v5776 = vsel %vm720, %v5704, 0.0
  %v5777 = vadd.f32 %v5775, %v5776
  %v5778 = vsel %vm720, %v5705, 0.0
  %v5779 = vadd.f32 %v5777, %v5778
  %v5780 = vsel %vm720, %v5706, 0.0
  %v5781 = vadd.f32 %v5779, %v5780
  %v5782 = vsel %vm720, %v5707, 0.0
  %v5783 = vadd.f32 %v5781, %v5782
  %v5784 = vsel %vm720, %v5708, 0.0
  %v5785 = vadd.f32 %v5783, %v5784
  %v5786 = vsel %vm720, %v5709, 0.0
  %v5787 = vadd.f32 %v5785, %v5786
  %v5788 = vsel %vm720, %v5710, 0.0
  %v5789 = vadd.f32 %v5787, %v5788
  %v5790 = vsel %vm720, %v5711, 0.0
  %v5791 = vadd.f32 %v5789, %v5790
  %v5792 = vsel %vm720, %v5712, 0.0
  %v5793 = vadd.f32 %v5791, %v5792
  %v5794 = vsel %vm720, %v5713, 0.0
  %v5795 = vadd.f32 %v5793, %v5794
  %v5796 = vsel %vm720, %v5714, 0.0
  %v5797 = vadd.f32 %v5795, %v5796
  %v5798 = vsel %vm720, %v5715, 0.0
  %v5799 = vadd.f32 %v5797, %v5798
  %v5800 = vsel %vm720, %v5716, 0.0
  %v5801 = vadd.f32 %v5799, %v5800
  %v5802 = vsel %vm720, %v5717, 0.0
  %v5803 = vadd.f32 %v5801, %v5802
  %v5804 = vsel %vm720, %v5718, 0.0
  %v5805 = vadd.f32 %v5803, %v5804
  %v5806 = vsel %vm720, %v5719, 0.0
  %v5807 = vadd.f32 %v5805, %v5806
  %v5808 = vsel %vm720, %v5720, 0.0
  %v5809 = vadd.f32 %v5807, %v5808
  %v5810 = vsel %vm720, %v5721, 0.0
  %v5811 = vadd.f32 %v5809, %v5810
  %v5812 = vsel %vm720, %v5722, 0.0
  %v5813 = vadd.f32 %v5811, %v5812
  %v5814 = vsel %vm720, %v5723, 0.0
  %v5815 = vadd.f32 %v5813, %v5814
  %v5816 = vsel %vm720, %v5724, 0.0
  %v5817 = vadd.f32 %v5815, %v5816
  %v5818 = vsel %vm720, %v5725, 0.0
  %v5819 = vadd.f32 %v5817, %v5818
  %v5820 = vsel %vm720, %v5726, 0.0
  %v5821 = vadd.f32 %v5819, %v5820
  %v5822 = vsel %vm720, %v5727, 0.0
  %v5823 = vadd.f32 %v5821, %v5822
  %v5824 = vsel %vm720, %v5728, 0.0
  %v5825 = vadd.f32 %v5823, %v5824
  %v5826 = vsel %vm720, %v5729, 0.0
  %v5827 = vadd.f32 %v5825, %v5826
  %v5828 = vsel %vm720, %v5730, 0.0
  %v5829 = vadd.f32 %v5827, %v5828
  %v5830 = vsel %vm720, %v5731, 0.0
  %v5831 = vadd.f32 %v5829, %v5830
  %v5832 = vsel %vm720, %v5732, 0.0
  %v5833 = vadd.f32 %v5831, %v5832
  %v5834 = vsel %vm720, %v5733, 0.0
  %v5835 = vadd.f32 %v5833, %v5834
  %v5836 = vsel %vm720, %v5734, 0.0
  %v5837 = vadd.f32 %v5835, %v5836
  %v5838 = vsel %vm720, %v5735, 0.0
  %v5839 = vadd.f32 %v5837, %v5838
  %v5840 = vsel %vm720, %v5736, 0.0
  %v5841 = vadd.f32 %v5839, %v5840
  %v5842 = vsel %vm720, %v5737, 0.0
  %v5843 = vadd.f32 %v5841, %v5842
  %v5844 = vsel %vm720, %v5738, 0.0
  %v5845 = vadd.f32 %v5843, %v5844
  %v5846 = vsel %vm720, %v5739, 0.0
  %v5847 = vadd.f32 %v5845, %v5846
  %v5848 = vsel %vm720, %v5740, 0.0
  %v5849 = vadd.f32 %v5847, %v5848
  %v5850 = vsel %vm720, %v5741, 0.0
  %v5851 = vadd.f32 %v5849, %v5850
  %v5852 = vsel %vm720, %v5742, 0.0
  %v5853 = vadd.f32 %v5851, %v5852
  %v5854 = vsel %vm720, %v5743, 0.0
  %v5855 = vadd.f32 %v5853, %v5854
  %v5856 = vsel %vm720, %v5744, 0.0
  %v5857 = vadd.f32 %v5855, %v5856
  %v5858 = vsel %vm720, %v5745, 0.0
  %v5859 = vadd.f32 %v5857, %v5858
  %v5860 = vsel %vm720, %v5746, 0.0
  %v5861 = vadd.f32 %v5859, %v5860
  %v5862 = vsel %vm720, %v5747, 0.0
  %v5863 = vadd.f32 %v5861, %v5862
  %v5864 = vsel %vm720, %v5748, 0.0
  %v5865 = vadd.f32 %v5863, %v5864
  %v5866 = vsel %vm720, %v5749, 0.0
  %v5867 = vadd.f32 %v5865, %v5866
  %v5868 = vsel %vm720, %v5750, 0.0
  %v5869 = vadd.f32 %v5867, %v5868
  %v5870 = vsel %vm720, %v5751, 0.0
  %v5871 = vadd.f32 %v5869, %v5870
  %v5872 = vsel %vm720, %v5752, 0.0
  %v5873 = vadd.f32 %v5871, %v5872
  %v5874 = vsel %vm720, %v5753, 0.0
  %v5875 = vadd.f32 %v5873, %v5874
  %v5876 = vsel %vm720, %v5754, 0.0
  %v5877 = vadd.f32 %v5875, %v5876
  %v5878 = vsel %vm720, %v5755, 0.0
  %v5879 = vadd.f32 %v5877, %v5878
  %v5880 = vsel %vm720, %v5756, 0.0
  %v5881 = vadd.f32 %v5879, %v5880
  %v5882 = vsel %vm720, %v5757, 0.0
  %v5883 = vadd.f32 %v5881, %v5882
  %v5884 = vsel %vm720, %v5758, 0.0
  %v5885 = vadd.f32 %v5883, %v5884
  %v5886 = vrot.slane %v5885, 4
  %v5887 = vadd.f32 %v5885, %v5886
  %v5888 = vrot.slane %v5887, 2
  %v5889 = vadd.f32 %v5887, %v5888
  %v5890 = vrot.slane %v5889, 1
  %v5891 = vadd.f32 %v5889, %v5890
  %v5892 = vrcp.pop 512.0
  %v5893 = vmul.f32 %v5891, %v5892
  %v5894 = vsub.f32 %v5695, %v5893
  %v5895 = vsub.f32 %v5696, %v5893
  %v5896 = vsub.f32 %v5697, %v5893
  %v5897 = vsub.f32 %v5698, %v5893
  %v5898 = vsub.f32 %v5699, %v5893
  %v5899 = vsub.f32 %v5700, %v5893
  %v5900 = vsub.f32 %v5701, %v5893
  %v5901 = vsub.f32 %v5702, %v5893
  %v5902 = vsub.f32 %v5703, %v5893
  %v5903 = vsub.f32 %v5704, %v5893
  %v5904 = vsub.f32 %v5705, %v5893
  %v5905 = vsub.f32 %v5706, %v5893
  %v5906 = vsub.f32 %v5707, %v5893
  %v5907 = vsub.f32 %v5708, %v5893
  %v5908 = vsub.f32 %v5709, %v5893
  %v5909 = vsub.f32 %v5710, %v5893
  %v5910 = vsub.f32 %v5711, %v5893
  %v5911 = vsub.f32 %v5712, %v5893
  %v5912 = vsub.f32 %v5713, %v5893
  %v5913 = vsub.f32 %v5714, %v5893
  %v5914 = vsub.f32 %v5715, %v5893
  %v5915 = vsub.f32 %v5716, %v5893
  %v5916 = vsub.f32 %v5717, %v5893
  %v5917 = vsub.f32 %v5718, %v5893
  %v5918 = vsub.f32 %v5719, %v5893
  %v5919 = vsub.f32 %v5720, %v5893
  %v5920 = vsub.f32 %v5721, %v5893
  %v5921 = vsub.f32 %v5722, %v5893
  %v5922 = vsub.f32 %v5723, %v5893
  %v5923 = vsub.f32 %v5724, %v5893
  %v5924 = vsub.f32 %v5725, %v5893
  %v5925 = vsub.f32 %v5726, %v5893
  %v5926 = vsub.f32 %v5727, %v5893
  %v5927 = vsub.f32 %v5728, %v5893
  %v5928 = vsub.f32 %v5729, %v5893
  %v5929 = vsub.f32 %v5730, %v5893
  %v5930 = vsub.f32 %v5731, %v5893
  %v5931 = vsub.f32 %v5732, %v5893
  %v5932 = vsub.f32 %v5733, %v5893
  %v5933 = vsub.f32 %v5734, %v5893
  %v5934 = vsub.f32 %v5735, %v5893
  %v5935 = vsub.f32 %v5736, %v5893
  %v5936 = vsub.f32 %v5737, %v5893
  %v5937 = vsub.f32 %v5738, %v5893
  %v5938 = vsub.f32 %v5739, %v5893
  %v5939 = vsub.f32 %v5740, %v5893
  %v5940 = vsub.f32 %v5741, %v5893
  %v5941 = vsub.f32 %v5742, %v5893
  %v5942 = vsub.f32 %v5743, %v5893
  %v5943 = vsub.f32 %v5744, %v5893
  %v5944 = vsub.f32 %v5745, %v5893
  %v5945 = vsub.f32 %v5746, %v5893
  %v5946 = vsub.f32 %v5747, %v5893
  %v5947 = vsub.f32 %v5748, %v5893
  %v5948 = vsub.f32 %v5749, %v5893
  %v5949 = vsub.f32 %v5750, %v5893
  %v5950 = vsub.f32 %v5751, %v5893
  %v5951 = vsub.f32 %v5752, %v5893
  %v5952 = vsub.f32 %v5753, %v5893
  %v5953 = vsub.f32 %v5754, %v5893
  %v5954 = vsub.f32 %v5755, %v5893
  %v5955 = vsub.f32 %v5756, %v5893
  %v5956 = vsub.f32 %v5757, %v5893
  %v5957 = vsub.f32 %v5758, %v5893
  %v5958 = vmul.f32 %v5894, %v5894
  %v5959 = vmul.f32 %v5895, %v5895
  %v5960 = vmul.f32 %v5896, %v5896
  %v5961 = vmul.f32 %v5897, %v5897
  %v5962 = vmul.f32 %v5898, %v5898
  %v5963 = vmul.f32 %v5899, %v5899
  %v5964 = vmul.f32 %v5900, %v5900
  %v5965 = vmul.f32 %v5901, %v5901
  %v5966 = vmul.f32 %v5902, %v5902
  %v5967 = vmul.f32 %v5903, %v5903
  %v5968 = vmul.f32 %v5904, %v5904
  %v5969 = vmul.f32 %v5905, %v5905
  %v5970 = vmul.f32 %v5906, %v5906
  %v5971 = vmul.f32 %v5907, %v5907
  %v5972 = vmul.f32 %v5908, %v5908
  %v5973 = vmul.f32 %v5909, %v5909
  %v5974 = vmul.f32 %v5910, %v5910
  %v5975 = vmul.f32 %v5911, %v5911
  %v5976 = vmul.f32 %v5912, %v5912
  %v5977 = vmul.f32 %v5913, %v5913
  %v5978 = vmul.f32 %v5914, %v5914
  %v5979 = vmul.f32 %v5915, %v5915
  %v5980 = vmul.f32 %v5916, %v5916
  %v5981 = vmul.f32 %v5917, %v5917
  %v5982 = vmul.f32 %v5918, %v5918
  %v5983 = vmul.f32 %v5919, %v5919
  %v5984 = vmul.f32 %v5920, %v5920
  %v5985 = vmul.f32 %v5921, %v5921
  %v5986 = vmul.f32 %v5922, %v5922
  %v5987 = vmul.f32 %v5923, %v5923
  %v5988 = vmul.f32 %v5924, %v5924
  %v5989 = vmul.f32 %v5925, %v5925
  %v5990 = vmul.f32 %v5926, %v5926
  %v5991 = vmul.f32 %v5927, %v5927
  %v5992 = vmul.f32 %v5928, %v5928
  %v5993 = vmul.f32 %v5929, %v5929
  %v5994 = vmul.f32 %v5930, %v5930
  %v5995 = vmul.f32 %v5931, %v5931
  %v5996 = vmul.f32 %v5932, %v5932
  %v5997 = vmul.f32 %v5933, %v5933
  %v5998 = vmul.f32 %v5934, %v5934
  %v5999 = vmul.f32 %v5935, %v5935
  %v6000 = vmul.f32 %v5936, %v5936
  %v6001 = vmul.f32 %v5937, %v5937
  %v6002 = vmul.f32 %v5938, %v5938
  %v6003 = vmul.f32 %v5939, %v5939
  %v6004 = vmul.f32 %v5940, %v5940
  %v6005 = vmul.f32 %v5941, %v5941
  %v6006 = vmul.f32 %v5942, %v5942
  %v6007 = vmul.f32 %v5943, %v5943
  %v6008 = vmul.f32 %v5944, %v5944
  %v6009 = vmul.f32 %v5945, %v5945
  %v6010 = vmul.f32 %v5946, %v5946
  %v6011 = vmul.f32 %v5947, %v5947
  %v6012 = vmul.f32 %v5948, %v5948
  %v6013 = vmul.f32 %v5949, %v5949
  %v6014 = vmul.f32 %v5950, %v5950
  %v6015 = vmul.f32 %v5951, %v5951
  %v6016 = vmul.f32 %v5952, %v5952
  %v6017 = vmul.f32 %v5953, %v5953
  %v6018 = vmul.f32 %v5954, %v5954
  %v6019 = vmul.f32 %v5955, %v5955
  %v6020 = vmul.f32 %v5956, %v5956
  %v6021 = vmul.f32 %v5957, %v5957
  %v6022 = vsel %vm720, %v5958, 0.0
  %v6023 = vsel %vm720, %v5959, 0.0
  %v6024 = vadd.f32 %v6022, %v6023
  %v6025 = vsel %vm720, %v5960, 0.0
  %v6026 = vadd.f32 %v6024, %v6025
  %v6027 = vsel %vm720, %v5961, 0.0
  %v6028 = vadd.f32 %v6026, %v6027
  %v6029 = vsel %vm720, %v5962, 0.0
  %v6030 = vadd.f32 %v6028, %v6029
  %v6031 = vsel %vm720, %v5963, 0.0
  %v6032 = vadd.f32 %v6030, %v6031
  %v6033 = vsel %vm720, %v5964, 0.0
  %v6034 = vadd.f32 %v6032, %v6033
  %v6035 = vsel %vm720, %v5965, 0.0
  %v6036 = vadd.f32 %v6034, %v6035
  %v6037 = vsel %vm720, %v5966, 0.0
  %v6038 = vadd.f32 %v6036, %v6037
  %v6039 = vsel %vm720, %v5967, 0.0
  %v6040 = vadd.f32 %v6038, %v6039
  %v6041 = vsel %vm720, %v5968, 0.0
  %v6042 = vadd.f32 %v6040, %v6041
  %v6043 = vsel %vm720, %v5969, 0.0
  %v6044 = vadd.f32 %v6042, %v6043
  %v6045 = vsel %vm720, %v5970, 0.0
  %v6046 = vadd.f32 %v6044, %v6045
  %v6047 = vsel %vm720, %v5971, 0.0
  %v6048 = vadd.f32 %v6046, %v6047
  %v6049 = vsel %vm720, %v5972, 0.0
  %v6050 = vadd.f32 %v6048, %v6049
  %v6051 = vsel %vm720, %v5973, 0.0
  %v6052 = vadd.f32 %v6050, %v6051
  %v6053 = vsel %vm720, %v5974, 0.0
  %v6054 = vadd.f32 %v6052, %v6053
  %v6055 = vsel %vm720, %v5975, 0.0
  %v6056 = vadd.f32 %v6054, %v6055
  %v6057 = vsel %vm720, %v5976, 0.0
  %v6058 = vadd.f32 %v6056, %v6057
  %v6059 = vsel %vm720, %v5977, 0.0
  %v6060 = vadd.f32 %v6058, %v6059
  %v6061 = vsel %vm720, %v5978, 0.0
  %v6062 = vadd.f32 %v6060, %v6061
  %v6063 = vsel %vm720, %v5979, 0.0
  %v6064 = vadd.f32 %v6062, %v6063
  %v6065 = vsel %vm720, %v5980, 0.0
  %v6066 = vadd.f32 %v6064, %v6065
  %v6067 = vsel %vm720, %v5981, 0.0
  %v6068 = vadd.f32 %v6066, %v6067
  %v6069 = vsel %vm720, %v5982, 0.0
  %v6070 = vadd.f32 %v6068, %v6069
  %v6071 = vsel %vm720, %v5983, 0.0
  %v6072 = vadd.f32 %v6070, %v6071
  %v6073 = vsel %vm720, %v5984, 0.0
  %v6074 = vadd.f32 %v6072, %v6073
  %v6075 = vsel %vm720, %v5985, 0.0
  %v6076 = vadd.f32 %v6074, %v6075
  %v6077 = vsel %vm720, %v5986, 0.0
  %v6078 = vadd.f32 %v6076, %v6077
  %v6079 = vsel %vm720, %v5987, 0.0
  %v6080 = vadd.f32 %v6078, %v6079
  %v6081 = vsel %vm720, %v5988, 0.0
  %v6082 = vadd.f32 %v6080, %v6081
  %v6083 = vsel %vm720, %v5989, 0.0
  %v6084 = vadd.f32 %v6082, %v6083
  %v6085 = vsel %vm720, %v5990, 0.0
  %v6086 = vadd.f32 %v6084, %v6085
  %v6087 = vsel %vm720, %v5991, 0.0
  %v6088 = vadd.f32 %v6086, %v6087
  %v6089 = vsel %vm720, %v5992, 0.0
  %v6090 = vadd.f32 %v6088, %v6089
  %v6091 = vsel %vm720, %v5993, 0.0
  %v6092 = vadd.f32 %v6090, %v6091
  %v6093 = vsel %vm720, %v5994, 0.0
  %v6094 = vadd.f32 %v6092, %v6093
  %v6095 = vsel %vm720, %v5995, 0.0
  %v6096 = vadd.f32 %v6094, %v6095
  %v6097 = vsel %vm720, %v5996, 0.0
  %v6098 = vadd.f32 %v6096, %v6097
  %v6099 = vsel %vm720, %v5997, 0.0
  %v6100 = vadd.f32 %v6098, %v6099
  %v6101 = vsel %vm720, %v5998, 0.0
  %v6102 = vadd.f32 %v6100, %v6101
  %v6103 = vsel %vm720, %v5999, 0.0
  %v6104 = vadd.f32 %v6102, %v6103
  %v6105 = vsel %vm720, %v6000, 0.0
  %v6106 = vadd.f32 %v6104, %v6105
  %v6107 = vsel %vm720, %v6001, 0.0
  %v6108 = vadd.f32 %v6106, %v6107
  %v6109 = vsel %vm720, %v6002, 0.0
  %v6110 = vadd.f32 %v6108, %v6109
  %v6111 = vsel %vm720, %v6003, 0.0
  %v6112 = vadd.f32 %v6110, %v6111
  %v6113 = vsel %vm720, %v6004, 0.0
  %v6114 = vadd.f32 %v6112, %v6113
  %v6115 = vsel %vm720, %v6005, 0.0
  %v6116 = vadd.f32 %v6114, %v6115
  %v6117 = vsel %vm720, %v6006, 0.0
  %v6118 = vadd.f32 %v6116, %v6117
  %v6119 = vsel %vm720, %v6007, 0.0
  %v6120 = vadd.f32 %v6118, %v6119
  %v6121 = vsel %vm720, %v6008, 0.0
  %v6122 = vadd.f32 %v6120, %v6121
  %v6123 = vsel %vm720, %v6009, 0.0
  %v6124 = vadd.f32 %v6122, %v6123
  %v6125 = vsel %vm720, %v6010, 0.0
  %v6126 = vadd.f32 %v6124, %v6125
  %v6127 = vsel %vm720, %v6011, 0.0
  %v6128 = vadd.f32 %v6126, %v6127
  %v6129 = vsel %vm720, %v6012, 0.0
  %v6130 = vadd.f32 %v6128, %v6129
  %v6131 = vsel %vm720, %v6013, 0.0
  %v6132 = vadd.f32 %v6130, %v6131
  %v6133 = vsel %vm720, %v6014, 0.0
  %v6134 = vadd.f32 %v6132, %v6133
  %v6135 = vsel %vm720, %v6015, 0.0
  %v6136 = vadd.f32 %v6134, %v6135
  %v6137 = vsel %vm720, %v6016, 0.0
  %v6138 = vadd.f32 %v6136, %v6137
  %v6139 = vsel %vm720, %v6017, 0.0
  %v6140 = vadd.f32 %v6138, %v6139
  %v6141 = vsel %vm720, %v6018, 0.0
  %v6142 = vadd.f32 %v6140, %v6141
  %v6143 = vsel %vm720, %v6019, 0.0
  %v6144 = vadd.f32 %v6142, %v6143
  %v6145 = vsel %vm720, %v6020, 0.0
  %v6146 = vadd.f32 %v6144, %v6145
  %v6147 = vsel %vm720, %v6021, 0.0
  %v6148 = vadd.f32 %v6146, %v6147
  %v6149 = vrot.slane %v6148, 4
  %v6150 = vadd.f32 %v6148, %v6149
  %v6151 = vrot.slane %v6150, 2
  %v6152 = vadd.f32 %v6150, %v6151
  %v6153 = vrot.slane %v6152, 1
  %v6154 = vadd.f32 %v6152, %v6153
  %v6155 = vmul.f32 %v6154, %v5892
  %v6156 = vadd.f32 %v6155, 1e-05
  %v6157 = vrsqrt.pop %v6156
  %v6158 = vld [vmem:[%s3] sm:$0x1]
  %v6159 = vmul.f32 %v6157, %v6158
  %v6160 = vlaneseq
  %v6161 = vshrl.u32 %v6160, 7
  %v6162 = vsub.s32 0, %v6161
  %v6163 = vrot.slane %v6159, %v6162
  %v6164 = vmul.f32 %v5894, %v6163
  %v6165 = vmul.f32 %v5895, %v6163
  %v6166 = vmul.f32 %v5896, %v6163
  %v6167 = vmul.f32 %v5897, %v6163
  %v6168 = vmul.f32 %v5898, %v6163
  %v6169 = vmul.f32 %v5899, %v6163
  %v6170 = vmul.f32 %v5900, %v6163
  %v6171 = vmul.f32 %v5901, %v6163
  %v6172 = vmul.f32 %v5902, %v6163
  %v6173 = vmul.f32 %v5903, %v6163
  %v6174 = vmul.f32 %v5904, %v6163
  %v6175 = vmul.f32 %v5905, %v6163
  %v6176 = vmul.f32 %v5906, %v6163
  %v6177 = vmul.f32 %v5907, %v6163
  %v6178 = vmul.f32 %v5908, %v6163
  %v6179 = vmul.f32 %v5909, %v6163
  %v6180 = vmul.f32 %v5910, %v6163
  %v6181 = vmul.f32 %v5911, %v6163
  %v6182 = vmul.f32 %v5912, %v6163
  %v6183 = vmul.f32 %v5913, %v6163
  %v6184 = vmul.f32 %v5914, %v6163
  %v6185 = vmul.f32 %v5915, %v6163
  %v6186 = vmul.f32 %v5916, %v6163
  %v6187 = vmul.f32 %v5917, %v6163
  %v6188 = vmul.f32 %v5918, %v6163
  %v6189 = vmul.f32 %v5919, %v6163
  %v6190 = vmul.f32 %v5920, %v6163
  %v6191 = vmul.f32 %v5921, %v6163
  %v6192 = vmul.f32 %v5922, %v6163
  %v6193 = vmul.f32 %v5923, %v6163
  %v6194 = vmul.f32 %v5924, %v6163
  %v6195 = vmul.f32 %v5925, %v6163
  %v6196 = vmul.f32 %v5926, %v6163
  %v6197 = vmul.f32 %v5927, %v6163
  %v6198 = vmul.f32 %v5928, %v6163
  %v6199 = vmul.f32 %v5929, %v6163
  %v6200 = vmul.f32 %v5930, %v6163
  %v6201 = vmul.f32 %v5931, %v6163
  %v6202 = vmul.f32 %v5932, %v6163
  %v6203 = vmul.f32 %v5933, %v6163
  %v6204 = vmul.f32 %v5934, %v6163
  %v6205 = vmul.f32 %v5935, %v6163
  %v6206 = vmul.f32 %v5936, %v6163
  %v6207 = vmul.f32 %v5937, %v6163
  %v6208 = vmul.f32 %v5938, %v6163
  %v6209 = vmul.f32 %v5939, %v6163
  %v6210 = vmul.f32 %v5940, %v6163
  %v6211 = vmul.f32 %v5941, %v6163
  %v6212 = vmul.f32 %v5942, %v6163
  %v6213 = vmul.f32 %v5943, %v6163
  %v6214 = vmul.f32 %v5944, %v6163
  %v6215 = vmul.f32 %v5945, %v6163
  %v6216 = vmul.f32 %v5946, %v6163
  %v6217 = vmul.f32 %v5947, %v6163
  %v6218 = vmul.f32 %v5948, %v6163
  %v6219 = vmul.f32 %v5949, %v6163
  %v6220 = vmul.f32 %v5950, %v6163
  %v6221 = vmul.f32 %v5951, %v6163
  %v6222 = vmul.f32 %v5952, %v6163
  %v6223 = vmul.f32 %v5953, %v6163
  %v6224 = vmul.f32 %v5954, %v6163
  %v6225 = vmul.f32 %v5955, %v6163
  %v6226 = vmul.f32 %v5956, %v6163
  %v6227 = vmul.f32 %v5957, %v6163
  %v6228 = vld [vmem:[%s4] sm:$0x1]
  %v6230 = vlaneseq
  %v6231 = vshrl.u32 %v6230, 7
  %v6232 = vsub.s32 0, %v6231
  %v6233 = vrot.slane %v6228, %v6232
  %v6235 = vadd.f32 %v6164, %v6233
  %v6236 = vadd.f32 %v6165, %v6233
  %v6237 = vadd.f32 %v6166, %v6233
  %v6238 = vadd.f32 %v6167, %v6233
  %v6239 = vadd.f32 %v6168, %v6233
  %v6240 = vadd.f32 %v6169, %v6233
  %v6241 = vadd.f32 %v6170, %v6233
  %v6242 = vadd.f32 %v6171, %v6233
  %v6243 = vadd.f32 %v6172, %v6233
  %v6244 = vadd.f32 %v6173, %v6233
  %v6245 = vadd.f32 %v6174, %v6233
  %v6246 = vadd.f32 %v6175, %v6233
  %v6247 = vadd.f32 %v6176, %v6233
  %v6248 = vadd.f32 %v6177, %v6233
  %v6249 = vadd.f32 %v6178, %v6233
  %v6250 = vadd.f32 %v6179, %v6233
  %v6251 = vadd.f32 %v6180, %v6233
  %v6252 = vadd.f32 %v6181, %v6233
  %v6253 = vadd.f32 %v6182, %v6233
  %v6254 = vadd.f32 %v6183, %v6233
  %v6255 = vadd.f32 %v6184, %v6233
  %v6256 = vadd.f32 %v6185, %v6233
  %v6257 = vadd.f32 %v6186, %v6233
  %v6258 = vadd.f32 %v6187, %v6233
  %v6259 = vadd.f32 %v6188, %v6233
  %v6260 = vadd.f32 %v6189, %v6233
  %v6261 = vadd.f32 %v6190, %v6233
  %v6262 = vadd.f32 %v6191, %v6233
  %v6263 = vadd.f32 %v6192, %v6233
  %v6264 = vadd.f32 %v6193, %v6233
  %v6265 = vadd.f32 %v6194, %v6233
  %v6266 = vadd.f32 %v6195, %v6233
  %v6267 = vadd.f32 %v6196, %v6233
  %v6268 = vadd.f32 %v6197, %v6233
  %v6269 = vadd.f32 %v6198, %v6233
  %v6270 = vadd.f32 %v6199, %v6233
  %v6271 = vadd.f32 %v6200, %v6233
  %v6272 = vadd.f32 %v6201, %v6233
  %v6273 = vadd.f32 %v6202, %v6233
  %v6274 = vadd.f32 %v6203, %v6233
  %v6275 = vadd.f32 %v6204, %v6233
  %v6276 = vadd.f32 %v6205, %v6233
  %v6277 = vadd.f32 %v6206, %v6233
  %v6278 = vadd.f32 %v6207, %v6233
  %v6279 = vadd.f32 %v6208, %v6233
  %v6280 = vadd.f32 %v6209, %v6233
  %v6281 = vadd.f32 %v6210, %v6233
  %v6282 = vadd.f32 %v6211, %v6233
  %v6283 = vadd.f32 %v6212, %v6233
  %v6284 = vadd.f32 %v6213, %v6233
  %v6285 = vadd.f32 %v6214, %v6233
  %v6286 = vadd.f32 %v6215, %v6233
  %v6287 = vadd.f32 %v6216, %v6233
  %v6288 = vadd.f32 %v6217, %v6233
  %v6289 = vadd.f32 %v6218, %v6233
  %v6290 = vadd.f32 %v6219, %v6233
  %v6291 = vadd.f32 %v6220, %v6233
  %v6292 = vadd.f32 %v6221, %v6233
  %v6293 = vadd.f32 %v6222, %v6233
  %v6294 = vadd.f32 %v6223, %v6233
  %v6295 = vadd.f32 %v6224, %v6233
  %v6296 = vadd.f32 %v6225, %v6233
  %v6297 = vadd.f32 %v6226, %v6233
  %v6298 = vadd.f32 %v6227, %v6233
  %6299 = vst.msk [vmem:[%s5] sm:$0xff] %vm720, %v6235
  %6300 = vst.msk [vmem:[%s5 + $0x8] sm:$0xff] %vm720, %v6236
  %6301 = vst.msk [vmem:[%s5 + $0x10] sm:$0xff] %vm720, %v6237
  %6302 = vst.msk [vmem:[%s5 + $0x18] sm:$0xff] %vm720, %v6238
  %6303 = vst.msk [vmem:[%s5 + $0x20] sm:$0xff] %vm720, %v6239
  %6304 = vst.msk [vmem:[%s5 + $0x28] sm:$0xff] %vm720, %v6240
  %6305 = vst.msk [vmem:[%s5 + $0x30] sm:$0xff] %vm720, %v6241
  %6306 = vst.msk [vmem:[%s5 + $0x38] sm:$0xff] %vm720, %v6242
  %6307 = vst.msk [vmem:[%s5 + $0x40] sm:$0xff] %vm720, %v6243
  %6308 = vst.msk [vmem:[%s5 + $0x48] sm:$0xff] %vm720, %v6244
  %6309 = vst.msk [vmem:[%s5 + $0x50] sm:$0xff] %vm720, %v6245
  %6310 = vst.msk [vmem:[%s5 + $0x58] sm:$0xff] %vm720, %v6246
  %6311 = vst.msk [vmem:[%s5 + $0x60] sm:$0xff] %vm720, %v6247
  %6312 = vst.msk [vmem:[%s5 + $0x68] sm:$0xff] %vm720, %v6248
  %6313 = vst.msk [vmem:[%s5 + $0x70] sm:$0xff] %vm720, %v6249
  %6314 = vst.msk [vmem:[%s5 + $0x78] sm:$0xff] %vm720, %v6250
  %6315 = vst.msk [vmem:[%s5 + $0x80] sm:$0xff] %vm720, %v6251
  %6316 = vst.msk [vmem:[%s5 + $0x88] sm:$0xff] %vm720, %v6252
  %6317 = vst.msk [vmem:[%s5 + $0x90] sm:$0xff] %vm720, %v6253
  %6318 = vst.msk [vmem:[%s5 + $0x98] sm:$0xff] %vm720, %v6254
  %6319 = vst.msk [vmem:[%s5 + $0xa0] sm:$0xff] %vm720, %v6255
  %6320 = vst.msk [vmem:[%s5 + $0xa8] sm:$0xff] %vm720, %v6256
  %6321 = vst.msk [vmem:[%s5 + $0xb0] sm:$0xff] %vm720, %v6257
  %6322 = vst.msk [vmem:[%s5 + $0xb8] sm:$0xff] %vm720, %v6258
  %6323 = vst.msk [vmem:[%s5 + $0xc0] sm:$0xff] %vm720, %v6259
  %6324 = vst.msk [vmem:[%s5 + $0xc8] sm:$0xff] %vm720, %v6260
  %6325 = vst.msk [vmem:[%s5 + $0xd0] sm:$0xff] %vm720, %v6261
  %6326 = vst.msk [vmem:[%s5 + $0xd8] sm:$0xff] %vm720, %v6262
  %6327 = vst.msk [vmem:[%s5 + $0xe0] sm:$0xff] %vm720, %v6263
  %6328 = vst.msk [vmem:[%s5 + $0xe8] sm:$0xff] %vm720, %v6264
  %6329 = vst.msk [vmem:[%s5 + $0xf0] sm:$0xff] %vm720, %v6265
  %6330 = vst.msk [vmem:[%s5 + $0xf8] sm:$0xff] %vm720, %v6266
  %6331 = vst.msk [vmem:[%s5 + $0x100] sm:$0xff] %vm720, %v6267
  %6332 = vst.msk [vmem:[%s5 + $0x108] sm:$0xff] %vm720, %v6268
  %6333 = vst.msk [vmem:[%s5 + $0x110] sm:$0xff] %vm720, %v6269
  %6334 = vst.msk [vmem:[%s5 + $0x118] sm:$0xff] %vm720, %v6270
  %6335 = vst.msk [vmem:[%s5 + $0x120] sm:$0xff] %vm720, %v6271
  %6336 = vst.msk [vmem:[%s5 + $0x128] sm:$0xff] %vm720, %v6272
  %6337 = vst.msk [vmem:[%s5 + $0x130] sm:$0xff] %vm720, %v6273
  %6338 = vst.msk [vmem:[%s5 + $0x138] sm:$0xff] %vm720, %v6274
  %6339 = vst.msk [vmem:[%s5 + $0x140] sm:$0xff] %vm720, %v6275
  %6340 = vst.msk [vmem:[%s5 + $0x148] sm:$0xff] %vm720, %v6276
  %6341 = vst.msk [vmem:[%s5 + $0x150] sm:$0xff] %vm720, %v6277
  %6342 = vst.msk [vmem:[%s5 + $0x158] sm:$0xff] %vm720, %v6278
  %6343 = vst.msk [vmem:[%s5 + $0x160] sm:$0xff] %vm720, %v6279
  %6344 = vst.msk [vmem:[%s5 + $0x168] sm:$0xff] %vm720, %v6280
  %6345 = vst.msk [vmem:[%s5 + $0x170] sm:$0xff] %vm720, %v6281
  %6346 = vst.msk [vmem:[%s5 + $0x178] sm:$0xff] %vm720, %v6282
  %6347 = vst.msk [vmem:[%s5 + $0x180] sm:$0xff] %vm720, %v6283
  %6348 = vst.msk [vmem:[%s5 + $0x188] sm:$0xff] %vm720, %v6284
  %6349 = vst.msk [vmem:[%s5 + $0x190] sm:$0xff] %vm720, %v6285
  %6350 = vst.msk [vmem:[%s5 + $0x198] sm:$0xff] %vm720, %v6286
  %6351 = vst.msk [vmem:[%s5 + $0x1a0] sm:$0xff] %vm720, %v6287
  %6352 = vst.msk [vmem:[%s5 + $0x1a8] sm:$0xff] %vm720, %v6288
  %6353 = vst.msk [vmem:[%s5 + $0x1b0] sm:$0xff] %vm720, %v6289
  %6354 = vst.msk [vmem:[%s5 + $0x1b8] sm:$0xff] %vm720, %v6290
  %6355 = vst.msk [vmem:[%s5 + $0x1c0] sm:$0xff] %vm720, %v6291
  %6356 = vst.msk [vmem:[%s5 + $0x1c8] sm:$0xff] %vm720, %v6292
  %6357 = vst.msk [vmem:[%s5 + $0x1d0] sm:$0xff] %vm720, %v6293
  %6358 = vst.msk [vmem:[%s5 + $0x1d8] sm:$0xff] %vm720, %v6294
  %6359 = vst.msk [vmem:[%s5 + $0x1e0] sm:$0xff] %vm720, %v6295
  %6360 = vst.msk [vmem:[%s5 + $0x1e8] sm:$0xff] %vm720, %v6296
  %6361 = vst.msk [vmem:[%s5 + $0x1f0] sm:$0xff] %vm720, %v6297
  %6362 = vst.msk [vmem:[%s5 + $0x1f8] sm:$0xff] %vm720, %v6298
  // Predicated region
  $region22: #{tpu_custom_call.1} parent=0 // pred_check
    _
  $region23: #{tpu_custom_call.1} parent=0 // pred_check_branch
    %6364 = sbr.rel (0) target = $region25
  $region24: #{tpu_custom_call.1} parent=0 // pred_region
    _
  $region25: #{tpu_custom_call.1} parent=0 // pred_fallthru
    _
  // Predicated region
  $region26: #{tpu_custom_call.1} parent=0 // pred_check
    _
  $region27: #{tpu_custom_call.1} parent=0 // pred_check_branch
    %6366 = sbr.rel (0) target = $region29
  $region28: #{tpu_custom_call.1} parent=0 // pred_region
    _
  $region29: #{tpu_custom_call.1} parent=0 // pred_fallthru
    _

</llo_original>
